<compile_context>
chip_gen: v7x
topology: tpu7x:2x2x1
jax: 0.10.0
libtpu: 0.0.40
codegen_flags: <defaults>
</compile_context>

<pallas_src>
import jax
import jax.numpy as jnp
import numpy as np
from jax.experimental import pallas as pl
from jax.experimental.pallas import tpu as pltpu

_EPS = 1e-5
_LANE = 128


# ---------------------------------------------------------------------------
# Small helpers
# ---------------------------------------------------------------------------
def _ceil_to(x, m):
    return (x + m - 1) // m * m


def _vmem_capacity():
    """Per-core VMEM bytes (v5e/v6e: 128 MiB, v7x: 64 MiB), with a safe
    fallback if the query is unavailable."""
    try:
        info = pltpu.get_tpu_info()
        cap = getattr(info, "vmem_capacity_bytes", None)
        if cap:
            return int(cap)
    except Exception:
        pass
    return 64 << 20


def _block_bytes(rows, cols, itemsize, nbuf=2):
    """Padded byte estimate for one (double-buffered) BlockSpec block."""
    return nbuf * _ceil_to(max(rows, 1), 8) * _ceil_to(max(cols, 1), 128) * itemsize


def _fused_vmem_bytes(n_tiles, rt, bt, C, H, P_pad):
    b = 0
    b += _block_bytes(rt, C, 2)          # x tile (bf16)
    b += _block_bytes(C, H, 2)           # W1a (bf16)
    b += 3 * _block_bytes(1, H, 4)       # b1a, gamma, beta
    b += _block_bytes(bt, H, 4)          # folded query v
    b += _block_bytes(bt, 1, 4)          # folded bias c
    b += _block_bytes(bt, P_pad, 4)      # attention out
    # single-buffered scratch: resident h + stats + folded BN
    b += n_tiles * _ceil_to(rt, 8) * _ceil_to(H, 128) * 2
    b += 3 * 8 * _ceil_to(H, 128) * 4
    return b


def _pass1_vmem_bytes(rt, C, H):
    return (_block_bytes(rt, C, 2) + _block_bytes(C, H, 2)
            + _block_bytes(1, H, 4) + _block_bytes(rt, H, 2)
            + 2 * _block_bytes(1, H, 4))


def _pass2_vmem_bytes(rt, bt, H, P_pad):
    return (_block_bytes(rt, H, 2) + 2 * _block_bytes(1, H, 4)
            + _block_bytes(bt, H, 4) + _block_bytes(bt, 1, 4)
            + _block_bytes(bt, P_pad, 4))


def _vmem_limit(est_bytes, cap):
    hi = int(cap * 0.9)
    return int(min(max(int(est_bytes * 1.25) + (4 << 20), 16 << 20), hi))


def _pick_batch_tile(B, P, target_rows, *, prefer_multi_tile, row_align=8):
    """Batches per tile: must divide B and be a multiple of 8 sublanes (unless
    bt == B); row_align=16 keeps bf16 HBM tiles 16-row aligned.  When
    prefer_multi_tile is set (the 'parallel'-grid two-pass path), keep >= 2
    (ideally an even number of) tiles so v7x megacore has work to shard."""
    multi = [d for d in range(8, B, 8)
             if B % d == 0 and (d * P) % row_align == 0]
    if prefer_multi_tile and multi:
        even = [d for d in multi if (B // d) % 2 == 0]
        pool = even if even else multi
    else:
        pool = multi + [B]
    fits = [d for d in pool if d * P <= target_rows]
    return max(fits) if fits else min(pool)


# ---------------------------------------------------------------------------
# Shared tile body: folded-BN normalize -> ReLU -> per-batch dot with the
# query vector v (second Linear already folded into v / c), chunked over
# 128-lane slices of H to bound vreg pressure.
#   h_tile_ref : (bt*P, H) bf16 ref (VMEM block or scratch view)
#   scale/shift: (1, H) f32 values, v: (bt, H) f32, c: (bt, 1) f32
# ---------------------------------------------------------------------------
def _tile_attention(h_tile_ref, scale, shift, v, c, bt, P, H, P_pad):
    att = jnp.zeros((bt, P), jnp.float32)
    for s in range(0, H, _LANE):
        cs = min(_LANE, H - s)
        hk = h_tile_ref[:, s:s + cs].astype(jnp.float32)
        hnk = jnp.maximum(hk * scale[:, s:s + cs] + shift[:, s:s + cs], 0.0)
        att = att + jnp.sum(hnk.reshape(bt, P, cs) * v[:, None, s:s + cs],
                            axis=-1)
    att = att + c
    if P_pad > P:                                   # lane-dense store
        att = jnp.concatenate(
            [att, jnp.zeros((bt, P_pad - P), att.dtype)], axis=1)
    return att


# ---------------------------------------------------------------------------
# Fused single-call kernel.  grid = (phase, tile); both axes "arbitrary".
#   phase 0: h = x @ W1a + b1a  -> bf16 VMEM-resident scratch + global BN
#            partial sums (f32 scratch accumulators).
#   phase 1: finalize mean/var once (tile 0), fold BN affine, then
#            normalize + ReLU + attention per tile.
# ---------------------------------------------------------------------------
def _make_fused_kernel(rt, bt, P, H, P_pad, m_total, eps):
    inv_m = 1.0 / float(m_total)

    def kernel(x_ref, w_ref, b_ref, g_ref, be_ref, v_ref, c_ref, out_ref,
               h_sc, sum_sc, sq_sc, bn_sc):
        ph = pl.program_id(0)
        i = pl.program_id(1)

        @pl.when(ph == 0)
        def _():
            h = jnp.dot(x_ref[...], w_ref[...],
                        preferred_element_type=jnp.float32) + b_ref[...]

            @pl.when(i == 0)
            def _():
                sum_sc[...] = jnp.zeros_like(sum_sc)
                sq_sc[...] = jnp.zeros_like(sq_sc)

            sum_sc[...] += jnp.sum(h, axis=0, keepdims=True)
            sq_sc[...] += jnp.sum(h * h, axis=0, keepdims=True)
            h_sc[i] = h.astype(h_sc.dtype)          # VMEM-resident bf16 tile

        @pl.when(ph == 1)
        def _():
            @pl.when(i == 0)
            def _():
                # Global training-mode BatchNorm over all M rows, folded into
                # per-column scale/shift.  (E[h^2]-E[h]^2 in f32; matches ref.)
                mean = sum_sc[...] * inv_m
                var = sq_sc[...] * inv_m - mean * mean
                scale = g_ref[...] * jax.lax.rsqrt(var + eps)
                bn_sc[0:1, :] = scale
                bn_sc[1:2, :] = be_ref[...] - mean * scale

            out_ref[...] = _tile_attention(
                h_sc.at[i], bn_sc[0:1, :], bn_sc[1:2, :],
                v_ref[...], c_ref[...], bt, P, H, P_pad)

    return kernel


# ---------------------------------------------------------------------------
# Fallback two-pass kernels (used when the (M, H) intermediate would not fit
# in the VMEM budget).  The intermediate goes through HBM in bf16; BN partial
# statistics are two plain lane-dense (1, H) outputs per tile.
# ---------------------------------------------------------------------------
def _stage1_kernel(x_ref, w_ref, b_ref, h_ref, sum_ref, sq_ref):
    h = jnp.dot(x_ref[...], w_ref[...],
                preferred_element_type=jnp.float32) + b_ref[...]
    h_ref[...] = h.astype(h_ref.dtype)                    # bf16 writeback
    sum_ref[0] = jnp.sum(h, axis=0, keepdims=True)        # (1, H) f32 partials
    sq_ref[0] = jnp.sum(h * h, axis=0, keepdims=True)


def _make_stage2_kernel(bt, P, H, P_pad):
    def kernel(h_ref, scale_ref, shift_ref, v_ref, c_ref, out_ref):
        out_ref[...] = _tile_attention(
            h_ref, scale_ref[...], shift_ref[...],
            v_ref[...], c_ref[...], bt, P, H, P_pad)
    return kernel


# ---------------------------------------------------------------------------
# theta_2 (text / query branch): tiny (B, C) problem — plain XLA (f32).
# ---------------------------------------------------------------------------
def _theta_xla(x, wa, ba, g, be, wb, bb, eps):
    h = x @ wa + ba
    mean = jnp.mean(h, axis=0, keepdims=True)
    var = jnp.mean(h * h, axis=0, keepdims=True) - mean * mean
    hn = jnp.maximum((h - mean) * jax.lax.rsqrt(var + eps) * g + be, 0.0)
    return hn @ wb + bb


# ---------------------------------------------------------------------------
# Forward wrapper
# ---------------------------------------------------------------------------
def cross_modal_attention_forward(image_feats, text_vector, num_props, params,
                                  is_GM=False, *, eps=_EPS, target_rows=2048,
                                  force_two_pass=False):
    del is_GM  # unused by the reference module's forward as well
    f32, bf16 = jnp.float32, jnp.bfloat16
    B = text_vector.shape[0]
    P = int(num_props)
    C = params["w1a"].shape[0]
    H = params["w1a"].shape[1]
    M = B * P
    P_pad = _ceil_to(P, _LANE)

    img2d = image_feats.reshape(M, C).astype(bf16)        # .view(-1, C)
    txt2d = text_vector.reshape(B, C).astype(f32)         # .squeeze(1)

    w1a = params["w1a"].astype(bf16)
    b1a = params["b1a"].astype(f32)
    g1, be1 = params["g1"].astype(f32), params["be1"].astype(f32)
    w1b = params["w1b"].astype(f32)
    b1b = params["b1b"].astype(f32)

    # ---- theta_2 (query branch) in plain XLA, then fold the image branch's
    # second Linear into the query:  att = <hn, W1b @ txt> + <b1b, txt>.
    txt_out = _theta_xla(txt2d, params["w2a"].astype(f32),
                         params["b2a"].astype(f32), params["g2"].astype(f32),
                         params["be2"].astype(f32), params["w2b"].astype(f32),
                         params["b2b"].astype(f32), eps)
    v = txt_out @ w1b.T                                    # (B, H) f32
    c = txt_out @ b1b.T                                    # (B, 1) f32

    cap = _vmem_capacity()

    # ---- fused single-call path: keep the (M, H) intermediate VMEM-resident.
    use_fused = not force_two_pass
    if use_fused:
        chosen = None
        t = max(int(target_rows), P)
        for _ in range(4):
            cand = _pick_batch_tile(B, P, t, prefer_multi_tile=False,
                                    row_align=8)
            nt = B // cand
            est = _fused_vmem_bytes(nt, cand * P, cand, C, H, P_pad)
            if est <= int(cap * 0.65):
                chosen = (cand, nt, est)
                break
            t = max(t // 2, P)
        if chosen is None:
            use_fused = False

    if use_fused:
        bt, n_tiles, est = chosen
        rt = bt * P
        kernel = _make_fused_kernel(rt, bt, P, H, P_pad, M, eps)
        out_padded = pl.pallas_call(
            kernel,
            grid=(2, n_tiles),
            in_specs=[
                pl.BlockSpec((rt, C), lambda ph, i: ((1 - ph) * i, 0)),  # x
                pl.BlockSpec((C, H), lambda ph, i: (0, 0)),              # W1a
                pl.BlockSpec((1, H), lambda ph, i: (0, 0)),              # b1a
                pl.BlockSpec((1, H), lambda ph, i: (0, 0)),              # gamma
                pl.BlockSpec((1, H), lambda ph, i: (0, 0)),              # beta
                pl.BlockSpec((bt, H), lambda ph, i: (ph * i, 0)),        # v
                pl.BlockSpec((bt, 1), lambda ph, i: (ph * i, 0)),        # c
            ],
            out_specs=pl.BlockSpec((bt, P_pad), lambda ph, i: (ph * i, 0)),
            out_shape=jax.ShapeDtypeStruct((B, P_pad), f32),
            scratch_shapes=[
                pltpu.VMEM((n_tiles, rt, H), bf16),   # resident intermediate
                pltpu.VMEM((1, H), f32),              # BN sum
                pltpu.VMEM((1, H), f32),              # BN sum of squares
                pltpu.VMEM((2, H), f32),              # folded BN scale/shift
            ],
            compiler_params=pltpu.CompilerParams(
                dimension_semantics=("arbitrary", "arbitrary"),
                vmem_limit_bytes=_vmem_limit(est, cap)),
        )(img2d, w1a, b1a, g1, be1, v, c)
        return out_padded[:, :P] if P_pad > P else out_padded

    # ---- fallback: two streamed passes, bf16 (M, H) intermediate via HBM ----
    bt = _pick_batch_tile(B, P, max(int(target_rows), P),
                          prefer_multi_tile=True, row_align=16)
    n_tiles = B // bt
    rt = bt * P

    h_bf16, sums, sqs = pl.pallas_call(
        _stage1_kernel,
        grid=(n_tiles,),
        in_specs=[
            pl.BlockSpec((rt, C), lambda i: (i, 0)),
            pl.BlockSpec((C, H), lambda i: (0, 0)),
            pl.BlockSpec((1, H), lambda i: (0, 0)),
        ],
        out_specs=(
            pl.BlockSpec((rt, H), lambda i: (i, 0)),
            pl.BlockSpec((1, 1, H), lambda i: (i, 0, 0)),
            pl.BlockSpec((1, 1, H), lambda i: (i, 0, 0)),
        ),
        out_shape=(
            jax.ShapeDtypeStruct((M, H), bf16),
            jax.ShapeDtypeStruct((n_tiles, 1, H), f32),
            jax.ShapeDtypeStruct((n_tiles, 1, H), f32),
        ),
        compiler_params=pltpu.CompilerParams(
            dimension_semantics=("parallel",),
            vmem_limit_bytes=_vmem_limit(_pass1_vmem_bytes(rt, C, H), cap)),
    )(img2d, w1a, b1a)

    # Finalize global training-mode BatchNorm and fold the affine (tiny XLA).
    mean = jnp.sum(sums[:, 0, :], axis=0) * (1.0 / M)          # (H,)
    var = jnp.sum(sqs[:, 0, :], axis=0) * (1.0 / M) - mean * mean
    scale = g1 * jax.lax.rsqrt(var + eps)                      # (1, H)
    shift = be1 - mean * scale                                 # (1, H)

    out_padded = pl.pallas_call(
        _make_stage2_kernel(bt, P, H, P_pad),
        grid=(n_tiles,),
        in_specs=[
            pl.BlockSpec((rt, H), lambda i: (i, 0)),
            pl.BlockSpec((1, H), lambda i: (0, 0)),
            pl.BlockSpec((1, H), lambda i: (0, 0)),
            pl.BlockSpec((bt, H), lambda i: (i, 0)),
            pl.BlockSpec((bt, 1), lambda i: (i, 0)),
        ],
        out_specs=pl.BlockSpec((bt, P_pad), lambda i: (i, 0)),
        out_shape=jax.ShapeDtypeStruct((B, P_pad), f32),
        compiler_params=pltpu.CompilerParams(
            dimension_semantics=("parallel",),
            vmem_limit_bytes=_vmem_limit(
                _pass2_vmem_bytes(rt, bt, H, P_pad), cap)),
    )(h_bf16, scale, shift, v, c)
    return out_padded[:, :P] if P_pad > P else out_padded


# ---------------------------------------------------------------------------
# Parameter init matching the module's __init__ (weights stored (in, out)).
# ---------------------------------------------------------------------------
def init_params(key, inplanes):
    C = inplanes
    H = C // 2
    ks = jax.random.split(key, 8)

    def xavier(k, fan_in, fan_out):
        bound = float(np.sqrt(6.0 / (fan_in + fan_out)))
        return jax.random.uniform(k, (fan_in, fan_out), jnp.float32, -bound, bound)

    def lin_bias(k, fan_in, fan_out):
        bound = float(1.0 / np.sqrt(fan_in))
        return jax.random.uniform(k, (1, fan_out), jnp.float32, -bound, bound)

    def default_linear(kw, kb, fan_in, fan_out):
        bound = float(1.0 / np.sqrt(fan_in))
        w = jax.random.uniform(kw, (fan_in, fan_out), jnp.float32, -bound, bound)
        b = jax.random.uniform(kb, (1, fan_out), jnp.float32, -bound, bound)
        return w, b

    params = {}
    params["w1a"] = xavier(ks[0], C, H)
    params["b1a"] = lin_bias(ks[1], C, H)
    params["g1"] = jnp.ones((1, H), jnp.float32)
    params["be1"] = jnp.zeros((1, H), jnp.float32)
    params["w1b"], params["b1b"] = default_linear(ks[2], ks[3], H, H)
    params["w2a"] = xavier(ks[4], C, H)
    params["b2a"] = lin_bias(ks[5], C, H)
    params["g2"] = jnp.ones((1, H), jnp.float32)
    params["be2"] = jnp.zeros((1, H), jnp.float32)
    params["w2b"], params["b2b"] = default_linear(ks[6], ks[7], H, H)
    return params


# ---------------------------------------------------------------------------
# Plain-JAX reference of the same math (bf16 first-matmul operands with f32
# accumulation, f32 BN statistics computed before the bf16 storage of the
# intermediate, f32 everywhere else) for the correctness check.
# ---------------------------------------------------------------------------
def reference_forward(image_feats, text_vector, num_props, params, eps=_EPS):
    f32, bf16 = jnp.float32, jnp.bfloat16
    B = text_vector.shape[0]
    P = int(num_props)
    C = params["w1a"].shape[0]

    x = image_feats.reshape(-1, C)
    h = jnp.dot(x.astype(bf16), params["w1a"].astype(bf16),
                preferred_element_type=f32) + params["b1a"]
    mean = jnp.mean(h, axis=0, keepdims=True)
    var = jnp.mean(h * h, axis=0, keepdims=True) - mean * mean
    h_q = h.astype(bf16).astype(f32)            # kernel stores h as bf16
    hn = jnp.maximum((h_q - mean) * jax.lax.rsqrt(var + eps)
                     * params["g1"] + params["be1"], 0.0)
    img = hn @ params["w1b"] + params["b1b"]    # f32 second Linear

    txt = _theta_xla(text_vector.reshape(B, C).astype(f32),
                     params["w2a"], params["b2a"], params["g2"],
                     params["be2"], params["w2b"], params["b2b"], eps)
    img = img.reshape(B, P, -1)
    return jnp.einsum("bk,bpk->bp", txt, img)


if __name__ == "__main__":
    # Small but TPU-shaped: inplanes=C=256 (H=128), batch=16, num_props=64
    # -> M = 1024 image rows.
    B, P, C = 16, 64, 256
    key = jax.random.PRNGKey(0)
    k_img, k_txt, k_par = jax.random.split(key, 3)

    image_feats = jax.random.normal(k_img, (B, P, C), jnp.float32)
    text_vector = jax.random.normal(k_txt, (B, 1, C), jnp.float32)
    params = init_params(k_par, C)

    ref = reference_forward(image_feats, text_vector, P, params)

    # 1) fused single-call path (largest tile that fits the VMEM budget).
    out = cross_modal_attention_forward(image_feats, text_vector, P, params)
    out = jax.block_until_ready(out)
    assert out.shape == (B, P), out.shape
    np.testing.assert_allclose(np.asarray(out), np.asarray(ref),
                               rtol=1e-3, atol=1e-3)

    # 2) fused path with multiple row tiles (exercises cross-tile BN stats
    #    accumulation and the two-phase grid logic).
    out2 = jax.block_until_ready(
        cross_modal_attention_forward(image_feats, text_vector, P, params,
                                      target_rows=512))
    np.testing.assert_allclose(np.asarray(out2), np.asarray(ref),
                               rtol=1e-3, atol=1e-3)

    # 3) streamed two-pass fallback (bf16 intermediate through HBM).
    out3 = jax.block_until_ready(
        cross_modal_attention_forward(image_feats, text_vector, P, params,
                                      target_rows=512, force_two_pass=True))
    np.testing.assert_allclose(np.asarray(out3), np.asarray(ref),
                               rtol=1e-3, atol=1e-3)

    print("KERNEL_OK")
</pallas_src>

<mosaic_0001>
module attributes {stable_mosaic.version = 11 : i64} {
  func.func @kernel(%arg0: i32, %arg1: i32, %arg2: memref<1024x256xbf16, #tpu.memory_space<vmem>>, %arg3: memref<256x128xbf16, #tpu.memory_space<vmem>>, %arg4: memref<1x128xf32, #tpu.memory_space<vmem>>, %arg5: memref<1x128xf32, #tpu.memory_space<vmem>>, %arg6: memref<1x128xf32, #tpu.memory_space<vmem>>, %arg7: memref<16x128xf32, #tpu.memory_space<vmem>>, %arg8: memref<16x1xf32, #tpu.memory_space<vmem>>, %arg9: memref<16x128xf32, #tpu.memory_space<vmem>>, %arg10: memref<1x1024x128xbf16, #tpu.memory_space<vmem>>, %arg11: memref<1x128xf32, #tpu.memory_space<vmem>>, %arg12: memref<1x128xf32, #tpu.memory_space<vmem>>, %arg13: memref<2x128xf32, #tpu.memory_space<vmem>>) attributes {dimension_semantics = [#tpu.dimension_semantics<arbitrary>, #tpu.dimension_semantics<arbitrary>], iteration_bounds = array<i64: 2, 1>, scalar_prefetch = 0 : i64, scratch_operands = 4 : i64, tpu.core_type = #tpu.core_type<tc>, window_params = [{transform_indices = @transform_0, window_bounds = array<i64: 1024, 256>}, {pipeline_mode = #tpu.pipeline_mode<synchronous>, transform_indices = @transform_1, window_bounds = array<i64: 256, 128>}, {pipeline_mode = #tpu.pipeline_mode<synchronous>, transform_indices = @transform_2, window_bounds = array<i64: 1, 128>}, {pipeline_mode = #tpu.pipeline_mode<synchronous>, transform_indices = @transform_3, window_bounds = array<i64: 1, 128>}, {pipeline_mode = #tpu.pipeline_mode<synchronous>, transform_indices = @transform_4, window_bounds = array<i64: 1, 128>}, {transform_indices = @transform_5, window_bounds = array<i64: 16, 128>}, {transform_indices = @transform_6, window_bounds = array<i64: 16, 1>}, {transform_indices = @transform_7, window_bounds = array<i64: 16, 128>}]} {
    %c0_i32 = arith.constant 0 : i32
    %0 = arith.cmpi eq, %arg0, %c0_i32 : i32
    %1 = arith.extui %0 : i1 to i32
    %c0_i32_0 = arith.constant 0 : i32
    %2 = arith.cmpi ne, %1, %c0_i32_0 : i32
    scf.if %2 {
      %c0 = arith.constant 0 : index
      %c0_2 = arith.constant 0 : index
      %6 = vector.load %arg2[%c0, %c0_2] : memref<1024x256xbf16, #tpu.memory_space<vmem>>, vector<1024x256xbf16>
      %c0_3 = arith.constant 0 : index
      %c0_4 = arith.constant 0 : index
      %7 = vector.load %arg3[%c0_3, %c0_4] : memref<256x128xbf16, #tpu.memory_space<vmem>>, vector<256x128xbf16>
      %cst = arith.constant dense<0.000000e+00> : vector<1024x128xf32>
      %8 = tpu.matmul %6, %7, %cst {dimension_numbers = #tpu.dot_dimension_numbers<[1], [0], [0], [1], [0, 0, 1, 1], [], []>} : vector<1024x256xbf16>, vector<256x128xbf16>, vector<1024x128xf32> -> vector<1024x128xf32>
      %c0_5 = arith.constant 0 : index
      %c0_6 = arith.constant 0 : index
      %9 = vector.load %arg4[%c0_5, %c0_6] : memref<1x128xf32, #tpu.memory_space<vmem>>, vector<1x128xf32>
      %10 = vector.broadcast %9 : vector<1x128xf32> to vector<1024x128xf32>
      %11 = arith.addf %8, %10 : vector<1024x128xf32>
      %c0_i32_7 = arith.constant 0 : i32
      %12 = arith.cmpi eq, %arg1, %c0_i32_7 : i32
      %13 = arith.extui %12 : i1 to i32
      %c0_i32_8 = arith.constant 0 : i32
      %14 = arith.cmpi ne, %13, %c0_i32_8 : i32
      scf.if %14 {
        %cst_21 = arith.constant 0.000000e+00 : f32
        %31 = vector.broadcast %cst_21 : f32 to vector<1x128xf32>
        %c0_22 = arith.constant 0 : index
        %c0_23 = arith.constant 0 : index
        %32 = vector.load %arg11[%c0_22, %c0_23] : memref<1x128xf32, #tpu.memory_space<vmem>>, vector<1x128xf32>
        tpu.vector_store %arg11[%c0_22, %c0_23], %31 {strides = array<i32>} : memref<1x128xf32, #tpu.memory_space<vmem>>, vector<1x128xf32>,
        %cst_24 = arith.constant 0.000000e+00 : f32
        %33 = vector.broadcast %cst_24 : f32 to vector<1x128xf32>
        %c0_25 = arith.constant 0 : index
        %c0_26 = arith.constant 0 : index
        %34 = vector.load %arg12[%c0_25, %c0_26] : memref<1x128xf32, #tpu.memory_space<vmem>>, vector<1x128xf32>
        tpu.vector_store %arg12[%c0_25, %c0_26], %33 {strides = array<i32>} : memref<1x128xf32, #tpu.memory_space<vmem>>, vector<1x128xf32>,
      } else {
      }
      %c0_9 = arith.constant 0 : index
      %c0_10 = arith.constant 0 : index
      %15 = vector.load %arg11[%c0_9, %c0_10] : memref<1x128xf32, #tpu.memory_space<vmem>>, vector<1x128xf32>
      %cst_11 = arith.constant dense<0.000000e+00> : vector<128xf32>
      %16 = vector.multi_reduction <add>, %11, %cst_11 [0] : vector<1024x128xf32> to vector<128xf32>
      %17 = vector.shape_cast %16 : vector<128xf32> to vector<1x128xf32>
      %18 = arith.addf %15, %17 : vector<1x128xf32>
      %c0_12 = arith.constant 0 : index
      %c0_13 = arith.constant 0 : index
      %19 = vector.load %arg11[%c0_12, %c0_13] : memref<1x128xf32, #tpu.memory_space<vmem>>, vector<1x128xf32>
      tpu.vector_store %arg11[%c0_12, %c0_13], %18 {strides = array<i32>} : memref<1x128xf32, #tpu.memory_space<vmem>>, vector<1x128xf32>,
      %c0_14 = arith.constant 0 : index
      %c0_15 = arith.constant 0 : index
      %20 = vector.load %arg12[%c0_14, %c0_15] : memref<1x128xf32, #tpu.memory_space<vmem>>, vector<1x128xf32>
      %21 = arith.mulf %11, %11 : vector<1024x128xf32>
      %cst_16 = arith.constant dense<0.000000e+00> : vector<128xf32>
      %22 = vector.multi_reduction <add>, %21, %cst_16 [0] : vector<1024x128xf32> to vector<128xf32>
      %23 = vector.shape_cast %22 : vector<128xf32> to vector<1x128xf32>
      %24 = arith.addf %20, %23 : vector<1x128xf32>
      %c0_17 = arith.constant 0 : index
      %c0_18 = arith.constant 0 : index
      %25 = vector.load %arg12[%c0_17, %c0_18] : memref<1x128xf32, #tpu.memory_space<vmem>>, vector<1x128xf32>
      tpu.vector_store %arg12[%c0_17, %c0_18], %24 {strides = array<i32>} : memref<1x128xf32, #tpu.memory_space<vmem>>, vector<1x128xf32>,
      %26 = arith.truncf %11 : vector<1024x128xf32> to vector<1024x128xbf16>
      %27 = arith.index_cast %arg1 : i32 to index
      %c0_19 = arith.constant 0 : index
      %c0_20 = arith.constant 0 : index
      %28 = vector.load %arg10[%27, %c0_19, %c0_20] : memref<1x1024x128xbf16, #tpu.memory_space<vmem>>, vector<1x1024x128xbf16>
      %29 = vector.shape_cast %28 : vector<1x1024x128xbf16> to vector<1024x128xbf16>
      %30 = vector.shape_cast %26 : vector<1024x128xbf16> to vector<1x1024x128xbf16>
      tpu.vector_store %arg10[%27, %c0_19, %c0_20], %30 {strides = array<i32>} : memref<1x1024x128xbf16, #tpu.memory_space<vmem>>, vector<1x1024x128xbf16>,
    } else {
    }
    %c1_i32 = arith.constant 1 : i32
    %3 = arith.cmpi eq, %arg0, %c1_i32 : i32
    %4 = arith.extui %3 : i1 to i32
    %c0_i32_1 = arith.constant 0 : i32
    %5 = arith.cmpi ne, %4, %c0_i32_1 : i32
    scf.if %5 {
      %c0_i32_2 = arith.constant 0 : i32
      %6 = arith.cmpi eq, %arg1, %c0_i32_2 : i32
      %7 = arith.extui %6 : i1 to i32
      %c0_i32_3 = arith.constant 0 : i32
      %8 = arith.cmpi ne, %7, %c0_i32_3 : i32
      scf.if %8 {
        %c0_19 = arith.constant 0 : index
        %c0_20 = arith.constant 0 : index
        %35 = vector.load %arg11[%c0_19, %c0_20] : memref<1x128xf32, #tpu.memory_space<vmem>>, vector<1x128xf32>
        %cst_21 = arith.constant 9.765625E-4 : f32
        %36 = vector.broadcast %cst_21 : f32 to vector<1x128xf32>
        %37 = arith.mulf %35, %36 : vector<1x128xf32>
        %c0_22 = arith.constant 0 : index
        %c0_23 = arith.constant 0 : index
        %38 = vector.load %arg12[%c0_22, %c0_23] : memref<1x128xf32, #tpu.memory_space<vmem>>, vector<1x128xf32>
        %cst_24 = arith.constant 9.765625E-4 : f32
        %39 = vector.broadcast %cst_24 : f32 to vector<1x128xf32>
        %40 = arith.mulf %38, %39 : vector<1x128xf32>
        %41 = arith.mulf %37, %37 : vector<1x128xf32>
        %42 = arith.subf %40, %41 : vector<1x128xf32>
        %c0_25 = arith.constant 0 : index
        %c0_26 = arith.constant 0 : index
        %43 = vector.load %arg5[%c0_25, %c0_26] : memref<1x128xf32, #tpu.memory_space<vmem>>, vector<1x128xf32>
        %cst_27 = arith.constant 9.99999974E-6 : f32
        %44 = vector.broadcast %cst_27 : f32 to vector<1x128xf32>
        %45 = arith.addf %42, %44 : vector<1x128xf32>
        %46 = math.rsqrt %45 : vector<1x128xf32>
        %47 = arith.mulf %43, %46 : vector<1x128xf32>
        %c0_28 = arith.constant 0 : index
        %c0_29 = arith.constant 0 : index
        %48 = vector.load %arg13[%c0_28, %c0_29] : memref<2x128xf32, #tpu.memory_space<vmem>>, vector<1x128xf32>
        tpu.vector_store %arg13[%c0_28, %c0_29], %47 {strides = array<i32>} : memref<2x128xf32, #tpu.memory_space<vmem>>, vector<1x128xf32>,
        %c0_30 = arith.constant 0 : index
        %c0_31 = arith.constant 0 : index
        %49 = vector.load %arg6[%c0_30, %c0_31] : memref<1x128xf32, #tpu.memory_space<vmem>>, vector<1x128xf32>
        %50 = arith.mulf %37, %47 : vector<1x128xf32>
        %51 = arith.subf %49, %50 : vector<1x128xf32>
        %c1_32 = arith.constant 1 : index
        %c0_33 = arith.constant 0 : index
        %52 = vector.load %arg13[%c1_32, %c0_33] : memref<2x128xf32, #tpu.memory_space<vmem>>, vector<1x128xf32>
        tpu.vector_store %arg13[%c1_32, %c0_33], %51 {strides = array<i32>} : memref<2x128xf32, #tpu.memory_space<vmem>>, vector<1x128xf32>,
      } else {
      }
      %c0 = arith.constant 0 : index
      %c0_4 = arith.constant 0 : index
      %9 = vector.load %arg13[%c0, %c0_4] : memref<2x128xf32, #tpu.memory_space<vmem>>, vector<1x128xf32>
      %c1 = arith.constant 1 : index
      %c0_5 = arith.constant 0 : index
      %10 = vector.load %arg13[%c1, %c0_5] : memref<2x128xf32, #tpu.memory_space<vmem>>, vector<1x128xf32>
      %c0_6 = arith.constant 0 : index
      %c0_7 = arith.constant 0 : index
      %11 = vector.load %arg7[%c0_6, %c0_7] : memref<16x128xf32, #tpu.memory_space<vmem>>, vector<16x128xf32>
      %c0_8 = arith.constant 0 : index
      %c0_9 = arith.constant 0 : index
      %12 = vector.load %arg8[%c0_8, %c0_9] : memref<16x1xf32, #tpu.memory_space<vmem>>, vector<16x1xf32>
      %cst = arith.constant 0.000000e+00 : f32
      %13 = vector.broadcast %cst : f32 to vector<16x64xf32>
      %c0_i32_10 = arith.constant 0 : i32
      %c0_i32_11 = arith.constant 0 : i32
      %14 = tpu.memref_slice %arg10[%arg1, %c0_i32_10, %c0_i32_11] : memref<1x1024x128xbf16, #tpu.memory_space<vmem>> -> memref<1x1024x128xbf16, #tpu.memory_space<vmem>>
      %15 = tpu.memref_squeeze %14 : memref<1x1024x128xbf16, #tpu.memory_space<vmem>> -> memref<1024x128xbf16, #tpu.memory_space<vmem>>
      %c0_12 = arith.constant 0 : index
      %c0_13 = arith.constant 0 : index
      %16 = vector.load %15[%c0_12, %c0_13] : memref<1024x128xbf16, #tpu.memory_space<vmem>>, vector<1024x128xbf16>
      %17 = arith.extf %16 : vector<1024x128xbf16> to vector<1024x128xf32>
      %18 = vector.broadcast %9 : vector<1x128xf32> to vector<1024x128xf32>
      %19 = arith.mulf %17, %18 : vector<1024x128xf32>
      %20 = vector.broadcast %10 : vector<1x128xf32> to vector<1024x128xf32>
      %21 = arith.addf %19, %20 : vector<1024x128xf32>
      %cst_14 = arith.constant 0.000000e+00 : f32
      %22 = vector.broadcast %cst_14 : f32 to vector<1024x128xf32>
      %23 = arith.maximumf %21, %22 : vector<1024x128xf32>
      %24 = vector.shape_cast %23 : vector<1024x128xf32> to vector<16x64x128xf32>
      %25 = vector.shape_cast %11 : vector<16x128xf32> to vector<16x1x128xf32>
      %26 = vector.broadcast %25 : vector<16x1x128xf32> to vector<16x64x128xf32>
      %27 = arith.mulf %24, %26 : vector<16x64x128xf32>
      %cst_15 = arith.constant dense<0.000000e+00> : vector<16x64xf32>
      %28 = vector.multi_reduction <add>, %27, %cst_15 [2] : vector<16x64x128xf32> to vector<16x64xf32>
      %29 = arith.addf %13, %28 : vector<16x64xf32>
      %30 = vector.broadcast %12 : vector<16x1xf32> to vector<16x64xf32>
      %31 = arith.addf %29, %30 : vector<16x64xf32>
      %cst_16 = arith.constant 0.000000e+00 : f32
      %32 = vector.broadcast %cst_16 : f32 to vector<16x64xf32>
      %33 = tpu.concatenate %31, %32 in 1 : vector<16x64xf32>, vector<16x64xf32> -> vector<16x128xf32>
      %c0_17 = arith.constant 0 : index
      %c0_18 = arith.constant 0 : index
      %34 = vector.load %arg9[%c0_17, %c0_18] : memref<16x128xf32, #tpu.memory_space<vmem>>, vector<16x128xf32>
      tpu.vector_store %arg9[%c0_17, %c0_18], %33 {strides = array<i32>} : memref<16x128xf32, #tpu.memory_space<vmem>>, vector<16x128xf32>,
    } else {
    }
    return
  }
  func.func @transform_0(%arg0: i32, %arg1: i32) -> (i32, i32) {
    %c1_i32 = arith.constant 1 : i32
    %0 = arith.subi %c1_i32, %arg0 : i32
    %1 = arith.muli %0, %arg1 : i32
    %c0_i32 = arith.constant 0 : i32
    %c0_i32_0 = arith.constant 0 : i32
    return %1, %c0_i32 : i32, i32
  }
  func.func @transform_1(%arg0: i32, %arg1: i32) -> (i32, i32) {
    %c0_i32 = arith.constant 0 : i32
    %c0_i32_0 = arith.constant 0 : i32
    %c0_i32_1 = arith.constant 0 : i32
    return %c0_i32, %c0_i32_0 : i32, i32
  }
  func.func @transform_2(%arg0: i32, %arg1: i32) -> (i32, i32) {
    %c0_i32 = arith.constant 0 : i32
    %c0_i32_0 = arith.constant 0 : i32
    %c0_i32_1 = arith.constant 0 : i32
    return %c0_i32, %c0_i32_0 : i32, i32
  }
  func.func @transform_3(%arg0: i32, %arg1: i32) -> (i32, i32) {
    %c0_i32 = arith.constant 0 : i32
    %c0_i32_0 = arith.constant 0 : i32
    %c0_i32_1 = arith.constant 0 : i32
    return %c0_i32, %c0_i32_0 : i32, i32
  }
  func.func @transform_4(%arg0: i32, %arg1: i32) -> (i32, i32) {
    %c0_i32 = arith.constant 0 : i32
    %c0_i32_0 = arith.constant 0 : i32
    %c0_i32_1 = arith.constant 0 : i32
    return %c0_i32, %c0_i32_0 : i32, i32
  }
  func.func @transform_5(%arg0: i32, %arg1: i32) -> (i32, i32) {
    %0 = arith.muli %arg0, %arg1 : i32
    %c0_i32 = arith.constant 0 : i32
    %c0_i32_0 = arith.constant 0 : i32
    return %0, %c0_i32 : i32, i32
  }
  func.func @transform_6(%arg0: i32, %arg1: i32) -> (i32, i32) {
    %0 = arith.muli %arg0, %arg1 : i32
    %c0_i32 = arith.constant 0 : i32
    %c0_i32_0 = arith.constant 0 : i32
    return %0, %c0_i32 : i32, i32
  }
  func.func @transform_7(%arg0: i32, %arg1: i32) -> (i32, i32) {
    %0 = arith.muli %arg0, %arg1 : i32
    %c0_i32 = arith.constant 0 : i32
    %c0_i32_0 = arith.constant 0 : i32
    return %0, %c0_i32 : i32, i32
  }
}

</mosaic_0001>

<llo_original>
// kernel: tpu_custom_call.1
$region0: #{tpu_custom_call.1}
  #allocation0 [shape = 'u32[]', space=smem, size = 0x4, offset = 0x4, fixed_abs, tag = 'smem constant byte address 0x4 - core index']
  #allocation1 [shape = 'u32[144,128]{1,0:T(1,128)}', space=vmem, size = 0x12000, scoped, tag = 'internal scratch']
  #allocation2 [shape = 'bf16[1,1024,128]{2,1,0:T(16,128)(2,1)}', space=vmem, size = 0x40000, scoped, tag = 'scratch operand']
  #allocation3 [shape = 'f32[1,128]{1,0:T(1,128)}', space=vmem, size = 0x200, scoped, tag = 'scratch operand']
  #allocation4 [shape = 'f32[1,128]{1,0:T(1,128)}', space=vmem, size = 0x200, scoped, tag = 'scratch operand']
  #allocation5 [shape = 'f32[2,128]{1,0:T(2,128)}', space=vmem, size = 0x400, scoped, tag = 'scratch operand']
  %s0 = inlined_call_operand.hbm [shape: bf16[1024,256], index: 0, kind: input, shape index: {}]
  %s1 = inlined_call_operand.hbm [shape: bf16[256,128], index: 1, kind: input, shape index: {}]
  %s2 = inlined_call_operand.vmem [shape: f32[1,128], index: 2, kind: input, shape index: {}]
  %s3 = inlined_call_operand.vmem [shape: f32[1,128], index: 3, kind: input, shape index: {}]
  %s4 = inlined_call_operand.vmem [shape: f32[1,128], index: 4, kind: input, shape index: {}]
  %s5 = inlined_call_operand.vmem [shape: f32[16,128], index: 5, kind: input, shape index: {}]
  %s6 = inlined_call_operand.vmem [shape: f32[16,1], index: 6, kind: input, shape index: {}]
  %s7 = inlined_call_operand.hbm [shape: f32[16,128], index: 7, kind: output, shape index: {}]
  %s8 = sld [smem:[#allocation0]]
  $region85: #{tpu_custom_call.1} parent=0
    _
  %s10 = ssub.s32 1, %s8
  %s11 = scalar_select 0, %s10, %s8
  $region1: #{tpu_custom_call.1} parent=0
    #allocation6 [shape = 'u8[1048576]{0}', space=vmem, size = 0x100000, scoped, tag = 'input window, operand 0']
    #allocation7 [shape = 's32[2]{0}', space=sflag, size = 0x8, scoped, tag = 'scoped memory for tpu_custom_call.1']
    #allocation8 [shape = 's32[2]{0}', space=sflag, size = 0x8, scoped, tag = 'scoped memory for tpu_custom_call.1']
    #allocation9 [shape = 'u8[65536]{0}', space=vmem, size = 0x10000, scoped, tag = 'input window, operand 1, single buffered']
    #allocation10 [shape = 's32[1]{0}', space=sflag, size = 0x4, scoped, tag = 'scoped memory for tpu_custom_call.1']
    #allocation11 [shape = 'u8[16384]{0}', space=vmem, size = 0x4000, scoped, tag = 'output window, operand 0']
    %12 = vsyncpa [#allocation7], 0
    %s13 = scalar_lea.sflag [#allocation7], 1
    %14 = vsyncpa %s13, 0
    %15 = vsyncpa [#allocation10], 0
    %16 = vsyncpa [#allocation8], 0
    %s17 = scalar_lea.sflag [#allocation8], 1
    %18 = vsyncpa %s17, 0
    loop: start=0, step=1, limit=4
    $region2: #{tpu_custom_call.1} parent=1 // loop_pre_header
      _
    $region3: #{tpu_custom_call.1} parent=1 // loop_header
      %s20 = sphi 0, %s24
      %p21 = scmp.ge.s32.totalorder %s20, 4
      %s27 = sphi 0, %s39
      %s28 = sphi 0, %s35
      %s29 = sphi 0, %s27
      %s30 = sphi 0, %s28
      %s31 = sphi 0, %s29
      %s32 = sphi 0, %s30
      %s46 = sphi 0, %s48
      %s49 = sphi 0, %s46
      %s50 = sphi 0, %s49
      %s66 = sphi 0, %s50
      %s70 = sphi 0, %s70
      %s72 = sphi 0, %s70
      %s73 = sphi 0, %s72
      %s87 = sphi 0, %s73
      %s91 = sphi 0, %s91
      %s93 = sphi 0, %s91
      %s94 = sphi 0, %s93
      %s108 = sphi 0, %s94
      %s112 = sphi 0, %s112
      %s114 = sphi 0, %s112
      %s115 = sphi 0, %s114
      %s129 = sphi 0, %s115
      %s133 = sphi 0, %s133
      %s135 = sphi 0, %s133
      %s136 = sphi 0, %s135
      %s150 = sphi 0, %s136
      %s158 = sphi 0, %s160
      %s161 = sphi 0, %s158
      %s162 = sphi 0, %s161
      %s178 = sphi 0, %s162
      %s186 = sphi 0, %s188
      %s189 = sphi 0, %s186
      %s190 = sphi 0, %s189
      %s206 = sphi 0, %s190
      %s214 = sphi 0, %s216
      %s217 = sphi 0, %s214
      %s218 = sphi 0, %s217
      %s234 = sphi 0, %s218
    $region4: #{tpu_custom_call.1} parent=1 // loop_header_branch
      %23 = sbr.rel (%p21) target = $region8
    $region5: #{tpu_custom_call.1} parent=1 // loop_body
      %s25 = ssub.s32 %s20, 1
      %s26 = ssub.s32 %s20, 2
      %s33 = sadd.s32 1, %s28
      %p34 = scmp.ge.s32.totalorder %s33, 1
      %s35 = scalar_select %p34, 0, %s33
      %s36 = sadd.s32 1, %s27
      %s37 = scalar_select %p34, %s36, %s27
      %p38 = scmp.ge.s32.totalorder %s37, 2
      %s39 = scalar_select %p38, 0, %s37
      %s40 = ssub.s32 1, %s27
      %s41 = smul.u32 %s40, %s28
      %s42 = ssub.s32 1, %s39
      %s43 = smul.u32 %s42, %s35
      %s44 = ssub.s32 %s41, %s43
      %p45 = scmp.eq.s32.totalorder %s44, 0
      %s47 = sadd.s32 %s46, 1
      %s48 = scalar_select %p45, %s46, %s47
      %p51 = pneg %p45
      %p52 = scmp.eq.s32.totalorder %s20, 1
      %p53 = por %p51, %p52
      %p54 = scmp.ne.s32.totalorder %s46, %s49
      %p55 = scmp.eq.s32.totalorder %s20, 0
      %p56 = por %p54, %p55
      %p57 = scmp.ne.s32.totalorder %s46, %s49
      %p58 = scmp.eq.s32.totalorder %s25, 1
      %p59 = por %p57, %p58
      %p60 = scmp.ne.s32.totalorder %s49, %s50
      %p61 = scmp.eq.s32.totalorder %s25, 0
      %p62 = por %p60, %p61
      %p63 = scmp.ne.s32.totalorder %s49, %s50
      %p64 = scmp.eq.s32.totalorder %s26, 1
      %p65 = por %p63, %p64
      %p67 = scmp.ne.s32.totalorder %s50, %s66
      %p68 = scmp.eq.s32.totalorder %s26, 0
      %p69 = por %p67, %p68
      %s71 = sadd.s32 %s70, 1
      %p74 = scmp.eq.s32.totalorder %s20, 1
      %p75 = scmp.ne.s32.totalorder %s70, %s72
      %p76 = scmp.eq.s32.totalorder %s20, 0
      %p77 = por %p75, %p76
      %p78 = scmp.ne.s32.totalorder %s70, %s72
      %p79 = scmp.eq.s32.totalorder %s25, 1
      %p80 = por %p78, %p79
      %p81 = scmp.ne.s32.totalorder %s72, %s73
      %p82 = scmp.eq.s32.totalorder %s25, 0
      %p83 = por %p81, %p82
      %p84 = scmp.ne.s32.totalorder %s72, %s73
      %p85 = scmp.eq.s32.totalorder %s26, 1
      %p86 = por %p84, %p85
      %p88 = scmp.ne.s32.totalorder %s73, %s87
      %p89 = scmp.eq.s32.totalorder %s26, 0
      %p90 = por %p88, %p89
      %s92 = sadd.s32 %s91, 1
      %p95 = scmp.eq.s32.totalorder %s20, 1
      %p96 = scmp.ne.s32.totalorder %s91, %s93
      %p97 = scmp.eq.s32.totalorder %s20, 0
      %p98 = por %p96, %p97
      %p99 = scmp.ne.s32.totalorder %s91, %s93
      %p100 = scmp.eq.s32.totalorder %s25, 1
      %p101 = por %p99, %p100
      %p102 = scmp.ne.s32.totalorder %s93, %s94
      %p103 = scmp.eq.s32.totalorder %s25, 0
      %p104 = por %p102, %p103
      %p105 = scmp.ne.s32.totalorder %s93, %s94
      %p106 = scmp.eq.s32.totalorder %s26, 1
      %p107 = por %p105, %p106
      %p109 = scmp.ne.s32.totalorder %s94, %s108
      %p110 = scmp.eq.s32.totalorder %s26, 0
      %p111 = por %p109, %p110
      %s113 = sadd.s32 %s112, 1
      %p116 = scmp.eq.s32.totalorder %s20, 1
      %p117 = scmp.ne.s32.totalorder %s112, %s114
      %p118 = scmp.eq.s32.totalorder %s20, 0
      %p119 = por %p117, %p118
      %p120 = scmp.ne.s32.totalorder %s112, %s114
      %p121 = scmp.eq.s32.totalorder %s25, 1
      %p122 = por %p120, %p121
      %p123 = scmp.ne.s32.totalorder %s114, %s115
      %p124 = scmp.eq.s32.totalorder %s25, 0
      %p125 = por %p123, %p124
      %p126 = scmp.ne.s32.totalorder %s114, %s115
      %p127 = scmp.eq.s32.totalorder %s26, 1
      %p128 = por %p126, %p127
      %p130 = scmp.ne.s32.totalorder %s115, %s129
      %p131 = scmp.eq.s32.totalorder %s26, 0
      %p132 = por %p130, %p131
      %s134 = sadd.s32 %s133, 1
      %p137 = scmp.eq.s32.totalorder %s20, 1
      %p138 = scmp.ne.s32.totalorder %s133, %s135
      %p139 = scmp.eq.s32.totalorder %s20, 0
      %p140 = por %p138, %p139
      %p141 = scmp.ne.s32.totalorder %s133, %s135
      %p142 = scmp.eq.s32.totalorder %s25, 1
      %p143 = por %p141, %p142
      %p144 = scmp.ne.s32.totalorder %s135, %s136
      %p145 = scmp.eq.s32.totalorder %s25, 0
      %p146 = por %p144, %p145
      %p147 = scmp.ne.s32.totalorder %s135, %s136
      %p148 = scmp.eq.s32.totalorder %s26, 1
      %p149 = por %p147, %p148
      %p151 = scmp.ne.s32.totalorder %s136, %s150
      %p152 = scmp.eq.s32.totalorder %s26, 0
      %p153 = por %p151, %p152
      %s154 = smul.u32 %s27, %s28
      %s155 = smul.u32 %s39, %s35
      %s156 = ssub.s32 %s154, %s155
      %p157 = scmp.eq.s32.totalorder %s156, 0
      %s159 = sadd.s32 %s158, 1
      %s160 = scalar_select %p157, %s158, %s159
      %p163 = pneg %p157
      %p164 = scmp.eq.s32.totalorder %s20, 1
      %p165 = por %p163, %p164
      %p166 = scmp.ne.s32.totalorder %s158, %s161
      %p167 = scmp.eq.s32.totalorder %s20, 0
      %p168 = por %p166, %p167
      %p169 = scmp.ne.s32.totalorder %s158, %s161
      %p170 = scmp.eq.s32.totalorder %s25, 1
      %p171 = por %p169, %p170
      %p172 = scmp.ne.s32.totalorder %s161, %s162
      %p173 = scmp.eq.s32.totalorder %s25, 0
      %p174 = por %p172, %p173
      %p175 = scmp.ne.s32.totalorder %s161, %s162
      %p176 = scmp.eq.s32.totalorder %s26, 1
      %p177 = por %p175, %p176
      %p179 = scmp.ne.s32.totalorder %s162, %s178
      %p180 = scmp.eq.s32.totalorder %s26, 0
      %p181 = por %p179, %p180
      %s182 = smul.u32 %s27, %s28
      %s183 = smul.u32 %s39, %s35
      %s184 = ssub.s32 %s182, %s183
      %p185 = scmp.eq.s32.totalorder %s184, 0
      %s187 = sadd.s32 %s186, 1
      %s188 = scalar_select %p185, %s186, %s187
      %p191 = pneg %p185
      %p192 = scmp.eq.s32.totalorder %s20, 1
      %p193 = por %p191, %p192
      %p194 = scmp.ne.s32.totalorder %s186, %s189
      %p195 = scmp.eq.s32.totalorder %s20, 0
      %p196 = por %p194, %p195
      %p197 = scmp.ne.s32.totalorder %s186, %s189
      %p198 = scmp.eq.s32.totalorder %s25, 1
      %p199 = por %p197, %p198
      %p200 = scmp.ne.s32.totalorder %s189, %s190
      %p201 = scmp.eq.s32.totalorder %s25, 0
      %p202 = por %p200, %p201
      %p203 = scmp.ne.s32.totalorder %s189, %s190
      %p204 = scmp.eq.s32.totalorder %s26, 1
      %p205 = por %p203, %p204
      %p207 = scmp.ne.s32.totalorder %s190, %s206
      %p208 = scmp.eq.s32.totalorder %s26, 0
      %p209 = por %p207, %p208
      %s210 = smul.u32 %s27, %s28
      %s211 = smul.u32 %s39, %s35
      %s212 = ssub.s32 %s210, %s211
      %p213 = scmp.eq.s32.totalorder %s212, 0
      %s215 = sadd.s32 %s214, 1
      %s216 = scalar_select %p213, %s214, %s215
      %p219 = pneg %p213
      %p220 = scmp.eq.s32.totalorder %s20, 1
      %p221 = por %p219, %p220
      %p222 = scmp.ne.s32.totalorder %s214, %s217
      %p223 = scmp.eq.s32.totalorder %s20, 0
      %p224 = por %p222, %p223
      %p225 = scmp.ne.s32.totalorder %s214, %s217
      %p226 = scmp.eq.s32.totalorder %s25, 1
      %p227 = por %p225, %p226
      %p228 = scmp.ne.s32.totalorder %s217, %s218
      %p229 = scmp.eq.s32.totalorder %s25, 0
      %p230 = por %p228, %p229
      %p231 = scmp.ne.s32.totalorder %s217, %s218
      %p232 = scmp.eq.s32.totalorder %s26, 1
      %p233 = por %p231, %p232
      %p235 = scmp.ne.s32.totalorder %s218, %s234
      %p236 = scmp.eq.s32.totalorder %s26, 0
      %p237 = por %p235, %p236
      %p238 = scmp.le.s32.totalorder 1, %s20
      %p239 = scmp.lt.s32.totalorder %s20, 3
      %p240 = pnand %p238, %p239
      %p241 = pneg %p240
      // Predicated region
      $region9: #{tpu_custom_call.1} parent=5 // pred_check
        _
      $region10: #{tpu_custom_call.1} parent=5 // pred_check_branch
        %243 = sbr.rel (%p240) target = $region12
      $region11: #{tpu_custom_call.1} parent=5 // pred_region
        %s244 = ssub.s32 %s20, 1
        // Predicated region
        $region13: #{tpu_custom_call.1} parent=11 // pred_check
          %p245 = pneg %p83
        $region14: #{tpu_custom_call.1} parent=11 // pred_check_branch
          %247 = sbr.rel (%p245) target = $region16
        $region15: #{tpu_custom_call.1} parent=11 // pred_region
          %s249 = ssub.s32 2048, 2048
          %250 = vsyncadd [#allocation10], %s249
          %s251 = sshll.u32 [#allocation9], 4
          %s252 = int_to_ptr.vmem [resolvable:$true] %s251
          %257 = dma.hbm_to_vmem [thread:$0]  %s1, 2048, %s252, [#allocation10], 64, 64, 4
        $region16: #{tpu_custom_call.1} parent=11 // pred_fallthru
          _
        // Predicated region
        $region17: #{tpu_custom_call.1} parent=11 // pred_check
          %p258 = pneg %p104
        $region18: #{tpu_custom_call.1} parent=11 // pred_check_branch
          %260 = sbr.rel (%p258) target = $region20
        $region19: #{tpu_custom_call.1} parent=11 // pred_region
          _
        $region20: #{tpu_custom_call.1} parent=11 // pred_fallthru
          _
        // Predicated region
        $region21: #{tpu_custom_call.1} parent=11 // pred_check
          %p261 = pneg %p125
        $region22: #{tpu_custom_call.1} parent=11 // pred_check_branch
          %263 = sbr.rel (%p261) target = $region24
        $region23: #{tpu_custom_call.1} parent=11 // pred_region
          _
        $region24: #{tpu_custom_call.1} parent=11 // pred_fallthru
          _
        // Predicated region
        $region25: #{tpu_custom_call.1} parent=11 // pred_check
          %p264 = pneg %p146
        $region26: #{tpu_custom_call.1} parent=11 // pred_check_branch
          %266 = sbr.rel (%p264) target = $region28
        $region27: #{tpu_custom_call.1} parent=11 // pred_region
          _
        $region28: #{tpu_custom_call.1} parent=11 // pred_fallthru
          _
      $region12: #{tpu_custom_call.1} parent=5 // pred_fallthru
        _
      %p267 = scmp.lt.s32.totalorder %s20, 2
      // Predicated region
      $region29: #{tpu_custom_call.1} parent=5 // pred_check
        %p268 = pneg %p267
      $region30: #{tpu_custom_call.1} parent=5 // pred_check_branch
        %270 = sbr.rel (%p268) target = $region32
      $region31: #{tpu_custom_call.1} parent=5 // pred_region
        // Predicated region
        $region33: #{tpu_custom_call.1} parent=31 // pred_check
          %p271 = pneg %p56
        $region34: #{tpu_custom_call.1} parent=31 // pred_check_branch
          %273 = sbr.rel (%p271) target = $region36
        $region35: #{tpu_custom_call.1} parent=31 // pred_region
          %s274 = sand.u32 %s46, 1
          %s275 = scalar_lea.sflag [#allocation7], %s274
          %s276 = sand.u32 %s46, 1
          %s277 = smul.addr %s276, 1024
          %s278 = scalar_lea.vmem [#allocation6], %s277
          %s279 = ssub.s32 1, %s27
          %s280 = smul.u32 %s279, %s28
          %s281 = smul.u32 128, %s280
          %s283 = ssub.s32 16384, 16384
          %284 = vsyncadd %s275, %s283
          %s285 = smul.addr %s281, 2
          %s286 = smul.addr %s285, 64
          %s287 = scalar_lea.hbm %s0, %s286
          %s288 = sshll.u32 %s278, 4
          %s289 = int_to_ptr.vmem [resolvable:$true] %s288
          %294 = dma.hbm_to_vmem [thread:$0]  %s287, 16384, %s289, %s275, 128, 128, 8
        $region36: #{tpu_custom_call.1} parent=31 // pred_fallthru
          _
        // Predicated region
        $region37: #{tpu_custom_call.1} parent=31 // pred_check
          %p295 = pneg %p168
        $region38: #{tpu_custom_call.1} parent=31 // pred_check_branch
          %297 = sbr.rel (%p295) target = $region40
        $region39: #{tpu_custom_call.1} parent=31 // pred_region
          %s298 = smul.u32 %s27, %s28
          %s299 = smul.u32 2, %s298
          %p300 = scmp.lt.s32.totalorder %s299, 1
          %s301 = scalar_select %p300, %s299, 1
          %s302 = smul.addr %s301, 8
          %s303 = scalar_lea.vmem %s5, %s302
          %s304 = smul.u32 %s27, %s28
          %s305 = smul.u32 2, %s304
        $region40: #{tpu_custom_call.1} parent=31 // pred_fallthru
          _
        // Predicated region
        $region41: #{tpu_custom_call.1} parent=31 // pred_check
          %p306 = pneg %p196
        $region42: #{tpu_custom_call.1} parent=31 // pred_check_branch
          %308 = sbr.rel (%p306) target = $region44
        $region43: #{tpu_custom_call.1} parent=31 // pred_region
          %s309 = smul.u32 %s27, %s28
          %s310 = smul.u32 2, %s309
          %p311 = scmp.lt.s32.totalorder %s310, 1
          %s312 = scalar_select %p311, %s310, 1
          %s313 = smul.addr %s312, 8
          %s314 = scalar_lea.vmem %s6, %s313
          %s315 = smul.u32 %s27, %s28
          %s316 = smul.u32 2, %s315
        $region44: #{tpu_custom_call.1} parent=31 // pred_fallthru
          _
      $region32: #{tpu_custom_call.1} parent=5 // pred_fallthru
        _
      %p317 = scmp.le.s32.totalorder 1, %s20
      %p318 = scmp.lt.s32.totalorder %s20, 3
      %p319 = pnand %p317, %p318
      %p320 = pneg %p319
      // Predicated region
      $region45: #{tpu_custom_call.1} parent=5 // pred_check
        _
      $region46: #{tpu_custom_call.1} parent=5 // pred_check_branch
        %322 = sbr.rel (%p319) target = $region48
      $region47: #{tpu_custom_call.1} parent=5 // pred_region
        %s323 = ssub.s32 %s20, 1
        %s324 = sand.u32 %s49, 1
        %s325 = scalar_lea.sflag [#allocation7], %s324
        %s326 = sand.u32 %s49, 1
        %s327 = smul.addr %s326, 1024
        %s328 = scalar_lea.vmem [#allocation6], %s327
        // Predicated region
        $region49: #{tpu_custom_call.1} parent=47 // pred_check
          %p329 = pneg %p62
        $region50: #{tpu_custom_call.1} parent=47 // pred_check_branch
          %331 = sbr.rel (%p329) target = $region52
        $region51: #{tpu_custom_call.1} parent=47 // pred_region
          %332 = dma.done %s325, 16384
        $region52: #{tpu_custom_call.1} parent=47 // pred_fallthru
          _
        // Predicated region
        $region53: #{tpu_custom_call.1} parent=47 // pred_check
          %p333 = pneg %p83
        $region54: #{tpu_custom_call.1} parent=47 // pred_check_branch
          %335 = sbr.rel (%p333) target = $region56
        $region55: #{tpu_custom_call.1} parent=47 // pred_region
          %336 = dma.done [#allocation10], 2048
        $region56: #{tpu_custom_call.1} parent=47 // pred_fallthru
          _
        %s337 = sand.u32 %s49, 1
        %s338 = scalar_lea.sflag [#allocation7], %s337
        %s339 = sand.u32 %s49, 1
        %s340 = smul.addr %s339, 1024
        %s341 = scalar_lea.vmem [#allocation6], %s340
        %p342 = pneg %p62
        %p343 = pneg %p59
        %p344 = pneg %p83
        %p345 = pneg %p80
        %p346 = pneg %p104
        %p347 = pneg %p101
        %p348 = pneg %p125
        %p349 = pneg %p122
        %p350 = pneg %p146
        %p351 = pneg %p143
        %s352 = smul.u32 %s29, %s30
        %s353 = smul.u32 2, %s352
        %p354 = scmp.lt.s32.totalorder %s353, 1
        %s355 = scalar_select %p354, %s353, 1
        %s356 = smul.addr %s355, 8
        %s357 = scalar_lea.vmem %s5, %s356
        %p358 = pneg %p174
        %p359 = pneg %p171
        %s360 = smul.u32 %s29, %s30
        %s361 = smul.u32 2, %s360
        %p362 = scmp.lt.s32.totalorder %s361, 1
        %s363 = scalar_select %p362, %s361, 1
        %s364 = smul.addr %s363, 8
        %s365 = scalar_lea.vmem %s6, %s364
        %p366 = pneg %p202
        %p367 = pneg %p199
        %p368 = pneg %p230
        %p369 = pneg %p227
        %s370 = sand.u32 %s217, 1
        %s371 = scalar_lea.sflag [#allocation8], %s370
        %s372 = sand.u32 %s217, 1
        %s373 = smul.addr %s372, 16
        %s374 = scalar_lea.vmem [#allocation11], %s373
        %s375 = ssub.s32 1, %s29
        %s376 = smul.u32 %s375, %s30
        %s377 = smul.u32 128, %s376
        %s378 = smul.u32 %s29, %s30
        %s379 = smul.u32 2, %s378
        %p380 = scmp.lt.s32.totalorder %s379, 1
        %s381 = scalar_select %p380, %s379, 1
        %s382 = smul.addr %s381, 8
        %s383 = scalar_lea.vmem %s5, %s382
        %s384 = smul.u32 %s29, %s30
        %s385 = smul.u32 2, %s384
        %s386 = smul.u32 %s29, %s30
        %s387 = smul.u32 2, %s386
        %p388 = scmp.lt.s32.totalorder %s387, 1
        %s389 = scalar_select %p388, %s387, 1
        %s390 = smul.addr %s389, 8
        %s391 = scalar_lea.vmem %s6, %s390
        %s392 = smul.u32 %s29, %s30
        %s393 = smul.u32 2, %s392
        %s394 = smul.u32 %s29, %s30
        %s395 = smul.u32 2, %s394
        %p397 = scmp.eq.s32.totalorder %s29, 0
        // Predicated region
        $region57: #{tpu_custom_call.1} parent=47 // pred_check
          %p398 = pneg %p397
        $region58: #{tpu_custom_call.1} parent=47 // pred_check_branch
          %400 = sbr.rel (%p398) target = $region60
        $region59: #{tpu_custom_call.1} parent=47 // pred_region
          %v401 = vld [vmem:[%s328] sm:$0xff]
          %v402 = vld [vmem:[%s328 + $0x8] sm:$0xff]
          %v403 = vld [vmem:[%s328 + $0x10] sm:$0xff]
          %v404 = vld [vmem:[%s328 + $0x18] sm:$0xff]
          %v405 = vld [vmem:[%s328 + $0x20] sm:$0xff]
          %v406 = vld [vmem:[%s328 + $0x28] sm:$0xff]
          %v407 = vld [vmem:[%s328 + $0x30] sm:$0xff]
          %v408 = vld [vmem:[%s328 + $0x38] sm:$0xff]
          %v409 = vld [vmem:[%s328 + $0x40] sm:$0xff]
          %v410 = vld [vmem:[%s328 + $0x48] sm:$0xff]
          %v411 = vld [vmem:[%s328 + $0x50] sm:$0xff]
          %v412 = vld [vmem:[%s328 + $0x58] sm:$0xff]
          %v413 = vld [vmem:[%s328 + $0x60] sm:$0xff]
          %v414 = vld [vmem:[%s328 + $0x68] sm:$0xff]
          %v415 = vld [vmem:[%s328 + $0x70] sm:$0xff]
          %v416 = vld [vmem:[%s328 + $0x78] sm:$0xff]
          %v417 = vld [vmem:[%s328 + $0x80] sm:$0xff]
          %v418 = vld [vmem:[%s328 + $0x88] sm:$0xff]
          %v419 = vld [vmem:[%s328 + $0x90] sm:$0xff]
          %v420 = vld [vmem:[%s328 + $0x98] sm:$0xff]
          %v421 = vld [vmem:[%s328 + $0xa0] sm:$0xff]
          %v422 = vld [vmem:[%s328 + $0xa8] sm:$0xff]
          %v423 = vld [vmem:[%s328 + $0xb0] sm:$0xff]
          %v424 = vld [vmem:[%s328 + $0xb8] sm:$0xff]
          %v425 = vld [vmem:[%s328 + $0xc0] sm:$0xff]
          %v426 = vld [vmem:[%s328 + $0xc8] sm:$0xff]
          %v427 = vld [vmem:[%s328 + $0xd0] sm:$0xff]
          %v428 = vld [vmem:[%s328 + $0xd8] sm:$0xff]
          %v429 = vld [vmem:[%s328 + $0xe0] sm:$0xff]
          %v430 = vld [vmem:[%s328 + $0xe8] sm:$0xff]
          %v431 = vld [vmem:[%s328 + $0xf0] sm:$0xff]
          %v432 = vld [vmem:[%s328 + $0xf8] sm:$0xff]
          %v433 = vld [vmem:[%s328 + $0x100] sm:$0xff]
          %v434 = vld [vmem:[%s328 + $0x108] sm:$0xff]
          %v435 = vld [vmem:[%s328 + $0x110] sm:$0xff]
          %v436 = vld [vmem:[%s328 + $0x118] sm:$0xff]
          %v437 = vld [vmem:[%s328 + $0x120] sm:$0xff]
          %v438 = vld [vmem:[%s328 + $0x128] sm:$0xff]
          %v439 = vld [vmem:[%s328 + $0x130] sm:$0xff]
          %v440 = vld [vmem:[%s328 + $0x138] sm:$0xff]
          %v441 = vld [vmem:[%s328 + $0x140] sm:$0xff]
          %v442 = vld [vmem:[%s328 + $0x148] sm:$0xff]
          %v443 = vld [vmem:[%s328 + $0x150] sm:$0xff]
          %v444 = vld [vmem:[%s328 + $0x158] sm:$0xff]
          %v445 = vld [vmem:[%s328 + $0x160] sm:$0xff]
          %v446 = vld [vmem:[%s328 + $0x168] sm:$0xff]
          %v447 = vld [vmem:[%s328 + $0x170] sm:$0xff]
          %v448 = vld [vmem:[%s328 + $0x178] sm:$0xff]
          %v449 = vld [vmem:[%s328 + $0x180] sm:$0xff]
          %v450 = vld [vmem:[%s328 + $0x188] sm:$0xff]
          %v451 = vld [vmem:[%s328 + $0x190] sm:$0xff]
          %v452 = vld [vmem:[%s328 + $0x198] sm:$0xff]
          %v453 = vld [vmem:[%s328 + $0x1a0] sm:$0xff]
          %v454 = vld [vmem:[%s328 + $0x1a8] sm:$0xff]
          %v455 = vld [vmem:[%s328 + $0x1b0] sm:$0xff]
          %v456 = vld [vmem:[%s328 + $0x1b8] sm:$0xff]
          %v457 = vld [vmem:[%s328 + $0x1c0] sm:$0xff]
          %v458 = vld [vmem:[%s328 + $0x1c8] sm:$0xff]
          %v459 = vld [vmem:[%s328 + $0x1d0] sm:$0xff]
          %v460 = vld [vmem:[%s328 + $0x1d8] sm:$0xff]
          %v461 = vld [vmem:[%s328 + $0x1e0] sm:$0xff]
          %v462 = vld [vmem:[%s328 + $0x1e8] sm:$0xff]
          %v463 = vld [vmem:[%s328 + $0x1f0] sm:$0xff]
          %v464 = vld [vmem:[%s328 + $0x1f8] sm:$0xff]
          %v465 = vld [vmem:[%s328 + $0x200] sm:$0xff]
          %v466 = vld [vmem:[%s328 + $0x208] sm:$0xff]
          %v467 = vld [vmem:[%s328 + $0x210] sm:$0xff]
          %v468 = vld [vmem:[%s328 + $0x218] sm:$0xff]
          %v469 = vld [vmem:[%s328 + $0x220] sm:$0xff]
          %v470 = vld [vmem:[%s328 + $0x228] sm:$0xff]
          %v471 = vld [vmem:[%s328 + $0x230] sm:$0xff]
          %v472 = vld [vmem:[%s328 + $0x238] sm:$0xff]
          %v473 = vld [vmem:[%s328 + $0x240] sm:$0xff]
          %v474 = vld [vmem:[%s328 + $0x248] sm:$0xff]
          %v475 = vld [vmem:[%s328 + $0x250] sm:$0xff]
          %v476 = vld [vmem:[%s328 + $0x258] sm:$0xff]
          %v477 = vld [vmem:[%s328 + $0x260] sm:$0xff]
          %v478 = vld [vmem:[%s328 + $0x268] sm:$0xff]
          %v479 = vld [vmem:[%s328 + $0x270] sm:$0xff]
          %v480 = vld [vmem:[%s328 + $0x278] sm:$0xff]
          %v481 = vld [vmem:[%s328 + $0x280] sm:$0xff]
          %v482 = vld [vmem:[%s328 + $0x288] sm:$0xff]
          %v483 = vld [vmem:[%s328 + $0x290] sm:$0xff]
          %v484 = vld [vmem:[%s328 + $0x298] sm:$0xff]
          %v485 = vld [vmem:[%s328 + $0x2a0] sm:$0xff]
          %v486 = vld [vmem:[%s328 + $0x2a8] sm:$0xff]
          %v487 = vld [vmem:[%s328 + $0x2b0] sm:$0xff]
          %v488 = vld [vmem:[%s328 + $0x2b8] sm:$0xff]
          %v489 = vld [vmem:[%s328 + $0x2c0] sm:$0xff]
          %v490 = vld [vmem:[%s328 + $0x2c8] sm:$0xff]
          %v491 = vld [vmem:[%s328 + $0x2d0] sm:$0xff]
          %v492 = vld [vmem:[%s328 + $0x2d8] sm:$0xff]
          %v493 = vld [vmem:[%s328 + $0x2e0] sm:$0xff]
          %v494 = vld [vmem:[%s328 + $0x2e8] sm:$0xff]
          %v495 = vld [vmem:[%s328 + $0x2f0] sm:$0xff]
          %v496 = vld [vmem:[%s328 + $0x2f8] sm:$0xff]
          %v497 = vld [vmem:[%s328 + $0x300] sm:$0xff]
          %v498 = vld [vmem:[%s328 + $0x308] sm:$0xff]
          %v499 = vld [vmem:[%s328 + $0x310] sm:$0xff]
          %v500 = vld [vmem:[%s328 + $0x318] sm:$0xff]
          %v501 = vld [vmem:[%s328 + $0x320] sm:$0xff]
          %v502 = vld [vmem:[%s328 + $0x328] sm:$0xff]
          %v503 = vld [vmem:[%s328 + $0x330] sm:$0xff]
          %v504 = vld [vmem:[%s328 + $0x338] sm:$0xff]
          %v505 = vld [vmem:[%s328 + $0x340] sm:$0xff]
          %v506 = vld [vmem:[%s328 + $0x348] sm:$0xff]
          %v507 = vld [vmem:[%s328 + $0x350] sm:$0xff]
          %v508 = vld [vmem:[%s328 + $0x358] sm:$0xff]
          %v509 = vld [vmem:[%s328 + $0x360] sm:$0xff]
          %v510 = vld [vmem:[%s328 + $0x368] sm:$0xff]
          %v511 = vld [vmem:[%s328 + $0x370] sm:$0xff]
          %v512 = vld [vmem:[%s328 + $0x378] sm:$0xff]
          %v513 = vld [vmem:[%s328 + $0x380] sm:$0xff]
          %v514 = vld [vmem:[%s328 + $0x388] sm:$0xff]
          %v515 = vld [vmem:[%s328 + $0x390] sm:$0xff]
          %v516 = vld [vmem:[%s328 + $0x398] sm:$0xff]
          %v517 = vld [vmem:[%s328 + $0x3a0] sm:$0xff]
          %v518 = vld [vmem:[%s328 + $0x3a8] sm:$0xff]
          %v519 = vld [vmem:[%s328 + $0x3b0] sm:$0xff]
          %v520 = vld [vmem:[%s328 + $0x3b8] sm:$0xff]
          %v521 = vld [vmem:[%s328 + $0x3c0] sm:$0xff]
          %v522 = vld [vmem:[%s328 + $0x3c8] sm:$0xff]
          %v523 = vld [vmem:[%s328 + $0x3d0] sm:$0xff]
          %v524 = vld [vmem:[%s328 + $0x3d8] sm:$0xff]
          %v525 = vld [vmem:[%s328 + $0x3e0] sm:$0xff]
          %v526 = vld [vmem:[%s328 + $0x3e8] sm:$0xff]
          %v527 = vld [vmem:[%s328 + $0x3f0] sm:$0xff]
          %v528 = vld [vmem:[%s328 + $0x3f8] sm:$0xff]
          %v529 = vld [vmem:[#allocation9] sm:$0xf]
          %v530 = vld [vmem:[#allocation9 + $0x4] sm:$0xf]
          %v531 = vld [vmem:[#allocation9 + $0x8] sm:$0xf]
          %v532 = vld [vmem:[#allocation9 + $0xc] sm:$0xf]
          %v533 = vld [vmem:[#allocation9 + $0x10] sm:$0xf]
          %v534 = vld [vmem:[#allocation9 + $0x14] sm:$0xf]
          %v535 = vld [vmem:[#allocation9 + $0x18] sm:$0xf]
          %v536 = vld [vmem:[#allocation9 + $0x1c] sm:$0xf]
          %v537 = vld [vmem:[#allocation9 + $0x20] sm:$0xf]
          %v538 = vld [vmem:[#allocation9 + $0x24] sm:$0xf]
          %v539 = vld [vmem:[#allocation9 + $0x28] sm:$0xf]
          %v540 = vld [vmem:[#allocation9 + $0x2c] sm:$0xf]
          %v541 = vld [vmem:[#allocation9 + $0x30] sm:$0xf]
          %v542 = vld [vmem:[#allocation9 + $0x34] sm:$0xf]
          %v543 = vld [vmem:[#allocation9 + $0x38] sm:$0xf]
          %v544 = vld [vmem:[#allocation9 + $0x3c] sm:$0xf]
          %v545 = vld [vmem:[#allocation9 + $0x40] sm:$0xf]
          %v546 = vld [vmem:[#allocation9 + $0x44] sm:$0xf]
          %v547 = vld [vmem:[#allocation9 + $0x48] sm:$0xf]
          %v548 = vld [vmem:[#allocation9 + $0x4c] sm:$0xf]
          %v549 = vld [vmem:[#allocation9 + $0x50] sm:$0xf]
          %v550 = vld [vmem:[#allocation9 + $0x54] sm:$0xf]
          %v551 = vld [vmem:[#allocation9 + $0x58] sm:$0xf]
          %v552 = vld [vmem:[#allocation9 + $0x5c] sm:$0xf]
          %v553 = vld [vmem:[#allocation9 + $0x60] sm:$0xf]
          %v554 = vld [vmem:[#allocation9 + $0x64] sm:$0xf]
          %v555 = vld [vmem:[#allocation9 + $0x68] sm:$0xf]
          %v556 = vld [vmem:[#allocation9 + $0x6c] sm:$0xf]
          %v557 = vld [vmem:[#allocation9 + $0x70] sm:$0xf]
          %v558 = vld [vmem:[#allocation9 + $0x74] sm:$0xf]
          %v559 = vld [vmem:[#allocation9 + $0x78] sm:$0xf]
          %v560 = vld [vmem:[#allocation9 + $0x7c] sm:$0xf]
          %v561 = vld [vmem:[%s2] sm:$0x1]
          %v563 = vlaneseq
          %v564 = vshrl.u32 %v563, 7
          %v565 = vsub.s32 0, %v564
          %v566 = vrot.slane %v561, %v565
          %v696 = vunpack.c.l.b16 %v401
          %v697 = vunpack.c.h.b16 %v401
          %v698 = vunpack.c.l.b16 %v402
          %v699 = vunpack.c.h.b16 %v402
          %v700 = vunpack.c.l.b16 %v403
          %v701 = vunpack.c.h.b16 %v403
          %v702 = vunpack.c.l.b16 %v404
          %v703 = vunpack.c.h.b16 %v404
          %v704 = vunpack.c.l.b16 %v405
          %v705 = vunpack.c.h.b16 %v405
          %v706 = vunpack.c.l.b16 %v406
          %v707 = vunpack.c.h.b16 %v406
          %v708 = vunpack.c.l.b16 %v407
          %v709 = vunpack.c.h.b16 %v407
          %v710 = vunpack.c.l.b16 %v408
          %v711 = vunpack.c.h.b16 %v408
          %v712 = vunpack.c.l.b16 %v409
          %v713 = vunpack.c.h.b16 %v409
          %v714 = vunpack.c.l.b16 %v410
          %v715 = vunpack.c.h.b16 %v410
          %v716 = vunpack.c.l.b16 %v411
          %v717 = vunpack.c.h.b16 %v411
          %v718 = vunpack.c.l.b16 %v412
          %v719 = vunpack.c.h.b16 %v412
          %v720 = vunpack.c.l.b16 %v413
          %v721 = vunpack.c.h.b16 %v413
          %v722 = vunpack.c.l.b16 %v414
          %v723 = vunpack.c.h.b16 %v414
          %v724 = vunpack.c.l.b16 %v415
          %v725 = vunpack.c.h.b16 %v415
          %v726 = vunpack.c.l.b16 %v416
          %v727 = vunpack.c.h.b16 %v416
          %v728 = vunpack.c.l.b16 %v417
          %v729 = vunpack.c.h.b16 %v417
          %v730 = vunpack.c.l.b16 %v418
          %v731 = vunpack.c.h.b16 %v418
          %v732 = vunpack.c.l.b16 %v419
          %v733 = vunpack.c.h.b16 %v419
          %v734 = vunpack.c.l.b16 %v420
          %v735 = vunpack.c.h.b16 %v420
          %v736 = vunpack.c.l.b16 %v421
          %v737 = vunpack.c.h.b16 %v421
          %v738 = vunpack.c.l.b16 %v422
          %v739 = vunpack.c.h.b16 %v422
          %v740 = vunpack.c.l.b16 %v423
          %v741 = vunpack.c.h.b16 %v423
          %v742 = vunpack.c.l.b16 %v424
          %v743 = vunpack.c.h.b16 %v424
          %v744 = vunpack.c.l.b16 %v425
          %v745 = vunpack.c.h.b16 %v425
          %v746 = vunpack.c.l.b16 %v426
          %v747 = vunpack.c.h.b16 %v426
          %v748 = vunpack.c.l.b16 %v427
          %v749 = vunpack.c.h.b16 %v427
          %v750 = vunpack.c.l.b16 %v428
          %v751 = vunpack.c.h.b16 %v428
          %v752 = vunpack.c.l.b16 %v429
          %v753 = vunpack.c.h.b16 %v429
          %v754 = vunpack.c.l.b16 %v430
          %v755 = vunpack.c.h.b16 %v430
          %v756 = vunpack.c.l.b16 %v431
          %v757 = vunpack.c.h.b16 %v431
          %v758 = vunpack.c.l.b16 %v432
          %v759 = vunpack.c.h.b16 %v432
          %v760 = vunpack.c.l.b16 %v433
          %v761 = vunpack.c.h.b16 %v433
          %v762 = vunpack.c.l.b16 %v434
          %v763 = vunpack.c.h.b16 %v434
          %v764 = vunpack.c.l.b16 %v435
          %v765 = vunpack.c.h.b16 %v435
          %v766 = vunpack.c.l.b16 %v436
          %v767 = vunpack.c.h.b16 %v436
          %v768 = vunpack.c.l.b16 %v437
          %v769 = vunpack.c.h.b16 %v437
          %v770 = vunpack.c.l.b16 %v438
          %v771 = vunpack.c.h.b16 %v438
          %v772 = vunpack.c.l.b16 %v439
          %v773 = vunpack.c.h.b16 %v439
          %v774 = vunpack.c.l.b16 %v440
          %v775 = vunpack.c.h.b16 %v440
          %v776 = vunpack.c.l.b16 %v441
          %v777 = vunpack.c.h.b16 %v441
          %v778 = vunpack.c.l.b16 %v442
          %v779 = vunpack.c.h.b16 %v442
          %v780 = vunpack.c.l.b16 %v443
          %v781 = vunpack.c.h.b16 %v443
          %v782 = vunpack.c.l.b16 %v444
          %v783 = vunpack.c.h.b16 %v444
          %v784 = vunpack.c.l.b16 %v445
          %v785 = vunpack.c.h.b16 %v445
          %v786 = vunpack.c.l.b16 %v446
          %v787 = vunpack.c.h.b16 %v446
          %v788 = vunpack.c.l.b16 %v447
          %v789 = vunpack.c.h.b16 %v447
          %v790 = vunpack.c.l.b16 %v448
          %v791 = vunpack.c.h.b16 %v448
          %v792 = vunpack.c.l.b16 %v449
          %v793 = vunpack.c.h.b16 %v449
          %v794 = vunpack.c.l.b16 %v450
          %v795 = vunpack.c.h.b16 %v450
          %v796 = vunpack.c.l.b16 %v451
          %v797 = vunpack.c.h.b16 %v451
          %v798 = vunpack.c.l.b16 %v452
          %v799 = vunpack.c.h.b16 %v452
          %v800 = vunpack.c.l.b16 %v453
          %v801 = vunpack.c.h.b16 %v453
          %v802 = vunpack.c.l.b16 %v454
          %v803 = vunpack.c.h.b16 %v454
          %v804 = vunpack.c.l.b16 %v455
          %v805 = vunpack.c.h.b16 %v455
          %v806 = vunpack.c.l.b16 %v456
          %v807 = vunpack.c.h.b16 %v456
          %v808 = vunpack.c.l.b16 %v457
          %v809 = vunpack.c.h.b16 %v457
          %v810 = vunpack.c.l.b16 %v458
          %v811 = vunpack.c.h.b16 %v458
          %v812 = vunpack.c.l.b16 %v459
          %v813 = vunpack.c.h.b16 %v459
          %v814 = vunpack.c.l.b16 %v460
          %v815 = vunpack.c.h.b16 %v460
          %v816 = vunpack.c.l.b16 %v461
          %v817 = vunpack.c.h.b16 %v461
          %v818 = vunpack.c.l.b16 %v462
          %v819 = vunpack.c.h.b16 %v462
          %v820 = vunpack.c.l.b16 %v463
          %v821 = vunpack.c.h.b16 %v463
          %v822 = vunpack.c.l.b16 %v464
          %v823 = vunpack.c.h.b16 %v464
          %v824 = vunpack.c.l.b16 %v465
          %v825 = vunpack.c.h.b16 %v465
          %v826 = vunpack.c.l.b16 %v466
          %v827 = vunpack.c.h.b16 %v466
          %v828 = vunpack.c.l.b16 %v467
          %v829 = vunpack.c.h.b16 %v467
          %v830 = vunpack.c.l.b16 %v468
          %v831 = vunpack.c.h.b16 %v468
          %v832 = vunpack.c.l.b16 %v469
          %v833 = vunpack.c.h.b16 %v469
          %v834 = vunpack.c.l.b16 %v470
          %v835 = vunpack.c.h.b16 %v470
          %v836 = vunpack.c.l.b16 %v471
          %v837 = vunpack.c.h.b16 %v471
          %v838 = vunpack.c.l.b16 %v472
          %v839 = vunpack.c.h.b16 %v472
          %v840 = vunpack.c.l.b16 %v473
          %v841 = vunpack.c.h.b16 %v473
          %v842 = vunpack.c.l.b16 %v474
          %v843 = vunpack.c.h.b16 %v474
          %v844 = vunpack.c.l.b16 %v475
          %v845 = vunpack.c.h.b16 %v475
          %v846 = vunpack.c.l.b16 %v476
          %v847 = vunpack.c.h.b16 %v476
          %v848 = vunpack.c.l.b16 %v477
          %v849 = vunpack.c.h.b16 %v477
          %v850 = vunpack.c.l.b16 %v478
          %v851 = vunpack.c.h.b16 %v478
          %v852 = vunpack.c.l.b16 %v479
          %v853 = vunpack.c.h.b16 %v479
          %v854 = vunpack.c.l.b16 %v480
          %v855 = vunpack.c.h.b16 %v480
          %v856 = vunpack.c.l.b16 %v481
          %v857 = vunpack.c.h.b16 %v481
          %v858 = vunpack.c.l.b16 %v482
          %v859 = vunpack.c.h.b16 %v482
          %v860 = vunpack.c.l.b16 %v483
          %v861 = vunpack.c.h.b16 %v483
          %v862 = vunpack.c.l.b16 %v484
          %v863 = vunpack.c.h.b16 %v484
          %v864 = vunpack.c.l.b16 %v485
          %v865 = vunpack.c.h.b16 %v485
          %v866 = vunpack.c.l.b16 %v486
          %v867 = vunpack.c.h.b16 %v486
          %v868 = vunpack.c.l.b16 %v487
          %v869 = vunpack.c.h.b16 %v487
          %v870 = vunpack.c.l.b16 %v488
          %v871 = vunpack.c.h.b16 %v488
          %v872 = vunpack.c.l.b16 %v489
          %v873 = vunpack.c.h.b16 %v489
          %v874 = vunpack.c.l.b16 %v490
          %v875 = vunpack.c.h.b16 %v490
          %v876 = vunpack.c.l.b16 %v491
          %v877 = vunpack.c.h.b16 %v491
          %v878 = vunpack.c.l.b16 %v492
          %v879 = vunpack.c.h.b16 %v492
          %v880 = vunpack.c.l.b16 %v493
          %v881 = vunpack.c.h.b16 %v493
          %v882 = vunpack.c.l.b16 %v494
          %v883 = vunpack.c.h.b16 %v494
          %v884 = vunpack.c.l.b16 %v495
          %v885 = vunpack.c.h.b16 %v495
          %v886 = vunpack.c.l.b16 %v496
          %v887 = vunpack.c.h.b16 %v496
          %v888 = vunpack.c.l.b16 %v497
          %v889 = vunpack.c.h.b16 %v497
          %v890 = vunpack.c.l.b16 %v498
          %v891 = vunpack.c.h.b16 %v498
          %v892 = vunpack.c.l.b16 %v499
          %v893 = vunpack.c.h.b16 %v499
          %v894 = vunpack.c.l.b16 %v500
          %v895 = vunpack.c.h.b16 %v500
          %v896 = vunpack.c.l.b16 %v501
          %v897 = vunpack.c.h.b16 %v501
          %v898 = vunpack.c.l.b16 %v502
          %v899 = vunpack.c.h.b16 %v502
          %v900 = vunpack.c.l.b16 %v503
          %v901 = vunpack.c.h.b16 %v503
          %v902 = vunpack.c.l.b16 %v504
          %v903 = vunpack.c.h.b16 %v504
          %v904 = vunpack.c.l.b16 %v505
          %v905 = vunpack.c.h.b16 %v505
          %v906 = vunpack.c.l.b16 %v506
          %v907 = vunpack.c.h.b16 %v506
          %v908 = vunpack.c.l.b16 %v507
          %v909 = vunpack.c.h.b16 %v507
          %v910 = vunpack.c.l.b16 %v508
          %v911 = vunpack.c.h.b16 %v508
          %v912 = vunpack.c.l.b16 %v509
          %v913 = vunpack.c.h.b16 %v509
          %v914 = vunpack.c.l.b16 %v510
          %v915 = vunpack.c.h.b16 %v510
          %v916 = vunpack.c.l.b16 %v511
          %v917 = vunpack.c.h.b16 %v511
          %v918 = vunpack.c.l.b16 %v512
          %v919 = vunpack.c.h.b16 %v512
          %v920 = vunpack.c.l.b16 %v513
          %v921 = vunpack.c.h.b16 %v513
          %v922 = vunpack.c.l.b16 %v514
          %v923 = vunpack.c.h.b16 %v514
          %v924 = vunpack.c.l.b16 %v515
          %v925 = vunpack.c.h.b16 %v515
          %v926 = vunpack.c.l.b16 %v516
          %v927 = vunpack.c.h.b16 %v516
          %v928 = vunpack.c.l.b16 %v517
          %v929 = vunpack.c.h.b16 %v517
          %v930 = vunpack.c.l.b16 %v518
          %v931 = vunpack.c.h.b16 %v518
          %v932 = vunpack.c.l.b16 %v519
          %v933 = vunpack.c.h.b16 %v519
          %v934 = vunpack.c.l.b16 %v520
          %v935 = vunpack.c.h.b16 %v520
          %v936 = vunpack.c.l.b16 %v521
          %v937 = vunpack.c.h.b16 %v521
          %v938 = vunpack.c.l.b16 %v522
          %v939 = vunpack.c.h.b16 %v522
          %v940 = vunpack.c.l.b16 %v523
          %v941 = vunpack.c.h.b16 %v523
          %v942 = vunpack.c.l.b16 %v524
          %v943 = vunpack.c.h.b16 %v524
          %v944 = vunpack.c.l.b16 %v525
          %v945 = vunpack.c.h.b16 %v525
          %v946 = vunpack.c.l.b16 %v526
          %v947 = vunpack.c.h.b16 %v526
          %v948 = vunpack.c.l.b16 %v527
          %v949 = vunpack.c.h.b16 %v527
          %v950 = vunpack.c.l.b16 %v528
          %v951 = vunpack.c.h.b16 %v528
          %v952 = vpack.c.b16 %v698, %v696
          %v953 = vpack.c.b16 %v699, %v697
          %v954 = vpack.c.b16 %v702, %v700
          %v955 = vpack.c.b16 %v703, %v701
          %v956 = vpack.c.b16 %v706, %v704
          %v957 = vpack.c.b16 %v707, %v705
          %v958 = vpack.c.b16 %v710, %v708
          %v959 = vpack.c.b16 %v711, %v709
          %v960 = vpack.c.b16 %v714, %v712
          %v961 = vpack.c.b16 %v715, %v713
          %v962 = vpack.c.b16 %v718, %v716
          %v963 = vpack.c.b16 %v719, %v717
          %v964 = vpack.c.b16 %v722, %v720
          %v965 = vpack.c.b16 %v723, %v721
          %v966 = vpack.c.b16 %v726, %v724
          %v967 = vpack.c.b16 %v727, %v725
          %v968 = vpack.c.b16 %v730, %v728
          %v969 = vpack.c.b16 %v731, %v729
          %v970 = vpack.c.b16 %v734, %v732
          %v971 = vpack.c.b16 %v735, %v733
          %v972 = vpack.c.b16 %v738, %v736
          %v973 = vpack.c.b16 %v739, %v737
          %v974 = vpack.c.b16 %v742, %v740
          %v975 = vpack.c.b16 %v743, %v741
          %v976 = vpack.c.b16 %v746, %v744
          %v977 = vpack.c.b16 %v747, %v745
          %v978 = vpack.c.b16 %v750, %v748
          %v979 = vpack.c.b16 %v751, %v749
          %v980 = vpack.c.b16 %v754, %v752
          %v981 = vpack.c.b16 %v755, %v753
          %v982 = vpack.c.b16 %v758, %v756
          %v983 = vpack.c.b16 %v759, %v757
          %v984 = vpack.c.b16 %v762, %v760
          %v985 = vpack.c.b16 %v763, %v761
          %v986 = vpack.c.b16 %v766, %v764
          %v987 = vpack.c.b16 %v767, %v765
          %v988 = vpack.c.b16 %v770, %v768
          %v989 = vpack.c.b16 %v771, %v769
          %v990 = vpack.c.b16 %v774, %v772
          %v991 = vpack.c.b16 %v775, %v773
          %v992 = vpack.c.b16 %v778, %v776
          %v993 = vpack.c.b16 %v779, %v777
          %v994 = vpack.c.b16 %v782, %v780
          %v995 = vpack.c.b16 %v783, %v781
          %v996 = vpack.c.b16 %v786, %v784
          %v997 = vpack.c.b16 %v787, %v785
          %v998 = vpack.c.b16 %v790, %v788
          %v999 = vpack.c.b16 %v791, %v789
          %v1000 = vpack.c.b16 %v794, %v792
          %v1001 = vpack.c.b16 %v795, %v793
          %v1002 = vpack.c.b16 %v798, %v796
          %v1003 = vpack.c.b16 %v799, %v797
          %v1004 = vpack.c.b16 %v802, %v800
          %v1005 = vpack.c.b16 %v803, %v801
          %v1006 = vpack.c.b16 %v806, %v804
          %v1007 = vpack.c.b16 %v807, %v805
          %v1008 = vpack.c.b16 %v810, %v808
          %v1009 = vpack.c.b16 %v811, %v809
          %v1010 = vpack.c.b16 %v814, %v812
          %v1011 = vpack.c.b16 %v815, %v813
          %v1012 = vpack.c.b16 %v818, %v816
          %v1013 = vpack.c.b16 %v819, %v817
          %v1014 = vpack.c.b16 %v822, %v820
          %v1015 = vpack.c.b16 %v823, %v821
          %v1016 = vpack.c.b16 %v826, %v824
          %v1017 = vpack.c.b16 %v827, %v825
          %v1018 = vpack.c.b16 %v830, %v828
          %v1019 = vpack.c.b16 %v831, %v829
          %v1020 = vpack.c.b16 %v834, %v832
          %v1021 = vpack.c.b16 %v835, %v833
          %v1022 = vpack.c.b16 %v838, %v836
          %v1023 = vpack.c.b16 %v839, %v837
          %v1024 = vpack.c.b16 %v842, %v840
          %v1025 = vpack.c.b16 %v843, %v841
          %v1026 = vpack.c.b16 %v846, %v844
          %v1027 = vpack.c.b16 %v847, %v845
          %v1028 = vpack.c.b16 %v850, %v848
          %v1029 = vpack.c.b16 %v851, %v849
          %v1030 = vpack.c.b16 %v854, %v852
          %v1031 = vpack.c.b16 %v855, %v853
          %v1032 = vpack.c.b16 %v858, %v856
          %v1033 = vpack.c.b16 %v859, %v857
          %v1034 = vpack.c.b16 %v862, %v860
          %v1035 = vpack.c.b16 %v863, %v861
          %v1036 = vpack.c.b16 %v866, %v864
          %v1037 = vpack.c.b16 %v867, %v865
          %v1038 = vpack.c.b16 %v870, %v868
          %v1039 = vpack.c.b16 %v871, %v869
          %v1040 = vpack.c.b16 %v874, %v872
          %v1041 = vpack.c.b16 %v875, %v873
          %v1042 = vpack.c.b16 %v878, %v876
          %v1043 = vpack.c.b16 %v879, %v877
          %v1044 = vpack.c.b16 %v882, %v880
          %v1045 = vpack.c.b16 %v883, %v881
          %v1046 = vpack.c.b16 %v886, %v884
          %v1047 = vpack.c.b16 %v887, %v885
          %v1048 = vpack.c.b16 %v890, %v888
          %v1049 = vpack.c.b16 %v891, %v889
          %v1050 = vpack.c.b16 %v894, %v892
          %v1051 = vpack.c.b16 %v895, %v893
          %v1052 = vpack.c.b16 %v898, %v896
          %v1053 = vpack.c.b16 %v899, %v897
          %v1054 = vpack.c.b16 %v902, %v900
          %v1055 = vpack.c.b16 %v903, %v901
          %v1056 = vpack.c.b16 %v906, %v904
          %v1057 = vpack.c.b16 %v907, %v905
          %v1058 = vpack.c.b16 %v910, %v908
          %v1059 = vpack.c.b16 %v911, %v909
          %v1060 = vpack.c.b16 %v914, %v912
          %v1061 = vpack.c.b16 %v915, %v913
          %v1062 = vpack.c.b16 %v918, %v916
          %v1063 = vpack.c.b16 %v919, %v917
          %v1064 = vpack.c.b16 %v922, %v920
          %v1065 = vpack.c.b16 %v923, %v921
          %v1066 = vpack.c.b16 %v926, %v924
          %v1067 = vpack.c.b16 %v927, %v925
          %v1068 = vpack.c.b16 %v930, %v928
          %v1069 = vpack.c.b16 %v931, %v929
          %v1070 = vpack.c.b16 %v934, %v932
          %v1071 = vpack.c.b16 %v935, %v933
          %v1072 = vpack.c.b16 %v938, %v936
          %v1073 = vpack.c.b16 %v939, %v937
          %v1074 = vpack.c.b16 %v942, %v940
          %v1075 = vpack.c.b16 %v943, %v941
          %v1076 = vpack.c.b16 %v946, %v944
          %v1077 = vpack.c.b16 %v947, %v945
          %v1078 = vpack.c.b16 %v950, %v948
          %v1079 = vpack.c.b16 %v951, %v949
          %v1240 = vunpack.c.l.b16 %v529
          %v1241 = vunpack.c.l.b16 %v530
          %v1242 = vunpack.c.l.b16 %v531
          %v1243 = vunpack.c.l.b16 %v532
          %v1244 = vunpack.c.l.b16 %v533
          %v1245 = vunpack.c.l.b16 %v534
          %v1246 = vunpack.c.l.b16 %v535
          %v1247 = vunpack.c.l.b16 %v536
          %v1248 = vunpack.c.l.b16 %v537
          %v1249 = vunpack.c.l.b16 %v538
          %v1250 = vunpack.c.l.b16 %v539
          %v1251 = vunpack.c.l.b16 %v540
          %v1252 = vunpack.c.l.b16 %v541
          %v1253 = vunpack.c.l.b16 %v542
          %v1254 = vunpack.c.l.b16 %v543
          %v1255 = vunpack.c.l.b16 %v544
          %v1256 = vunpack.c.l.b16 %v545
          %v1257 = vunpack.c.l.b16 %v546
          %v1258 = vunpack.c.l.b16 %v547
          %v1259 = vunpack.c.l.b16 %v548
          %v1260 = vunpack.c.l.b16 %v549
          %v1261 = vunpack.c.l.b16 %v550
          %v1262 = vunpack.c.l.b16 %v551
          %v1263 = vunpack.c.l.b16 %v552
          %v1264 = vunpack.c.l.b16 %v553
          %v1265 = vunpack.c.l.b16 %v554
          %v1266 = vunpack.c.l.b16 %v555
          %v1267 = vunpack.c.l.b16 %v556
          %v1268 = vunpack.c.l.b16 %v557
          %v1269 = vunpack.c.l.b16 %v558
          %v1270 = vunpack.c.l.b16 %v559
          %v1271 = vunpack.c.l.b16 %v560
          %v1272 = vpack.c.b16 %v1241, %v1240
          %v1273 = vpack.c.b16 %v1243, %v1242
          %v1274 = vpack.c.b16 %v1245, %v1244
          %v1275 = vpack.c.b16 %v1247, %v1246
          %v1276 = vpack.c.b16 %v1249, %v1248
          %v1277 = vpack.c.b16 %v1251, %v1250
          %v1278 = vpack.c.b16 %v1253, %v1252
          %v1279 = vpack.c.b16 %v1255, %v1254
          %v1280 = vpack.c.b16 %v1257, %v1256
          %v1281 = vpack.c.b16 %v1259, %v1258
          %v1282 = vpack.c.b16 %v1261, %v1260
          %v1283 = vpack.c.b16 %v1263, %v1262
          %v1284 = vpack.c.b16 %v1265, %v1264
          %v1285 = vpack.c.b16 %v1267, %v1266
          %v1286 = vpack.c.b16 %v1269, %v1268
          %v1287 = vpack.c.b16 %v1271, %v1270
          %1304 = vmatprep.subr.bf16.mxu0 0
          %1305 = vmatpush1.bf16.msra.mxu0 %v1272
          %1306 = vmatprep.subr.bf16.mxu0 0
          %1307 = vmatpush1.bf16.msra.mxu0 %v1273
          %1308 = vmatprep.subr.bf16.mxu0 0
          %1309 = vmatpush1.bf16.msra.mxu0 %v1274
          %1310 = vmatprep.subr.bf16.mxu0 0
          %1311 = vmatpush1.bf16.msra.mxu0 %v1275
          %1312 = vmatprep.subr.bf16.mxu0 0
          %1313 = vmatpush1.bf16.msra.mxu0 %v1276
          %1314 = vmatprep.subr.bf16.mxu0 0
          %1315 = vmatpush1.bf16.msra.mxu0 %v1277
          %1316 = vmatprep.subr.bf16.mxu0 0
          %1317 = vmatpush1.bf16.msra.mxu0 %v1278
          %1318 = vmatprep.subr.bf16.mxu0 0
          %1319 = vmatpush1.bf16.msra.mxu0 %v1279
          %1320 = vmatprep.subr.bf16.mxu0 0
          %1321 = vmatpush1.bf16.msra.mxu0 %v1280
          %1322 = vmatprep.subr.bf16.mxu0 0
          %1323 = vmatpush1.bf16.msra.mxu0 %v1281
          %1324 = vmatprep.subr.bf16.mxu0 0
          %1325 = vmatpush1.bf16.msra.mxu0 %v1282
          %1326 = vmatprep.subr.bf16.mxu0 0
          %1327 = vmatpush1.bf16.msra.mxu0 %v1283
          %1328 = vmatprep.subr.bf16.mxu0 0
          %1329 = vmatpush1.bf16.msra.mxu0 %v1284
          %1330 = vmatprep.subr.bf16.mxu0 0
          %1331 = vmatpush1.bf16.msra.mxu0 %v1285
          %1332 = vmatprep.subr.bf16.mxu0 0
          %1333 = vmatpush1.bf16.msra.mxu0 %v1286
          %1334 = vmatprep.subr.bf16.mxu0 0
          %1335 = vmatpush1.bf16.msra.mxu0 %v1287
          %1336 = vmatprep.mubr.bf16.mxu0 %v953
          %1337 = vmatmul.mubr.bf16.gmra.mrb[0].mxu0 %v952
          %v1338 = vpop.f32.mrb[0].mxu0
          %v1339 = vadd.f32 %v566, %v1338
          %v1340 = vpop.f32.mrb[0].mxu0
          %v1341 = vpop.f32.mrb[0].mxu0
          %v1342 = vadd.f32 %v566, %v1341
          %v1343 = vpop.f32.mrb[0].mxu0
          %1344 = vmatprep.mubr.bf16.mxu0 %v955
          %1345 = vmatmul.mubr.bf16.gmra.mrb[0].mxu0 %v954
          %v1346 = vpop.f32.mrb[0].mxu0
          %v1347 = vadd.f32 %v566, %v1346
          %v1348 = vpop.f32.mrb[0].mxu0
          %v1349 = vpop.f32.mrb[0].mxu0
          %v1350 = vadd.f32 %v566, %v1349
          %v1351 = vpop.f32.mrb[0].mxu0
          %1352 = vmatprep.mubr.bf16.mxu0 %v957
          %1353 = vmatmul.mubr.bf16.gmra.mrb[0].mxu0 %v956
          %v1354 = vpop.f32.mrb[0].mxu0
          %v1355 = vadd.f32 %v566, %v1354
          %v1356 = vpop.f32.mrb[0].mxu0
          %v1357 = vpop.f32.mrb[0].mxu0
          %v1358 = vadd.f32 %v566, %v1357
          %v1359 = vpop.f32.mrb[0].mxu0
          %1360 = vmatprep.mubr.bf16.mxu0 %v959
          %1361 = vmatmul.mubr.bf16.gmra.mrb[0].mxu0 %v958
          %v1362 = vpop.f32.mrb[0].mxu0
          %v1363 = vadd.f32 %v566, %v1362
          %v1364 = vpop.f32.mrb[0].mxu0
          %v1365 = vpop.f32.mrb[0].mxu0
          %v1366 = vadd.f32 %v566, %v1365
          %v1367 = vpop.f32.mrb[0].mxu0
          %1368 = vmatprep.mubr.bf16.mxu0 %v961
          %1369 = vmatmul.mubr.bf16.gmra.mrb[0].mxu0 %v960
          %v1370 = vpop.f32.mrb[0].mxu0
          %v1371 = vadd.f32 %v566, %v1370
          %v1372 = vpop.f32.mrb[0].mxu0
          %v1373 = vpop.f32.mrb[0].mxu0
          %v1374 = vadd.f32 %v566, %v1373
          %v1375 = vpop.f32.mrb[0].mxu0
          %1376 = vmatprep.mubr.bf16.mxu0 %v963
          %1377 = vmatmul.mubr.bf16.gmra.mrb[0].mxu0 %v962
          %v1378 = vpop.f32.mrb[0].mxu0
          %v1379 = vadd.f32 %v566, %v1378
          %v1380 = vpop.f32.mrb[0].mxu0
          %v1381 = vpop.f32.mrb[0].mxu0
          %v1382 = vadd.f32 %v566, %v1381
          %v1383 = vpop.f32.mrb[0].mxu0
          %1384 = vmatprep.mubr.bf16.mxu0 %v965
          %1385 = vmatmul.mubr.bf16.gmra.mrb[0].mxu0 %v964
          %v1386 = vpop.f32.mrb[0].mxu0
          %v1387 = vadd.f32 %v566, %v1386
          %v1388 = vpop.f32.mrb[0].mxu0
          %v1389 = vpop.f32.mrb[0].mxu0
          %v1390 = vadd.f32 %v566, %v1389
          %v1391 = vpop.f32.mrb[0].mxu0
          %1392 = vmatprep.mubr.bf16.mxu0 %v967
          %1393 = vmatmul.mubr.bf16.gmra.mrb[0].mxu0 %v966
          %v1394 = vpop.f32.mrb[0].mxu0
          %v1395 = vadd.f32 %v566, %v1394
          %v1396 = vpop.f32.mrb[0].mxu0
          %v1397 = vpop.f32.mrb[0].mxu0
          %v1398 = vadd.f32 %v566, %v1397
          %v1399 = vpop.f32.mrb[0].mxu0
          %1400 = vmatprep.mubr.bf16.mxu0 %v969
          %1401 = vmatmul.mubr.bf16.gmra.mrb[0].mxu0 %v968
          %v1402 = vpop.f32.mrb[0].mxu0
          %v1403 = vadd.f32 %v566, %v1402
          %v1404 = vpop.f32.mrb[0].mxu0
          %v1405 = vpop.f32.mrb[0].mxu0
          %v1406 = vadd.f32 %v566, %v1405
          %v1407 = vpop.f32.mrb[0].mxu0
          %1408 = vmatprep.mubr.bf16.mxu0 %v971
          %1409 = vmatmul.mubr.bf16.gmra.mrb[0].mxu0 %v970
          %v1410 = vpop.f32.mrb[0].mxu0
          %v1411 = vadd.f32 %v566, %v1410
          %v1412 = vpop.f32.mrb[0].mxu0
          %v1413 = vpop.f32.mrb[0].mxu0
          %v1414 = vadd.f32 %v566, %v1413
          %v1415 = vpop.f32.mrb[0].mxu0
          %1416 = vmatprep.mubr.bf16.mxu0 %v973
          %1417 = vmatmul.mubr.bf16.gmra.mrb[0].mxu0 %v972
          %v1418 = vpop.f32.mrb[0].mxu0
          %v1419 = vadd.f32 %v566, %v1418
          %v1420 = vpop.f32.mrb[0].mxu0
          %v1421 = vpop.f32.mrb[0].mxu0
          %v1422 = vadd.f32 %v566, %v1421
          %v1423 = vpop.f32.mrb[0].mxu0
          %1424 = vmatprep.mubr.bf16.mxu0 %v975
          %1425 = vmatmul.mubr.bf16.gmra.mrb[0].mxu0 %v974
          %v1426 = vpop.f32.mrb[0].mxu0
          %v1427 = vadd.f32 %v566, %v1426
          %v1428 = vpop.f32.mrb[0].mxu0
          %v1429 = vpop.f32.mrb[0].mxu0
          %v1430 = vadd.f32 %v566, %v1429
          %v1431 = vpop.f32.mrb[0].mxu0
          %1432 = vmatprep.mubr.bf16.mxu0 %v977
          %1433 = vmatmul.mubr.bf16.gmra.mrb[0].mxu0 %v976
          %v1434 = vpop.f32.mrb[0].mxu0
          %v1435 = vadd.f32 %v566, %v1434
          %v1436 = vpop.f32.mrb[0].mxu0
          %v1437 = vpop.f32.mrb[0].mxu0
          %v1438 = vadd.f32 %v566, %v1437
          %v1439 = vpop.f32.mrb[0].mxu0
          %1440 = vmatprep.mubr.bf16.mxu0 %v979
          %1441 = vmatmul.mubr.bf16.gmra.mrb[0].mxu0 %v978
          %v1442 = vpop.f32.mrb[0].mxu0
          %v1443 = vadd.f32 %v566, %v1442
          %v1444 = vpop.f32.mrb[0].mxu0
          %v1445 = vpop.f32.mrb[0].mxu0
          %v1446 = vadd.f32 %v566, %v1445
          %v1447 = vpop.f32.mrb[0].mxu0
          %1448 = vmatprep.mubr.bf16.mxu0 %v981
          %1449 = vmatmul.mubr.bf16.gmra.mrb[0].mxu0 %v980
          %v1450 = vpop.f32.mrb[0].mxu0
          %v1451 = vadd.f32 %v566, %v1450
          %v1452 = vpop.f32.mrb[0].mxu0
          %v1453 = vpop.f32.mrb[0].mxu0
          %v1454 = vadd.f32 %v566, %v1453
          %v1455 = vpop.f32.mrb[0].mxu0
          %1456 = vmatprep.mubr.bf16.mxu0 %v983
          %1457 = vmatmul.mubr.bf16.gmra.mrb[0].mxu0 %v982
          %v1458 = vpop.f32.mrb[0].mxu0
          %v1459 = vadd.f32 %v566, %v1458
          %v1460 = vpop.f32.mrb[0].mxu0
          %v1461 = vpop.f32.mrb[0].mxu0
          %v1462 = vadd.f32 %v566, %v1461
          %v1463 = vpop.f32.mrb[0].mxu0
          %1464 = vmatprep.mubr.bf16.mxu0 %v985
          %1465 = vmatmul.mubr.bf16.gmra.mrb[0].mxu0 %v984
          %v1466 = vpop.f32.mrb[0].mxu0
          %v1467 = vadd.f32 %v566, %v1466
          %v1468 = vpop.f32.mrb[0].mxu0
          %v1469 = vpop.f32.mrb[0].mxu0
          %v1470 = vadd.f32 %v566, %v1469
          %v1471 = vpop.f32.mrb[0].mxu0
          %1472 = vmatprep.mubr.bf16.mxu0 %v987
          %1473 = vmatmul.mubr.bf16.gmra.mrb[0].mxu0 %v986
          %v1474 = vpop.f32.mrb[0].mxu0
          %v1475 = vadd.f32 %v566, %v1474
          %v1476 = vpop.f32.mrb[0].mxu0
          %v1477 = vpop.f32.mrb[0].mxu0
          %v1478 = vadd.f32 %v566, %v1477
          %v1479 = vpop.f32.mrb[0].mxu0
          %1480 = vmatprep.mubr.bf16.mxu0 %v989
          %1481 = vmatmul.mubr.bf16.gmra.mrb[0].mxu0 %v988
          %v1482 = vpop.f32.mrb[0].mxu0
          %v1483 = vadd.f32 %v566, %v1482
          %v1484 = vpop.f32.mrb[0].mxu0
          %v1485 = vpop.f32.mrb[0].mxu0
          %v1486 = vadd.f32 %v566, %v1485
          %v1487 = vpop.f32.mrb[0].mxu0
          %1488 = vmatprep.mubr.bf16.mxu0 %v991
          %1489 = vmatmul.mubr.bf16.gmra.mrb[0].mxu0 %v990
          %v1490 = vpop.f32.mrb[0].mxu0
          %v1491 = vadd.f32 %v566, %v1490
          %v1492 = vpop.f32.mrb[0].mxu0
          %v1493 = vpop.f32.mrb[0].mxu0
          %v1494 = vadd.f32 %v566, %v1493
          %v1495 = vpop.f32.mrb[0].mxu0
          %1496 = vmatprep.mubr.bf16.mxu0 %v993
          %1497 = vmatmul.mubr.bf16.gmra.mrb[0].mxu0 %v992
          %v1498 = vpop.f32.mrb[0].mxu0
          %v1499 = vadd.f32 %v566, %v1498
          %v1500 = vpop.f32.mrb[0].mxu0
          %v1501 = vpop.f32.mrb[0].mxu0
          %v1502 = vadd.f32 %v566, %v1501
          %v1503 = vpop.f32.mrb[0].mxu0
          %1504 = vmatprep.mubr.bf16.mxu0 %v995
          %1505 = vmatmul.mubr.bf16.gmra.mrb[0].mxu0 %v994
          %v1506 = vpop.f32.mrb[0].mxu0
          %v1507 = vadd.f32 %v566, %v1506
          %v1508 = vpop.f32.mrb[0].mxu0
          %v1509 = vpop.f32.mrb[0].mxu0
          %v1510 = vadd.f32 %v566, %v1509
          %v1511 = vpop.f32.mrb[0].mxu0
          %1512 = vmatprep.mubr.bf16.mxu0 %v997
          %1513 = vmatmul.mubr.bf16.gmra.mrb[0].mxu0 %v996
          %v1514 = vpop.f32.mrb[0].mxu0
          %v1515 = vadd.f32 %v566, %v1514
          %v1516 = vpop.f32.mrb[0].mxu0
          %v1517 = vpop.f32.mrb[0].mxu0
          %v1518 = vadd.f32 %v566, %v1517
          %v1519 = vpop.f32.mrb[0].mxu0
          %1520 = vmatprep.mubr.bf16.mxu0 %v999
          %1521 = vmatmul.mubr.bf16.gmra.mrb[0].mxu0 %v998
          %v1522 = vpop.f32.mrb[0].mxu0
          %v1523 = vadd.f32 %v566, %v1522
          %v1524 = vpop.f32.mrb[0].mxu0
          %v1525 = vpop.f32.mrb[0].mxu0
          %v1526 = vadd.f32 %v566, %v1525
          %v1527 = vpop.f32.mrb[0].mxu0
          %1528 = vmatprep.mubr.bf16.mxu0 %v1001
          %1529 = vmatmul.mubr.bf16.gmra.mrb[0].mxu0 %v1000
          %v1530 = vpop.f32.mrb[0].mxu0
          %v1531 = vadd.f32 %v566, %v1530
          %v1532 = vpop.f32.mrb[0].mxu0
          %v1533 = vpop.f32.mrb[0].mxu0
          %v1534 = vadd.f32 %v566, %v1533
          %v1535 = vpop.f32.mrb[0].mxu0
          %1536 = vmatprep.mubr.bf16.mxu0 %v1003
          %1537 = vmatmul.mubr.bf16.gmra.mrb[0].mxu0 %v1002
          %v1538 = vpop.f32.mrb[0].mxu0
          %v1539 = vadd.f32 %v566, %v1538
          %v1540 = vpop.f32.mrb[0].mxu0
          %v1541 = vpop.f32.mrb[0].mxu0
          %v1542 = vadd.f32 %v566, %v1541
          %v1543 = vpop.f32.mrb[0].mxu0
          %1544 = vmatprep.mubr.bf16.mxu0 %v1005
          %1545 = vmatmul.mubr.bf16.gmra.mrb[0].mxu0 %v1004
          %v1546 = vpop.f32.mrb[0].mxu0
          %v1547 = vadd.f32 %v566, %v1546
          %v1548 = vpop.f32.mrb[0].mxu0
          %v1549 = vpop.f32.mrb[0].mxu0
          %v1550 = vadd.f32 %v566, %v1549
          %v1551 = vpop.f32.mrb[0].mxu0
          %1552 = vmatprep.mubr.bf16.mxu0 %v1007
          %1553 = vmatmul.mubr.bf16.gmra.mrb[0].mxu0 %v1006
          %v1554 = vpop.f32.mrb[0].mxu0
          %v1555 = vadd.f32 %v566, %v1554
          %v1556 = vpop.f32.mrb[0].mxu0
          %v1557 = vpop.f32.mrb[0].mxu0
          %v1558 = vadd.f32 %v566, %v1557
          %v1559 = vpop.f32.mrb[0].mxu0
          %1560 = vmatprep.mubr.bf16.mxu0 %v1009
          %1561 = vmatmul.mubr.bf16.gmra.mrb[0].mxu0 %v1008
          %v1562 = vpop.f32.mrb[0].mxu0
          %v1563 = vadd.f32 %v566, %v1562
          %v1564 = vpop.f32.mrb[0].mxu0
          %v1565 = vpop.f32.mrb[0].mxu0
          %v1566 = vadd.f32 %v566, %v1565
          %v1567 = vpop.f32.mrb[0].mxu0
          %1568 = vmatprep.mubr.bf16.mxu0 %v1011
          %1569 = vmatmul.mubr.bf16.gmra.mrb[0].mxu0 %v1010
          %v1570 = vpop.f32.mrb[0].mxu0
          %v1571 = vadd.f32 %v566, %v1570
          %v1572 = vpop.f32.mrb[0].mxu0
          %v1573 = vpop.f32.mrb[0].mxu0
          %v1574 = vadd.f32 %v566, %v1573
          %v1575 = vpop.f32.mrb[0].mxu0
          %1576 = vmatprep.mubr.bf16.mxu0 %v1013
          %1577 = vmatmul.mubr.bf16.gmra.mrb[0].mxu0 %v1012
          %v1578 = vpop.f32.mrb[0].mxu0
          %v1579 = vadd.f32 %v566, %v1578
          %v1580 = vpop.f32.mrb[0].mxu0
          %v1581 = vpop.f32.mrb[0].mxu0
          %v1582 = vadd.f32 %v566, %v1581
          %v1583 = vpop.f32.mrb[0].mxu0
          %1584 = vmatprep.mubr.bf16.mxu0 %v1015
          %1585 = vmatmul.mubr.bf16.gmra.mrb[0].mxu0 %v1014
          %v1586 = vpop.f32.mrb[0].mxu0
          %v1587 = vadd.f32 %v566, %v1586
          %v1588 = vpop.f32.mrb[0].mxu0
          %v1589 = vpop.f32.mrb[0].mxu0
          %v1590 = vadd.f32 %v566, %v1589
          %v1591 = vpop.f32.mrb[0].mxu0
          %1592 = vmatprep.mubr.bf16.mxu0 %v1017
          %1593 = vmatmul.mubr.bf16.gmra.mrb[0].mxu0 %v1016
          %v1594 = vpop.f32.mrb[0].mxu0
          %v1595 = vadd.f32 %v566, %v1594
          %v1596 = vpop.f32.mrb[0].mxu0
          %v1597 = vpop.f32.mrb[0].mxu0
          %v1598 = vadd.f32 %v566, %v1597
          %v1599 = vpop.f32.mrb[0].mxu0
          %1600 = vmatprep.mubr.bf16.mxu0 %v1019
          %1601 = vmatmul.mubr.bf16.gmra.mrb[0].mxu0 %v1018
          %v1602 = vpop.f32.mrb[0].mxu0
          %v1603 = vadd.f32 %v566, %v1602
          %v1604 = vpop.f32.mrb[0].mxu0
          %v1605 = vpop.f32.mrb[0].mxu0
          %v1606 = vadd.f32 %v566, %v1605
          %v1607 = vpop.f32.mrb[0].mxu0
          %1608 = vmatprep.mubr.bf16.mxu0 %v1021
          %1609 = vmatmul.mubr.bf16.gmra.mrb[0].mxu0 %v1020
          %v1610 = vpop.f32.mrb[0].mxu0
          %v1611 = vadd.f32 %v566, %v1610
          %v1612 = vpop.f32.mrb[0].mxu0
          %v1613 = vpop.f32.mrb[0].mxu0
          %v1614 = vadd.f32 %v566, %v1613
          %v1615 = vpop.f32.mrb[0].mxu0
          %1616 = vmatprep.mubr.bf16.mxu0 %v1023
          %1617 = vmatmul.mubr.bf16.gmra.mrb[0].mxu0 %v1022
          %v1618 = vpop.f32.mrb[0].mxu0
          %v1619 = vadd.f32 %v566, %v1618
          %v1620 = vpop.f32.mrb[0].mxu0
          %v1621 = vpop.f32.mrb[0].mxu0
          %v1622 = vadd.f32 %v566, %v1621
          %v1623 = vpop.f32.mrb[0].mxu0
          %1624 = vmatprep.mubr.bf16.mxu0 %v1025
          %1625 = vmatmul.mubr.bf16.gmra.mrb[0].mxu0 %v1024
          %v1626 = vpop.f32.mrb[0].mxu0
          %v1627 = vadd.f32 %v566, %v1626
          %v1628 = vpop.f32.mrb[0].mxu0
          %v1629 = vpop.f32.mrb[0].mxu0
          %v1630 = vadd.f32 %v566, %v1629
          %v1631 = vpop.f32.mrb[0].mxu0
          %1632 = vmatprep.mubr.bf16.mxu0 %v1027
          %1633 = vmatmul.mubr.bf16.gmra.mrb[0].mxu0 %v1026
          %v1634 = vpop.f32.mrb[0].mxu0
          %v1635 = vadd.f32 %v566, %v1634
          %v1636 = vpop.f32.mrb[0].mxu0
          %v1637 = vpop.f32.mrb[0].mxu0
          %v1638 = vadd.f32 %v566, %v1637
          %v1639 = vpop.f32.mrb[0].mxu0
          %1640 = vmatprep.mubr.bf16.mxu0 %v1029
          %1641 = vmatmul.mubr.bf16.gmra.mrb[0].mxu0 %v1028
          %v1642 = vpop.f32.mrb[0].mxu0
          %v1643 = vadd.f32 %v566, %v1642
          %v1644 = vpop.f32.mrb[0].mxu0
          %v1645 = vpop.f32.mrb[0].mxu0
          %v1646 = vadd.f32 %v566, %v1645
          %v1647 = vpop.f32.mrb[0].mxu0
          %1648 = vmatprep.mubr.bf16.mxu0 %v1031
          %1649 = vmatmul.mubr.bf16.gmra.mrb[0].mxu0 %v1030
          %v1650 = vpop.f32.mrb[0].mxu0
          %v1651 = vadd.f32 %v566, %v1650
          %v1652 = vpop.f32.mrb[0].mxu0
          %v1653 = vpop.f32.mrb[0].mxu0
          %v1654 = vadd.f32 %v566, %v1653
          %v1655 = vpop.f32.mrb[0].mxu0
          %1656 = vmatprep.mubr.bf16.mxu0 %v1033
          %1657 = vmatmul.mubr.bf16.gmra.mrb[0].mxu0 %v1032
          %v1658 = vpop.f32.mrb[0].mxu0
          %v1659 = vadd.f32 %v566, %v1658
          %v1660 = vpop.f32.mrb[0].mxu0
          %v1661 = vpop.f32.mrb[0].mxu0
          %v1662 = vadd.f32 %v566, %v1661
          %v1663 = vpop.f32.mrb[0].mxu0
          %1664 = vmatprep.mubr.bf16.mxu0 %v1035
          %1665 = vmatmul.mubr.bf16.gmra.mrb[0].mxu0 %v1034
          %v1666 = vpop.f32.mrb[0].mxu0
          %v1667 = vadd.f32 %v566, %v1666
          %v1668 = vpop.f32.mrb[0].mxu0
          %v1669 = vpop.f32.mrb[0].mxu0
          %v1670 = vadd.f32 %v566, %v1669
          %v1671 = vpop.f32.mrb[0].mxu0
          %1672 = vmatprep.mubr.bf16.mxu0 %v1037
          %1673 = vmatmul.mubr.bf16.gmra.mrb[0].mxu0 %v1036
          %v1674 = vpop.f32.mrb[0].mxu0
          %v1675 = vadd.f32 %v566, %v1674
          %v1676 = vpop.f32.mrb[0].mxu0
          %v1677 = vpop.f32.mrb[0].mxu0
          %v1678 = vadd.f32 %v566, %v1677
          %v1679 = vpop.f32.mrb[0].mxu0
          %1680 = vmatprep.mubr.bf16.mxu0 %v1039
          %1681 = vmatmul.mubr.bf16.gmra.mrb[0].mxu0 %v1038
          %v1682 = vpop.f32.mrb[0].mxu0
          %v1683 = vadd.f32 %v566, %v1682
          %v1684 = vpop.f32.mrb[0].mxu0
          %v1685 = vpop.f32.mrb[0].mxu0
          %v1686 = vadd.f32 %v566, %v1685
          %v1687 = vpop.f32.mrb[0].mxu0
          %1688 = vmatprep.mubr.bf16.mxu0 %v1041
          %1689 = vmatmul.mubr.bf16.gmra.mrb[0].mxu0 %v1040
          %v1690 = vpop.f32.mrb[0].mxu0
          %v1691 = vadd.f32 %v566, %v1690
          %v1692 = vpop.f32.mrb[0].mxu0
          %v1693 = vpop.f32.mrb[0].mxu0
          %v1694 = vadd.f32 %v566, %v1693
          %v1695 = vpop.f32.mrb[0].mxu0
          %1696 = vmatprep.mubr.bf16.mxu0 %v1043
          %1697 = vmatmul.mubr.bf16.gmra.mrb[0].mxu0 %v1042
          %v1698 = vpop.f32.mrb[0].mxu0
          %v1699 = vadd.f32 %v566, %v1698
          %v1700 = vpop.f32.mrb[0].mxu0
          %v1701 = vpop.f32.mrb[0].mxu0
          %v1702 = vadd.f32 %v566, %v1701
          %v1703 = vpop.f32.mrb[0].mxu0
          %1704 = vmatprep.mubr.bf16.mxu0 %v1045
          %1705 = vmatmul.mubr.bf16.gmra.mrb[0].mxu0 %v1044
          %v1706 = vpop.f32.mrb[0].mxu0
          %v1707 = vadd.f32 %v566, %v1706
          %v1708 = vpop.f32.mrb[0].mxu0
          %v1709 = vpop.f32.mrb[0].mxu0
          %v1710 = vadd.f32 %v566, %v1709
          %v1711 = vpop.f32.mrb[0].mxu0
          %1712 = vmatprep.mubr.bf16.mxu0 %v1047
          %1713 = vmatmul.mubr.bf16.gmra.mrb[0].mxu0 %v1046
          %v1714 = vpop.f32.mrb[0].mxu0
          %v1715 = vadd.f32 %v566, %v1714
          %v1716 = vpop.f32.mrb[0].mxu0
          %v1717 = vpop.f32.mrb[0].mxu0
          %v1718 = vadd.f32 %v566, %v1717
          %v1719 = vpop.f32.mrb[0].mxu0
          %1720 = vmatprep.mubr.bf16.mxu0 %v1049
          %1721 = vmatmul.mubr.bf16.gmra.mrb[0].mxu0 %v1048
          %v1722 = vpop.f32.mrb[0].mxu0
          %v1723 = vadd.f32 %v566, %v1722
          %v1724 = vpop.f32.mrb[0].mxu0
          %v1725 = vpop.f32.mrb[0].mxu0
          %v1726 = vadd.f32 %v566, %v1725
          %v1727 = vpop.f32.mrb[0].mxu0
          %1728 = vmatprep.mubr.bf16.mxu0 %v1051
          %1729 = vmatmul.mubr.bf16.gmra.mrb[0].mxu0 %v1050
          %v1730 = vpop.f32.mrb[0].mxu0
          %v1731 = vadd.f32 %v566, %v1730
          %v1732 = vpop.f32.mrb[0].mxu0
          %v1733 = vpop.f32.mrb[0].mxu0
          %v1734 = vadd.f32 %v566, %v1733
          %v1735 = vpop.f32.mrb[0].mxu0
          %1736 = vmatprep.mubr.bf16.mxu0 %v1053
          %1737 = vmatmul.mubr.bf16.gmra.mrb[0].mxu0 %v1052
          %v1738 = vpop.f32.mrb[0].mxu0
          %v1739 = vadd.f32 %v566, %v1738
          %v1740 = vpop.f32.mrb[0].mxu0
          %v1741 = vpop.f32.mrb[0].mxu0
          %v1742 = vadd.f32 %v566, %v1741
          %v1743 = vpop.f32.mrb[0].mxu0
          %1744 = vmatprep.mubr.bf16.mxu0 %v1055
          %1745 = vmatmul.mubr.bf16.gmra.mrb[0].mxu0 %v1054
          %v1746 = vpop.f32.mrb[0].mxu0
          %v1747 = vadd.f32 %v566, %v1746
          %v1748 = vpop.f32.mrb[0].mxu0
          %v1749 = vpop.f32.mrb[0].mxu0
          %v1750 = vadd.f32 %v566, %v1749
          %v1751 = vpop.f32.mrb[0].mxu0
          %1752 = vmatprep.mubr.bf16.mxu0 %v1057
          %1753 = vmatmul.mubr.bf16.gmra.mrb[0].mxu0 %v1056
          %v1754 = vpop.f32.mrb[0].mxu0
          %v1755 = vadd.f32 %v566, %v1754
          %v1756 = vpop.f32.mrb[0].mxu0
          %v1757 = vpop.f32.mrb[0].mxu0
          %v1758 = vadd.f32 %v566, %v1757
          %v1759 = vpop.f32.mrb[0].mxu0
          %1760 = vmatprep.mubr.bf16.mxu0 %v1059
          %1761 = vmatmul.mubr.bf16.gmra.mrb[0].mxu0 %v1058
          %v1762 = vpop.f32.mrb[0].mxu0
          %v1763 = vadd.f32 %v566, %v1762
          %v1764 = vpop.f32.mrb[0].mxu0
          %v1765 = vpop.f32.mrb[0].mxu0
          %v1766 = vadd.f32 %v566, %v1765
          %v1767 = vpop.f32.mrb[0].mxu0
          %1768 = vmatprep.mubr.bf16.mxu0 %v1061
          %1769 = vmatmul.mubr.bf16.gmra.mrb[0].mxu0 %v1060
          %v1770 = vpop.f32.mrb[0].mxu0
          %v1771 = vadd.f32 %v566, %v1770
          %v1772 = vpop.f32.mrb[0].mxu0
          %v1773 = vpop.f32.mrb[0].mxu0
          %v1774 = vadd.f32 %v566, %v1773
          %v1775 = vpop.f32.mrb[0].mxu0
          %1776 = vmatprep.mubr.bf16.mxu0 %v1063
          %1777 = vmatmul.mubr.bf16.gmra.mrb[0].mxu0 %v1062
          %v1778 = vpop.f32.mrb[0].mxu0
          %v1779 = vadd.f32 %v566, %v1778
          %v1780 = vpop.f32.mrb[0].mxu0
          %v1781 = vpop.f32.mrb[0].mxu0
          %v1782 = vadd.f32 %v566, %v1781
          %v1783 = vpop.f32.mrb[0].mxu0
          %1784 = vmatprep.mubr.bf16.mxu0 %v1065
          %1785 = vmatmul.mubr.bf16.gmra.mrb[0].mxu0 %v1064
          %v1786 = vpop.f32.mrb[0].mxu0
          %v1787 = vadd.f32 %v566, %v1786
          %v1788 = vpop.f32.mrb[0].mxu0
          %v1789 = vpop.f32.mrb[0].mxu0
          %v1790 = vadd.f32 %v566, %v1789
          %v1791 = vpop.f32.mrb[0].mxu0
          %1792 = vmatprep.mubr.bf16.mxu0 %v1067
          %1793 = vmatmul.mubr.bf16.gmra.mrb[0].mxu0 %v1066
          %v1794 = vpop.f32.mrb[0].mxu0
          %v1795 = vadd.f32 %v566, %v1794
          %v1796 = vpop.f32.mrb[0].mxu0
          %v1797 = vpop.f32.mrb[0].mxu0
          %v1798 = vadd.f32 %v566, %v1797
          %v1799 = vpop.f32.mrb[0].mxu0
          %1800 = vmatprep.mubr.bf16.mxu0 %v1069
          %1801 = vmatmul.mubr.bf16.gmra.mrb[0].mxu0 %v1068
          %v1802 = vpop.f32.mrb[0].mxu0
          %v1803 = vadd.f32 %v566, %v1802
          %v1804 = vpop.f32.mrb[0].mxu0
          %v1805 = vpop.f32.mrb[0].mxu0
          %v1806 = vadd.f32 %v566, %v1805
          %v1807 = vpop.f32.mrb[0].mxu0
          %1808 = vmatprep.mubr.bf16.mxu0 %v1071
          %1809 = vmatmul.mubr.bf16.gmra.mrb[0].mxu0 %v1070
          %v1810 = vpop.f32.mrb[0].mxu0
          %v1811 = vadd.f32 %v566, %v1810
          %v1812 = vpop.f32.mrb[0].mxu0
          %v1813 = vpop.f32.mrb[0].mxu0
          %v1814 = vadd.f32 %v566, %v1813
          %v1815 = vpop.f32.mrb[0].mxu0
          %1816 = vmatprep.mubr.bf16.mxu0 %v1073
          %1817 = vmatmul.mubr.bf16.gmra.mrb[0].mxu0 %v1072
          %v1818 = vpop.f32.mrb[0].mxu0
          %v1819 = vadd.f32 %v566, %v1818
          %v1820 = vpop.f32.mrb[0].mxu0
          %v1821 = vpop.f32.mrb[0].mxu0
          %v1822 = vadd.f32 %v566, %v1821
          %v1823 = vpop.f32.mrb[0].mxu0
          %1824 = vmatprep.mubr.bf16.mxu0 %v1075
          %1825 = vmatmul.mubr.bf16.gmra.mrb[0].mxu0 %v1074
          %v1826 = vpop.f32.mrb[0].mxu0
          %v1827 = vadd.f32 %v566, %v1826
          %v1828 = vpop.f32.mrb[0].mxu0
          %v1829 = vpop.f32.mrb[0].mxu0
          %v1830 = vadd.f32 %v566, %v1829
          %v1831 = vpop.f32.mrb[0].mxu0
          %1832 = vmatprep.mubr.bf16.mxu0 %v1077
          %1833 = vmatmul.mubr.bf16.gmra.mrb[0].mxu0 %v1076
          %v1834 = vpop.f32.mrb[0].mxu0
          %v1835 = vadd.f32 %v566, %v1834
          %v1836 = vpop.f32.mrb[0].mxu0
          %v1837 = vpop.f32.mrb[0].mxu0
          %v1838 = vadd.f32 %v566, %v1837
          %v1839 = vpop.f32.mrb[0].mxu0
          %1840 = vmatprep.mubr.bf16.mxu0 %v1079
          %1841 = vmatmul.mubr.bf16.gmra.mrb[0].mxu0 %v1078
          %v1842 = vpop.f32.mrb[0].mxu0
          %v1843 = vadd.f32 %v566, %v1842
          %v1844 = vpop.f32.mrb[0].mxu0
          %v1845 = vpop.f32.mrb[0].mxu0
          %v1846 = vadd.f32 %v566, %v1845
          %v1847 = vpop.f32.mrb[0].mxu0
          %1848 = vdwg.mxu0
          %p1849 = scmp.eq.s32.totalorder %s30, 0
          // Predicated region
          $region61: #{tpu_custom_call.1} parent=59 // pred_check
            %p1850 = pneg %p1849
          $region62: #{tpu_custom_call.1} parent=59 // pred_check_branch
            %1852 = sbr.rel (%p1850) target = $region64
          $region63: #{tpu_custom_call.1} parent=59 // pred_region
            %1853 = vst [vmem:[#allocation3] sm:$0x1] 0.0
            %1854 = vst [vmem:[#allocation4] sm:$0x1] 0.0
          $region64: #{tpu_custom_call.1} parent=59 // pred_fallthru
            _
          %v1855 = vld [vmem:[#allocation3] sm:$0x1]
          %v1856 = vadd.f32 %v1339, %v1342
          %v1857 = vadd.f32 %v1856, %v1347
          %v1858 = vadd.f32 %v1857, %v1350
          %v1859 = vadd.f32 %v1858, %v1355
          %v1860 = vadd.f32 %v1859, %v1358
          %v1861 = vadd.f32 %v1860, %v1363
          %v1862 = vadd.f32 %v1861, %v1366
          %v1863 = vadd.f32 %v1862, %v1371
          %v1864 = vadd.f32 %v1863, %v1374
          %v1865 = vadd.f32 %v1864, %v1379
          %v1866 = vadd.f32 %v1865, %v1382
          %v1867 = vadd.f32 %v1866, %v1387
          %v1868 = vadd.f32 %v1867, %v1390
          %v1869 = vadd.f32 %v1868, %v1395
          %v1870 = vadd.f32 %v1869, %v1398
          %v1871 = vadd.f32 %v1870, %v1403
          %v1872 = vadd.f32 %v1871, %v1406
          %v1873 = vadd.f32 %v1872, %v1411
          %v1874 = vadd.f32 %v1873, %v1414
          %v1875 = vadd.f32 %v1874, %v1419
          %v1876 = vadd.f32 %v1875, %v1422
          %v1877 = vadd.f32 %v1876, %v1427
          %v1878 = vadd.f32 %v1877, %v1430
          %v1879 = vadd.f32 %v1878, %v1435
          %v1880 = vadd.f32 %v1879, %v1438
          %v1881 = vadd.f32 %v1880, %v1443
          %v1882 = vadd.f32 %v1881, %v1446
          %v1883 = vadd.f32 %v1882, %v1451
          %v1884 = vadd.f32 %v1883, %v1454
          %v1885 = vadd.f32 %v1884, %v1459
          %v1886 = vadd.f32 %v1885, %v1462
          %v1887 = vadd.f32 %v1886, %v1467
          %v1888 = vadd.f32 %v1887, %v1470
          %v1889 = vadd.f32 %v1888, %v1475
          %v1890 = vadd.f32 %v1889, %v1478
          %v1891 = vadd.f32 %v1890, %v1483
          %v1892 = vadd.f32 %v1891, %v1486
          %v1893 = vadd.f32 %v1892, %v1491
          %v1894 = vadd.f32 %v1893, %v1494
          %v1895 = vadd.f32 %v1894, %v1499
          %v1896 = vadd.f32 %v1895, %v1502
          %v1897 = vadd.f32 %v1896, %v1507
          %v1898 = vadd.f32 %v1897, %v1510
          %v1899 = vadd.f32 %v1898, %v1515
          %v1900 = vadd.f32 %v1899, %v1518
          %v1901 = vadd.f32 %v1900, %v1523
          %v1902 = vadd.f32 %v1901, %v1526
          %v1903 = vadd.f32 %v1902, %v1531
          %v1904 = vadd.f32 %v1903, %v1534
          %v1905 = vadd.f32 %v1904, %v1539
          %v1906 = vadd.f32 %v1905, %v1542
          %v1907 = vadd.f32 %v1906, %v1547
          %v1908 = vadd.f32 %v1907, %v1550
          %v1909 = vadd.f32 %v1908, %v1555
          %v1910 = vadd.f32 %v1909, %v1558
          %v1911 = vadd.f32 %v1910, %v1563
          %v1912 = vadd.f32 %v1911, %v1566
          %v1913 = vadd.f32 %v1912, %v1571
          %v1914 = vadd.f32 %v1913, %v1574
          %v1915 = vadd.f32 %v1914, %v1579
          %v1916 = vadd.f32 %v1915, %v1582
          %v1917 = vadd.f32 %v1916, %v1587
          %v1918 = vadd.f32 %v1917, %v1590
          %v1919 = vadd.f32 %v1918, %v1595
          %v1920 = vadd.f32 %v1919, %v1598
          %v1921 = vadd.f32 %v1920, %v1603
          %v1922 = vadd.f32 %v1921, %v1606
          %v1923 = vadd.f32 %v1922, %v1611
          %v1924 = vadd.f32 %v1923, %v1614
          %v1925 = vadd.f32 %v1924, %v1619
          %v1926 = vadd.f32 %v1925, %v1622
          %v1927 = vadd.f32 %v1926, %v1627
          %v1928 = vadd.f32 %v1927, %v1630
          %v1929 = vadd.f32 %v1928, %v1635
          %v1930 = vadd.f32 %v1929, %v1638
          %v1931 = vadd.f32 %v1930, %v1643
          %v1932 = vadd.f32 %v1931, %v1646
          %v1933 = vadd.f32 %v1932, %v1651
          %v1934 = vadd.f32 %v1933, %v1654
          %v1935 = vadd.f32 %v1934, %v1659
          %v1936 = vadd.f32 %v1935, %v1662
          %v1937 = vadd.f32 %v1936, %v1667
          %v1938 = vadd.f32 %v1937, %v1670
          %v1939 = vadd.f32 %v1938, %v1675
          %v1940 = vadd.f32 %v1939, %v1678
          %v1941 = vadd.f32 %v1940, %v1683
          %v1942 = vadd.f32 %v1941, %v1686
          %v1943 = vadd.f32 %v1942, %v1691
          %v1944 = vadd.f32 %v1943, %v1694
          %v1945 = vadd.f32 %v1944, %v1699
          %v1946 = vadd.f32 %v1945, %v1702
          %v1947 = vadd.f32 %v1946, %v1707
          %v1948 = vadd.f32 %v1947, %v1710
          %v1949 = vadd.f32 %v1948, %v1715
          %v1950 = vadd.f32 %v1949, %v1718
          %v1951 = vadd.f32 %v1950, %v1723
          %v1952 = vadd.f32 %v1951, %v1726
          %v1953 = vadd.f32 %v1952, %v1731
          %v1954 = vadd.f32 %v1953, %v1734
          %v1955 = vadd.f32 %v1954, %v1739
          %v1956 = vadd.f32 %v1955, %v1742
          %v1957 = vadd.f32 %v1956, %v1747
          %v1958 = vadd.f32 %v1957, %v1750
          %v1959 = vadd.f32 %v1958, %v1755
          %v1960 = vadd.f32 %v1959, %v1758
          %v1961 = vadd.f32 %v1960, %v1763
          %v1962 = vadd.f32 %v1961, %v1766
          %v1963 = vadd.f32 %v1962, %v1771
          %v1964 = vadd.f32 %v1963, %v1774
          %v1965 = vadd.f32 %v1964, %v1779
          %v1966 = vadd.f32 %v1965, %v1782
          %v1967 = vadd.f32 %v1966, %v1787
          %v1968 = vadd.f32 %v1967, %v1790
          %v1969 = vadd.f32 %v1968, %v1795
          %v1970 = vadd.f32 %v1969, %v1798
          %v1971 = vadd.f32 %v1970, %v1803
          %v1972 = vadd.f32 %v1971, %v1806
          %v1973 = vadd.f32 %v1972, %v1811
          %v1974 = vadd.f32 %v1973, %v1814
          %v1975 = vadd.f32 %v1974, %v1819
          %v1976 = vadd.f32 %v1975, %v1822
          %v1977 = vadd.f32 %v1976, %v1827
          %v1978 = vadd.f32 %v1977, %v1830
          %v1979 = vadd.f32 %v1978, %v1835
          %v1980 = vadd.f32 %v1979, %v1838
          %v1981 = vadd.f32 %v1980, %v1843
          %v1982 = vadd.f32 %v1981, %v1846
          %v1983 = vrot.slane %v1982, 4
          %v1984 = vadd.f32 %v1982, %v1983
          %v1985 = vrot.slane %v1984, 2
          %v1986 = vadd.f32 %v1984, %v1985
          %v1987 = vrot.slane %v1986, 1
          %v1988 = vadd.f32 %v1986, %v1987
          %v1989 = vadd.f32 %v1855, %v1988
          %1990 = vst [vmem:[#allocation3] sm:$0x1] %v1989
          %v1991 = vld [vmem:[#allocation4] sm:$0x1]
          %v1992 = vmul.f32 %v1339, %v1339
          %v1993 = vmul.f32 %v1342, %v1342
          %v1994 = vmul.f32 %v1347, %v1347
          %v1995 = vmul.f32 %v1350, %v1350
          %v1996 = vmul.f32 %v1355, %v1355
          %v1997 = vmul.f32 %v1358, %v1358
          %v1998 = vmul.f32 %v1363, %v1363
          %v1999 = vmul.f32 %v1366, %v1366
          %v2000 = vmul.f32 %v1371, %v1371
          %v2001 = vmul.f32 %v1374, %v1374
          %v2002 = vmul.f32 %v1379, %v1379
          %v2003 = vmul.f32 %v1382, %v1382
          %v2004 = vmul.f32 %v1387, %v1387
          %v2005 = vmul.f32 %v1390, %v1390
          %v2006 = vmul.f32 %v1395, %v1395
          %v2007 = vmul.f32 %v1398, %v1398
          %v2008 = vmul.f32 %v1403, %v1403
          %v2009 = vmul.f32 %v1406, %v1406
          %v2010 = vmul.f32 %v1411, %v1411
          %v2011 = vmul.f32 %v1414, %v1414
          %v2012 = vmul.f32 %v1419, %v1419
          %v2013 = vmul.f32 %v1422, %v1422
          %v2014 = vmul.f32 %v1427, %v1427
          %v2015 = vmul.f32 %v1430, %v1430
          %v2016 = vmul.f32 %v1435, %v1435
          %v2017 = vmul.f32 %v1438, %v1438
          %v2018 = vmul.f32 %v1443, %v1443
          %v2019 = vmul.f32 %v1446, %v1446
          %v2020 = vmul.f32 %v1451, %v1451
          %v2021 = vmul.f32 %v1454, %v1454
          %v2022 = vmul.f32 %v1459, %v1459
          %v2023 = vmul.f32 %v1462, %v1462
          %v2024 = vmul.f32 %v1467, %v1467
          %v2025 = vmul.f32 %v1470, %v1470
          %v2026 = vmul.f32 %v1475, %v1475
          %v2027 = vmul.f32 %v1478, %v1478
          %v2028 = vmul.f32 %v1483, %v1483
          %v2029 = vmul.f32 %v1486, %v1486
          %v2030 = vmul.f32 %v1491, %v1491
          %v2031 = vmul.f32 %v1494, %v1494
          %v2032 = vmul.f32 %v1499, %v1499
          %v2033 = vmul.f32 %v1502, %v1502
          %v2034 = vmul.f32 %v1507, %v1507
          %v2035 = vmul.f32 %v1510, %v1510
          %v2036 = vmul.f32 %v1515, %v1515
          %v2037 = vmul.f32 %v1518, %v1518
          %v2038 = vmul.f32 %v1523, %v1523
          %v2039 = vmul.f32 %v1526, %v1526
          %v2040 = vmul.f32 %v1531, %v1531
          %v2041 = vmul.f32 %v1534, %v1534
          %v2042 = vmul.f32 %v1539, %v1539
          %v2043 = vmul.f32 %v1542, %v1542
          %v2044 = vmul.f32 %v1547, %v1547
          %v2045 = vmul.f32 %v1550, %v1550
          %v2046 = vmul.f32 %v1555, %v1555
          %v2047 = vmul.f32 %v1558, %v1558
          %v2048 = vmul.f32 %v1563, %v1563
          %v2049 = vmul.f32 %v1566, %v1566
          %v2050 = vmul.f32 %v1571, %v1571
          %v2051 = vmul.f32 %v1574, %v1574
          %v2052 = vmul.f32 %v1579, %v1579
          %v2053 = vmul.f32 %v1582, %v1582
          %v2054 = vmul.f32 %v1587, %v1587
          %v2055 = vmul.f32 %v1590, %v1590
          %v2056 = vmul.f32 %v1595, %v1595
          %v2057 = vmul.f32 %v1598, %v1598
          %v2058 = vmul.f32 %v1603, %v1603
          %v2059 = vmul.f32 %v1606, %v1606
          %v2060 = vmul.f32 %v1611, %v1611
          %v2061 = vmul.f32 %v1614, %v1614
          %v2062 = vmul.f32 %v1619, %v1619
          %v2063 = vmul.f32 %v1622, %v1622
          %v2064 = vmul.f32 %v1627, %v1627
          %v2065 = vmul.f32 %v1630, %v1630
          %v2066 = vmul.f32 %v1635, %v1635
          %v2067 = vmul.f32 %v1638, %v1638
          %v2068 = vmul.f32 %v1643, %v1643
          %v2069 = vmul.f32 %v1646, %v1646
          %v2070 = vmul.f32 %v1651, %v1651
          %v2071 = vmul.f32 %v1654, %v1654
          %v2072 = vmul.f32 %v1659, %v1659
          %v2073 = vmul.f32 %v1662, %v1662
          %v2074 = vmul.f32 %v1667, %v1667
          %v2075 = vmul.f32 %v1670, %v1670
          %v2076 = vmul.f32 %v1675, %v1675
          %v2077 = vmul.f32 %v1678, %v1678
          %v2078 = vmul.f32 %v1683, %v1683
          %v2079 = vmul.f32 %v1686, %v1686
          %v2080 = vmul.f32 %v1691, %v1691
          %v2081 = vmul.f32 %v1694, %v1694
          %v2082 = vmul.f32 %v1699, %v1699
          %v2083 = vmul.f32 %v1702, %v1702
          %v2084 = vmul.f32 %v1707, %v1707
          %v2085 = vmul.f32 %v1710, %v1710
          %v2086 = vmul.f32 %v1715, %v1715
          %v2087 = vmul.f32 %v1718, %v1718
          %v2088 = vmul.f32 %v1723, %v1723
          %v2089 = vmul.f32 %v1726, %v1726
          %v2090 = vmul.f32 %v1731, %v1731
          %v2091 = vmul.f32 %v1734, %v1734
          %v2092 = vmul.f32 %v1739, %v1739
          %v2093 = vmul.f32 %v1742, %v1742
          %v2094 = vmul.f32 %v1747, %v1747
          %v2095 = vmul.f32 %v1750, %v1750
          %v2096 = vmul.f32 %v1755, %v1755
          %v2097 = vmul.f32 %v1758, %v1758
          %v2098 = vmul.f32 %v1763, %v1763
          %v2099 = vmul.f32 %v1766, %v1766
          %v2100 = vmul.f32 %v1771, %v1771
          %v2101 = vmul.f32 %v1774, %v1774
          %v2102 = vmul.f32 %v1779, %v1779
          %v2103 = vmul.f32 %v1782, %v1782
          %v2104 = vmul.f32 %v1787, %v1787
          %v2105 = vmul.f32 %v1790, %v1790
          %v2106 = vmul.f32 %v1795, %v1795
          %v2107 = vmul.f32 %v1798, %v1798
          %v2108 = vmul.f32 %v1803, %v1803
          %v2109 = vmul.f32 %v1806, %v1806
          %v2110 = vmul.f32 %v1811, %v1811
          %v2111 = vmul.f32 %v1814, %v1814
          %v2112 = vmul.f32 %v1819, %v1819
          %v2113 = vmul.f32 %v1822, %v1822
          %v2114 = vmul.f32 %v1827, %v1827
          %v2115 = vmul.f32 %v1830, %v1830
          %v2116 = vmul.f32 %v1835, %v1835
          %v2117 = vmul.f32 %v1838, %v1838
          %v2118 = vmul.f32 %v1843, %v1843
          %v2119 = vmul.f32 %v1846, %v1846
          %v2120 = vadd.f32 %v1992, %v1993
          %v2121 = vadd.f32 %v2120, %v1994
          %v2122 = vadd.f32 %v2121, %v1995
          %v2123 = vadd.f32 %v2122, %v1996
          %v2124 = vadd.f32 %v2123, %v1997
          %v2125 = vadd.f32 %v2124, %v1998
          %v2126 = vadd.f32 %v2125, %v1999
          %v2127 = vadd.f32 %v2126, %v2000
          %v2128 = vadd.f32 %v2127, %v2001
          %v2129 = vadd.f32 %v2128, %v2002
          %v2130 = vadd.f32 %v2129, %v2003
          %v2131 = vadd.f32 %v2130, %v2004
          %v2132 = vadd.f32 %v2131, %v2005
          %v2133 = vadd.f32 %v2132, %v2006
          %v2134 = vadd.f32 %v2133, %v2007
          %v2135 = vadd.f32 %v2134, %v2008
          %v2136 = vadd.f32 %v2135, %v2009
          %v2137 = vadd.f32 %v2136, %v2010
          %v2138 = vadd.f32 %v2137, %v2011
          %v2139 = vadd.f32 %v2138, %v2012
          %v2140 = vadd.f32 %v2139, %v2013
          %v2141 = vadd.f32 %v2140, %v2014
          %v2142 = vadd.f32 %v2141, %v2015
          %v2143 = vadd.f32 %v2142, %v2016
          %v2144 = vadd.f32 %v2143, %v2017
          %v2145 = vadd.f32 %v2144, %v2018
          %v2146 = vadd.f32 %v2145, %v2019
          %v2147 = vadd.f32 %v2146, %v2020
          %v2148 = vadd.f32 %v2147, %v2021
          %v2149 = vadd.f32 %v2148, %v2022
          %v2150 = vadd.f32 %v2149, %v2023
          %v2151 = vadd.f32 %v2150, %v2024
          %v2152 = vadd.f32 %v2151, %v2025
          %v2153 = vadd.f32 %v2152, %v2026
          %v2154 = vadd.f32 %v2153, %v2027
          %v2155 = vadd.f32 %v2154, %v2028
          %v2156 = vadd.f32 %v2155, %v2029
          %v2157 = vadd.f32 %v2156, %v2030
          %v2158 = vadd.f32 %v2157, %v2031
          %v2159 = vadd.f32 %v2158, %v2032
          %v2160 = vadd.f32 %v2159, %v2033
          %v2161 = vadd.f32 %v2160, %v2034
          %v2162 = vadd.f32 %v2161, %v2035
          %v2163 = vadd.f32 %v2162, %v2036
          %v2164 = vadd.f32 %v2163, %v2037
          %v2165 = vadd.f32 %v2164, %v2038
          %v2166 = vadd.f32 %v2165, %v2039
          %v2167 = vadd.f32 %v2166, %v2040
          %v2168 = vadd.f32 %v2167, %v2041
          %v2169 = vadd.f32 %v2168, %v2042
          %v2170 = vadd.f32 %v2169, %v2043
          %v2171 = vadd.f32 %v2170, %v2044
          %v2172 = vadd.f32 %v2171, %v2045
          %v2173 = vadd.f32 %v2172, %v2046
          %v2174 = vadd.f32 %v2173, %v2047
          %v2175 = vadd.f32 %v2174, %v2048
          %v2176 = vadd.f32 %v2175, %v2049
          %v2177 = vadd.f32 %v2176, %v2050
          %v2178 = vadd.f32 %v2177, %v2051
          %v2179 = vadd.f32 %v2178, %v2052
          %v2180 = vadd.f32 %v2179, %v2053
          %v2181 = vadd.f32 %v2180, %v2054
          %v2182 = vadd.f32 %v2181, %v2055
          %v2183 = vadd.f32 %v2182, %v2056
          %v2184 = vadd.f32 %v2183, %v2057
          %v2185 = vadd.f32 %v2184, %v2058
          %v2186 = vadd.f32 %v2185, %v2059
          %v2187 = vadd.f32 %v2186, %v2060
          %v2188 = vadd.f32 %v2187, %v2061
          %v2189 = vadd.f32 %v2188, %v2062
          %v2190 = vadd.f32 %v2189, %v2063
          %v2191 = vadd.f32 %v2190, %v2064
          %v2192 = vadd.f32 %v2191, %v2065
          %v2193 = vadd.f32 %v2192, %v2066
          %v2194 = vadd.f32 %v2193, %v2067
          %v2195 = vadd.f32 %v2194, %v2068
          %v2196 = vadd.f32 %v2195, %v2069
          %v2197 = vadd.f32 %v2196, %v2070
          %v2198 = vadd.f32 %v2197, %v2071
          %v2199 = vadd.f32 %v2198, %v2072
          %v2200 = vadd.f32 %v2199, %v2073
          %v2201 = vadd.f32 %v2200, %v2074
          %v2202 = vadd.f32 %v2201, %v2075
          %v2203 = vadd.f32 %v2202, %v2076
          %v2204 = vadd.f32 %v2203, %v2077
          %v2205 = vadd.f32 %v2204, %v2078
          %v2206 = vadd.f32 %v2205, %v2079
          %v2207 = vadd.f32 %v2206, %v2080
          %v2208 = vadd.f32 %v2207, %v2081
          %v2209 = vadd.f32 %v2208, %v2082
          %v2210 = vadd.f32 %v2209, %v2083
          %v2211 = vadd.f32 %v2210, %v2084
          %v2212 = vadd.f32 %v2211, %v2085
          %v2213 = vadd.f32 %v2212, %v2086
          %v2214 = vadd.f32 %v2213, %v2087
          %v2215 = vadd.f32 %v2214, %v2088
          %v2216 = vadd.f32 %v2215, %v2089
          %v2217 = vadd.f32 %v2216, %v2090
          %v2218 = vadd.f32 %v2217, %v2091
          %v2219 = vadd.f32 %v2218, %v2092
          %v2220 = vadd.f32 %v2219, %v2093
          %v2221 = vadd.f32 %v2220, %v2094
          %v2222 = vadd.f32 %v2221, %v2095
          %v2223 = vadd.f32 %v2222, %v2096
          %v2224 = vadd.f32 %v2223, %v2097
          %v2225 = vadd.f32 %v2224, %v2098
          %v2226 = vadd.f32 %v2225, %v2099
          %v2227 = vadd.f32 %v2226, %v2100
          %v2228 = vadd.f32 %v2227, %v2101
          %v2229 = vadd.f32 %v2228, %v2102
          %v2230 = vadd.f32 %v2229, %v2103
          %v2231 = vadd.f32 %v2230, %v2104
          %v2232 = vadd.f32 %v2231, %v2105
          %v2233 = vadd.f32 %v2232, %v2106
          %v2234 = vadd.f32 %v2233, %v2107
          %v2235 = vadd.f32 %v2234, %v2108
          %v2236 = vadd.f32 %v2235, %v2109
          %v2237 = vadd.f32 %v2236, %v2110
          %v2238 = vadd.f32 %v2237, %v2111
          %v2239 = vadd.f32 %v2238, %v2112
          %v2240 = vadd.f32 %v2239, %v2113
          %v2241 = vadd.f32 %v2240, %v2114
          %v2242 = vadd.f32 %v2241, %v2115
          %v2243 = vadd.f32 %v2242, %v2116
          %v2244 = vadd.f32 %v2243, %v2117
          %v2245 = vadd.f32 %v2244, %v2118
          %v2246 = vadd.f32 %v2245, %v2119
          %v2247 = vrot.slane %v2246, 4
          %v2248 = vadd.f32 %v2246, %v2247
          %v2249 = vrot.slane %v2248, 2
          %v2250 = vadd.f32 %v2248, %v2249
          %v2251 = vrot.slane %v2250, 1
          %v2252 = vadd.f32 %v2250, %v2251
          %v2253 = vadd.f32 %v1991, %v2252
          %2254 = vst [vmem:[#allocation4] sm:$0x1] %v2253
          %v2255 = vpack.c.bf16 %v1342, %v1339
          %v2256 = vpack.c.bf16 %v1350, %v1347
          %v2257 = vpack.c.bf16 %v1358, %v1355
          %v2258 = vpack.c.bf16 %v1366, %v1363
          %v2259 = vpack.c.bf16 %v1374, %v1371
          %v2260 = vpack.c.bf16 %v1382, %v1379
          %v2261 = vpack.c.bf16 %v1390, %v1387
          %v2262 = vpack.c.bf16 %v1398, %v1395
          %v2263 = vpack.c.bf16 %v1406, %v1403
          %v2264 = vpack.c.bf16 %v1414, %v1411
          %v2265 = vpack.c.bf16 %v1422, %v1419
          %v2266 = vpack.c.bf16 %v1430, %v1427
          %v2267 = vpack.c.bf16 %v1438, %v1435
          %v2268 = vpack.c.bf16 %v1446, %v1443
          %v2269 = vpack.c.bf16 %v1454, %v1451
          %v2270 = vpack.c.bf16 %v1462, %v1459
          %v2271 = vpack.c.bf16 %v1470, %v1467
          %v2272 = vpack.c.bf16 %v1478, %v1475
          %v2273 = vpack.c.bf16 %v1486, %v1483
          %v2274 = vpack.c.bf16 %v1494, %v1491
          %v2275 = vpack.c.bf16 %v1502, %v1499
          %v2276 = vpack.c.bf16 %v1510, %v1507
          %v2277 = vpack.c.bf16 %v1518, %v1515
          %v2278 = vpack.c.bf16 %v1526, %v1523
          %v2279 = vpack.c.bf16 %v1534, %v1531
          %v2280 = vpack.c.bf16 %v1542, %v1539
          %v2281 = vpack.c.bf16 %v1550, %v1547
          %v2282 = vpack.c.bf16 %v1558, %v1555
          %v2283 = vpack.c.bf16 %v1566, %v1563
          %v2284 = vpack.c.bf16 %v1574, %v1571
          %v2285 = vpack.c.bf16 %v1582, %v1579
          %v2286 = vpack.c.bf16 %v1590, %v1587
          %v2287 = vpack.c.bf16 %v1598, %v1595
          %v2288 = vpack.c.bf16 %v1606, %v1603
          %v2289 = vpack.c.bf16 %v1614, %v1611
          %v2290 = vpack.c.bf16 %v1622, %v1619
          %v2291 = vpack.c.bf16 %v1630, %v1627
          %v2292 = vpack.c.bf16 %v1638, %v1635
          %v2293 = vpack.c.bf16 %v1646, %v1643
          %v2294 = vpack.c.bf16 %v1654, %v1651
          %v2295 = vpack.c.bf16 %v1662, %v1659
          %v2296 = vpack.c.bf16 %v1670, %v1667
          %v2297 = vpack.c.bf16 %v1678, %v1675
          %v2298 = vpack.c.bf16 %v1686, %v1683
          %v2299 = vpack.c.bf16 %v1694, %v1691
          %v2300 = vpack.c.bf16 %v1702, %v1699
          %v2301 = vpack.c.bf16 %v1710, %v1707
          %v2302 = vpack.c.bf16 %v1718, %v1715
          %v2303 = vpack.c.bf16 %v1726, %v1723
          %v2304 = vpack.c.bf16 %v1734, %v1731
          %v2305 = vpack.c.bf16 %v1742, %v1739
          %v2306 = vpack.c.bf16 %v1750, %v1747
          %v2307 = vpack.c.bf16 %v1758, %v1755
          %v2308 = vpack.c.bf16 %v1766, %v1763
          %v2309 = vpack.c.bf16 %v1774, %v1771
          %v2310 = vpack.c.bf16 %v1782, %v1779
          %v2311 = vpack.c.bf16 %v1790, %v1787
          %v2312 = vpack.c.bf16 %v1798, %v1795
          %v2313 = vpack.c.bf16 %v1806, %v1803
          %v2314 = vpack.c.bf16 %v1814, %v1811
          %v2315 = vpack.c.bf16 %v1822, %v1819
          %v2316 = vpack.c.bf16 %v1830, %v1827
          %v2317 = vpack.c.bf16 %v1838, %v1835
          %v2318 = vpack.c.bf16 %v1846, %v1843
          %s2319 = smul.u32 %s30, 64
          %s2320 = smul.addr %s2319, 8
          %s2321 = scalar_lea.vmem [#allocation2], %s2320
          %2322 = vst [vmem:[%s2321] sm:$0xff] %v2255
          %2323 = vst [vmem:[%s2321 + $0x8] sm:$0xff] %v2256
          %2324 = vst [vmem:[%s2321 + $0x10] sm:$0xff] %v2257
          %2325 = vst [vmem:[%s2321 + $0x18] sm:$0xff] %v2258
          %2326 = vst [vmem:[%s2321 + $0x20] sm:$0xff] %v2259
          %2327 = vst [vmem:[%s2321 + $0x28] sm:$0xff] %v2260
          %2328 = vst [vmem:[%s2321 + $0x30] sm:$0xff] %v2261
          %2329 = vst [vmem:[%s2321 + $0x38] sm:$0xff] %v2262
          %2330 = vst [vmem:[%s2321 + $0x40] sm:$0xff] %v2263
          %2331 = vst [vmem:[%s2321 + $0x48] sm:$0xff] %v2264
          %2332 = vst [vmem:[%s2321 + $0x50] sm:$0xff] %v2265
          %2333 = vst [vmem:[%s2321 + $0x58] sm:$0xff] %v2266
          %2334 = vst [vmem:[%s2321 + $0x60] sm:$0xff] %v2267
          %2335 = vst [vmem:[%s2321 + $0x68] sm:$0xff] %v2268
          %2336 = vst [vmem:[%s2321 + $0x70] sm:$0xff] %v2269
          %2337 = vst [vmem:[%s2321 + $0x78] sm:$0xff] %v2270
          %2338 = vst [vmem:[%s2321 + $0x80] sm:$0xff] %v2271
          %2339 = vst [vmem:[%s2321 + $0x88] sm:$0xff] %v2272
          %2340 = vst [vmem:[%s2321 + $0x90] sm:$0xff] %v2273
          %2341 = vst [vmem:[%s2321 + $0x98] sm:$0xff] %v2274
          %2342 = vst [vmem:[%s2321 + $0xa0] sm:$0xff] %v2275
          %2343 = vst [vmem:[%s2321 + $0xa8] sm:$0xff] %v2276
          %2344 = vst [vmem:[%s2321 + $0xb0] sm:$0xff] %v2277
          %2345 = vst [vmem:[%s2321 + $0xb8] sm:$0xff] %v2278
          %2346 = vst [vmem:[%s2321 + $0xc0] sm:$0xff] %v2279
          %2347 = vst [vmem:[%s2321 + $0xc8] sm:$0xff] %v2280
          %2348 = vst [vmem:[%s2321 + $0xd0] sm:$0xff] %v2281
          %2349 = vst [vmem:[%s2321 + $0xd8] sm:$0xff] %v2282
          %2350 = vst [vmem:[%s2321 + $0xe0] sm:$0xff] %v2283
          %2351 = vst [vmem:[%s2321 + $0xe8] sm:$0xff] %v2284
          %2352 = vst [vmem:[%s2321 + $0xf0] sm:$0xff] %v2285
          %2353 = vst [vmem:[%s2321 + $0xf8] sm:$0xff] %v2286
          %2354 = vst [vmem:[%s2321 + $0x100] sm:$0xff] %v2287
          %2355 = vst [vmem:[%s2321 + $0x108] sm:$0xff] %v2288
          %2356 = vst [vmem:[%s2321 + $0x110] sm:$0xff] %v2289
          %2357 = vst [vmem:[%s2321 + $0x118] sm:$0xff] %v2290
          %2358 = vst [vmem:[%s2321 + $0x120] sm:$0xff] %v2291
          %2359 = vst [vmem:[%s2321 + $0x128] sm:$0xff] %v2292
          %2360 = vst [vmem:[%s2321 + $0x130] sm:$0xff] %v2293
          %2361 = vst [vmem:[%s2321 + $0x138] sm:$0xff] %v2294
          %2362 = vst [vmem:[%s2321 + $0x140] sm:$0xff] %v2295
          %2363 = vst [vmem:[%s2321 + $0x148] sm:$0xff] %v2296
          %2364 = vst [vmem:[%s2321 + $0x150] sm:$0xff] %v2297
          %2365 = vst [vmem:[%s2321 + $0x158] sm:$0xff] %v2298
          %2366 = vst [vmem:[%s2321 + $0x160] sm:$0xff] %v2299
          %2367 = vst [vmem:[%s2321 + $0x168] sm:$0xff] %v2300
          %2368 = vst [vmem:[%s2321 + $0x170] sm:$0xff] %v2301
          %2369 = vst [vmem:[%s2321 + $0x178] sm:$0xff] %v2302
          %2370 = vst [vmem:[%s2321 + $0x180] sm:$0xff] %v2303
          %2371 = vst [vmem:[%s2321 + $0x188] sm:$0xff] %v2304
          %2372 = vst [vmem:[%s2321 + $0x190] sm:$0xff] %v2305
          %2373 = vst [vmem:[%s2321 + $0x198] sm:$0xff] %v2306
          %2374 = vst [vmem:[%s2321 + $0x1a0] sm:$0xff] %v2307
          %2375 = vst [vmem:[%s2321 + $0x1a8] sm:$0xff] %v2308
          %2376 = vst [vmem:[%s2321 + $0x1b0] sm:$0xff] %v2309
          %2377 = vst [vmem:[%s2321 + $0x1b8] sm:$0xff] %v2310
          %2378 = vst [vmem:[%s2321 + $0x1c0] sm:$0xff] %v2311
          %2379 = vst [vmem:[%s2321 + $0x1c8] sm:$0xff] %v2312
          %2380 = vst [vmem:[%s2321 + $0x1d0] sm:$0xff] %v2313
          %2381 = vst [vmem:[%s2321 + $0x1d8] sm:$0xff] %v2314
          %2382 = vst [vmem:[%s2321 + $0x1e0] sm:$0xff] %v2315
          %2383 = vst [vmem:[%s2321 + $0x1e8] sm:$0xff] %v2316
          %2384 = vst [vmem:[%s2321 + $0x1f0] sm:$0xff] %v2317
          %2385 = vst [vmem:[%s2321 + $0x1f8] sm:$0xff] %v2318
        $region60: #{tpu_custom_call.1} parent=47 // pred_fallthru
          _
        %p2386 = scmp.eq.s32.totalorder %s29, 1
        // Predicated region
        $region65: #{tpu_custom_call.1} parent=47 // pred_check
          %p2387 = pneg %p2386
        $region66: #{tpu_custom_call.1} parent=47 // pred_check_branch
          %2389 = sbr.rel (%p2387) target = $region68
        $region67: #{tpu_custom_call.1} parent=47 // pred_region
          %p2390 = scmp.eq.s32.totalorder %s30, 0
          // Predicated region
          $region69: #{tpu_custom_call.1} parent=67 // pred_check
            %p2391 = pneg %p2390
          $region70: #{tpu_custom_call.1} parent=67 // pred_check_branch
            %2393 = sbr.rel (%p2391) target = $region72
          $region71: #{tpu_custom_call.1} parent=67 // pred_region
            %v2394 = vld [vmem:[#allocation3] sm:$0x1]
            %v2395 = vmul.f32 %v2394, 0.0009765625
            %v2396 = vld [vmem:[#allocation4] sm:$0x1]
            %v2397 = vmul.f32 %v2396, 0.0009765625
            %v2398 = vmul.f32 %v2395, %v2395
            %v2399 = vsub.f32 %v2397, %v2398
            %v2400 = vld [vmem:[%s3] sm:$0x1]
            %v2401 = vadd.f32 %v2399, 1e-05
            %v2402 = vrsqrt.pop %v2401
            %v2403 = vmul.f32 %v2400, %v2402
            %2404 = vst [vmem:[#allocation5] sm:$0x1] %v2403
            %v2405 = vld [vmem:[%s4] sm:$0x1]
            %v2406 = vmul.f32 %v2395, %v2403
            %v2407 = vsub.f32 %v2405, %v2406
            %2408 = vst [vmem:[#allocation5 + $0x1] sm:$0x1] %v2407
          $region72: #{tpu_custom_call.1} parent=67 // pred_fallthru
            _
          %v2409 = vld [vmem:[#allocation5] sm:$0x1]
          %v2410 = vld [vmem:[#allocation5 + $0x1] sm:$0x1]
          %v2411 = vld [vmem:[%s383] sm:$0xff]
          %v2412 = vld [vmem:[%s383 + $0x8] sm:$0xff]
          %v2413 = vld [vmem:[%s391] sm:$0xff]
          %v2414 = vld [vmem:[%s391 + $0x8] sm:$0xff]
          %s2415 = smul.u32 %s30, 64
          %s2416 = smul.addr %s2415, 8
          %s2417 = scalar_lea.vmem [#allocation2], %s2416
          %v2418 = vld [vmem:[%s2417] sm:$0xff]
          %v2419 = vld [vmem:[%s2417 + $0x8] sm:$0xff]
          %v2420 = vld [vmem:[%s2417 + $0x10] sm:$0xff]
          %v2421 = vld [vmem:[%s2417 + $0x18] sm:$0xff]
          %v2422 = vld [vmem:[%s2417 + $0x20] sm:$0xff]
          %v2423 = vld [vmem:[%s2417 + $0x28] sm:$0xff]
          %v2424 = vld [vmem:[%s2417 + $0x30] sm:$0xff]
          %v2425 = vld [vmem:[%s2417 + $0x38] sm:$0xff]
          %v2426 = vld [vmem:[%s2417 + $0x40] sm:$0xff]
          %v2427 = vld [vmem:[%s2417 + $0x48] sm:$0xff]
          %v2428 = vld [vmem:[%s2417 + $0x50] sm:$0xff]
          %v2429 = vld [vmem:[%s2417 + $0x58] sm:$0xff]
          %v2430 = vld [vmem:[%s2417 + $0x60] sm:$0xff]
          %v2431 = vld [vmem:[%s2417 + $0x68] sm:$0xff]
          %v2432 = vld [vmem:[%s2417 + $0x70] sm:$0xff]
          %v2433 = vld [vmem:[%s2417 + $0x78] sm:$0xff]
          %v2434 = vld [vmem:[%s2417 + $0x80] sm:$0xff]
          %v2435 = vld [vmem:[%s2417 + $0x88] sm:$0xff]
          %v2436 = vld [vmem:[%s2417 + $0x90] sm:$0xff]
          %v2437 = vld [vmem:[%s2417 + $0x98] sm:$0xff]
          %v2438 = vld [vmem:[%s2417 + $0xa0] sm:$0xff]
          %v2439 = vld [vmem:[%s2417 + $0xa8] sm:$0xff]
          %v2440 = vld [vmem:[%s2417 + $0xb0] sm:$0xff]
          %v2441 = vld [vmem:[%s2417 + $0xb8] sm:$0xff]
          %v2442 = vld [vmem:[%s2417 + $0xc0] sm:$0xff]
          %v2443 = vld [vmem:[%s2417 + $0xc8] sm:$0xff]
          %v2444 = vld [vmem:[%s2417 + $0xd0] sm:$0xff]
          %v2445 = vld [vmem:[%s2417 + $0xd8] sm:$0xff]
          %v2446 = vld [vmem:[%s2417 + $0xe0] sm:$0xff]
          %v2447 = vld [vmem:[%s2417 + $0xe8] sm:$0xff]
          %v2448 = vld [vmem:[%s2417 + $0xf0] sm:$0xff]
          %v2449 = vld [vmem:[%s2417 + $0xf8] sm:$0xff]
          %v2450 = vld [vmem:[%s2417 + $0x100] sm:$0xff]
          %v2451 = vld [vmem:[%s2417 + $0x108] sm:$0xff]
          %v2452 = vld [vmem:[%s2417 + $0x110] sm:$0xff]
          %v2453 = vld [vmem:[%s2417 + $0x118] sm:$0xff]
          %v2454 = vld [vmem:[%s2417 + $0x120] sm:$0xff]
          %v2455 = vld [vmem:[%s2417 + $0x128] sm:$0xff]
          %v2456 = vld [vmem:[%s2417 + $0x130] sm:$0xff]
          %v2457 = vld [vmem:[%s2417 + $0x138] sm:$0xff]
          %v2458 = vld [vmem:[%s2417 + $0x140] sm:$0xff]
          %v2459 = vld [vmem:[%s2417 + $0x148] sm:$0xff]
          %v2460 = vld [vmem:[%s2417 + $0x150] sm:$0xff]
          %v2461 = vld [vmem:[%s2417 + $0x158] sm:$0xff]
          %v2462 = vld [vmem:[%s2417 + $0x160] sm:$0xff]
          %v2463 = vld [vmem:[%s2417 + $0x168] sm:$0xff]
          %v2464 = vld [vmem:[%s2417 + $0x170] sm:$0xff]
          %v2465 = vld [vmem:[%s2417 + $0x178] sm:$0xff]
          %v2466 = vld [vmem:[%s2417 + $0x180] sm:$0xff]
          %v2467 = vld [vmem:[%s2417 + $0x188] sm:$0xff]
          %v2468 = vld [vmem:[%s2417 + $0x190] sm:$0xff]
          %v2469 = vld [vmem:[%s2417 + $0x198] sm:$0xff]
          %v2470 = vld [vmem:[%s2417 + $0x1a0] sm:$0xff]
          %v2471 = vld [vmem:[%s2417 + $0x1a8] sm:$0xff]
          %v2472 = vld [vmem:[%s2417 + $0x1b0] sm:$0xff]
          %v2473 = vld [vmem:[%s2417 + $0x1b8] sm:$0xff]
          %v2474 = vld [vmem:[%s2417 + $0x1c0] sm:$0xff]
          %v2475 = vld [vmem:[%s2417 + $0x1c8] sm:$0xff]
          %v2476 = vld [vmem:[%s2417 + $0x1d0] sm:$0xff]
          %v2477 = vld [vmem:[%s2417 + $0x1d8] sm:$0xff]
          %v2478 = vld [vmem:[%s2417 + $0x1e0] sm:$0xff]
          %v2479 = vld [vmem:[%s2417 + $0x1e8] sm:$0xff]
          %v2480 = vld [vmem:[%s2417 + $0x1f0] sm:$0xff]
          %v2481 = vld [vmem:[%s2417 + $0x1f8] sm:$0xff]
          %v2482 = vunpack.c.l.bf16 %v2418
          %v2483 = vunpack.c.h.bf16 %v2418
          %v2484 = vunpack.c.l.bf16 %v2419
          %v2485 = vunpack.c.h.bf16 %v2419
          %v2486 = vunpack.c.l.bf16 %v2420
          %v2487 = vunpack.c.h.bf16 %v2420
          %v2488 = vunpack.c.l.bf16 %v2421
          %v2489 = vunpack.c.h.bf16 %v2421
          %v2490 = vunpack.c.l.bf16 %v2422
          %v2491 = vunpack.c.h.bf16 %v2422
          %v2492 = vunpack.c.l.bf16 %v2423
          %v2493 = vunpack.c.h.bf16 %v2423
          %v2494 = vunpack.c.l.bf16 %v2424
          %v2495 = vunpack.c.h.bf16 %v2424
          %v2496 = vunpack.c.l.bf16 %v2425
          %v2497 = vunpack.c.h.bf16 %v2425
          %v2498 = vunpack.c.l.bf16 %v2426
          %v2499 = vunpack.c.h.bf16 %v2426
          %v2500 = vunpack.c.l.bf16 %v2427
          %v2501 = vunpack.c.h.bf16 %v2427
          %v2502 = vunpack.c.l.bf16 %v2428
          %v2503 = vunpack.c.h.bf16 %v2428
          %v2504 = vunpack.c.l.bf16 %v2429
          %v2505 = vunpack.c.h.bf16 %v2429
          %v2506 = vunpack.c.l.bf16 %v2430
          %v2507 = vunpack.c.h.bf16 %v2430
          %v2508 = vunpack.c.l.bf16 %v2431
          %v2509 = vunpack.c.h.bf16 %v2431
          %v2510 = vunpack.c.l.bf16 %v2432
          %v2511 = vunpack.c.h.bf16 %v2432
          %v2512 = vunpack.c.l.bf16 %v2433
          %v2513 = vunpack.c.h.bf16 %v2433
          %v2514 = vunpack.c.l.bf16 %v2434
          %v2515 = vunpack.c.h.bf16 %v2434
          %v2516 = vunpack.c.l.bf16 %v2435
          %v2517 = vunpack.c.h.bf16 %v2435
          %v2518 = vunpack.c.l.bf16 %v2436
          %v2519 = vunpack.c.h.bf16 %v2436
          %v2520 = vunpack.c.l.bf16 %v2437
          %v2521 = vunpack.c.h.bf16 %v2437
          %v2522 = vunpack.c.l.bf16 %v2438
          %v2523 = vunpack.c.h.bf16 %v2438
          %v2524 = vunpack.c.l.bf16 %v2439
          %v2525 = vunpack.c.h.bf16 %v2439
          %v2526 = vunpack.c.l.bf16 %v2440
          %v2527 = vunpack.c.h.bf16 %v2440
          %v2528 = vunpack.c.l.bf16 %v2441
          %v2529 = vunpack.c.h.bf16 %v2441
          %v2530 = vunpack.c.l.bf16 %v2442
          %v2531 = vunpack.c.h.bf16 %v2442
          %v2532 = vunpack.c.l.bf16 %v2443
          %v2533 = vunpack.c.h.bf16 %v2443
          %v2534 = vunpack.c.l.bf16 %v2444
          %v2535 = vunpack.c.h.bf16 %v2444
          %v2536 = vunpack.c.l.bf16 %v2445
          %v2537 = vunpack.c.h.bf16 %v2445
          %v2538 = vunpack.c.l.bf16 %v2446
          %v2539 = vunpack.c.h.bf16 %v2446
          %v2540 = vunpack.c.l.bf16 %v2447
          %v2541 = vunpack.c.h.bf16 %v2447
          %v2542 = vunpack.c.l.bf16 %v2448
          %v2543 = vunpack.c.h.bf16 %v2448
          %v2544 = vunpack.c.l.bf16 %v2449
          %v2545 = vunpack.c.h.bf16 %v2449
          %v2546 = vunpack.c.l.bf16 %v2450
          %v2547 = vunpack.c.h.bf16 %v2450
          %v2548 = vunpack.c.l.bf16 %v2451
          %v2549 = vunpack.c.h.bf16 %v2451
          %v2550 = vunpack.c.l.bf16 %v2452
          %v2551 = vunpack.c.h.bf16 %v2452
          %v2552 = vunpack.c.l.bf16 %v2453
          %v2553 = vunpack.c.h.bf16 %v2453
          %v2554 = vunpack.c.l.bf16 %v2454
          %v2555 = vunpack.c.h.bf16 %v2454
          %v2556 = vunpack.c.l.bf16 %v2455
          %v2557 = vunpack.c.h.bf16 %v2455
          %v2558 = vunpack.c.l.bf16 %v2456
          %v2559 = vunpack.c.h.bf16 %v2456
          %v2560 = vunpack.c.l.bf16 %v2457
          %v2561 = vunpack.c.h.bf16 %v2457
          %v2562 = vunpack.c.l.bf16 %v2458
          %v2563 = vunpack.c.h.bf16 %v2458
          %v2564 = vunpack.c.l.bf16 %v2459
          %v2565 = vunpack.c.h.bf16 %v2459
          %v2566 = vunpack.c.l.bf16 %v2460
          %v2567 = vunpack.c.h.bf16 %v2460
          %v2568 = vunpack.c.l.bf16 %v2461
          %v2569 = vunpack.c.h.bf16 %v2461
          %v2570 = vunpack.c.l.bf16 %v2462
          %v2571 = vunpack.c.h.bf16 %v2462
          %v2572 = vunpack.c.l.bf16 %v2463
          %v2573 = vunpack.c.h.bf16 %v2463
          %v2574 = vunpack.c.l.bf16 %v2464
          %v2575 = vunpack.c.h.bf16 %v2464
          %v2576 = vunpack.c.l.bf16 %v2465
          %v2577 = vunpack.c.h.bf16 %v2465
          %v2578 = vunpack.c.l.bf16 %v2466
          %v2579 = vunpack.c.h.bf16 %v2466
          %v2580 = vunpack.c.l.bf16 %v2467
          %v2581 = vunpack.c.h.bf16 %v2467
          %v2582 = vunpack.c.l.bf16 %v2468
          %v2583 = vunpack.c.h.bf16 %v2468
          %v2584 = vunpack.c.l.bf16 %v2469
          %v2585 = vunpack.c.h.bf16 %v2469
          %v2586 = vunpack.c.l.bf16 %v2470
          %v2587 = vunpack.c.h.bf16 %v2470
          %v2588 = vunpack.c.l.bf16 %v2471
          %v2589 = vunpack.c.h.bf16 %v2471
          %v2590 = vunpack.c.l.bf16 %v2472
          %v2591 = vunpack.c.h.bf16 %v2472
          %v2592 = vunpack.c.l.bf16 %v2473
          %v2593 = vunpack.c.h.bf16 %v2473
          %v2594 = vunpack.c.l.bf16 %v2474
          %v2595 = vunpack.c.h.bf16 %v2474
          %v2596 = vunpack.c.l.bf16 %v2475
          %v2597 = vunpack.c.h.bf16 %v2475
          %v2598 = vunpack.c.l.bf16 %v2476
          %v2599 = vunpack.c.h.bf16 %v2476
          %v2600 = vunpack.c.l.bf16 %v2477
          %v2601 = vunpack.c.h.bf16 %v2477
          %v2602 = vunpack.c.l.bf16 %v2478
          %v2603 = vunpack.c.h.bf16 %v2478
          %v2604 = vunpack.c.l.bf16 %v2479
          %v2605 = vunpack.c.h.bf16 %v2479
          %v2606 = vunpack.c.l.bf16 %v2480
          %v2607 = vunpack.c.h.bf16 %v2480
          %v2608 = vunpack.c.l.bf16 %v2481
          %v2609 = vunpack.c.h.bf16 %v2481
          %v2610 = vlaneseq
          %v2611 = vshrl.u32 %v2610, 7
          %v2612 = vsub.s32 0, %v2611
          %v2613 = vrot.slane %v2409, %v2612
          %v2614 = vmul.f32 %v2482, %v2613
          %v2615 = vmul.f32 %v2483, %v2613
          %v2616 = vmul.f32 %v2484, %v2613
          %v2617 = vmul.f32 %v2485, %v2613
          %v2618 = vmul.f32 %v2486, %v2613
          %v2619 = vmul.f32 %v2487, %v2613
          %v2620 = vmul.f32 %v2488, %v2613
          %v2621 = vmul.f32 %v2489, %v2613
          %v2622 = vmul.f32 %v2490, %v2613
          %v2623 = vmul.f32 %v2491, %v2613
          %v2624 = vmul.f32 %v2492, %v2613
          %v2625 = vmul.f32 %v2493, %v2613
          %v2626 = vmul.f32 %v2494, %v2613
          %v2627 = vmul.f32 %v2495, %v2613
          %v2628 = vmul.f32 %v2496, %v2613
          %v2629 = vmul.f32 %v2497, %v2613
          %v2630 = vmul.f32 %v2498, %v2613
          %v2631 = vmul.f32 %v2499, %v2613
          %v2632 = vmul.f32 %v2500, %v2613
          %v2633 = vmul.f32 %v2501, %v2613
          %v2634 = vmul.f32 %v2502, %v2613
          %v2635 = vmul.f32 %v2503, %v2613
          %v2636 = vmul.f32 %v2504, %v2613
          %v2637 = vmul.f32 %v2505, %v2613
          %v2638 = vmul.f32 %v2506, %v2613
          %v2639 = vmul.f32 %v2507, %v2613
          %v2640 = vmul.f32 %v2508, %v2613
          %v2641 = vmul.f32 %v2509, %v2613
          %v2642 = vmul.f32 %v2510, %v2613
          %v2643 = vmul.f32 %v2511, %v2613
          %v2644 = vmul.f32 %v2512, %v2613
          %v2645 = vmul.f32 %v2513, %v2613
          %v2646 = vmul.f32 %v2514, %v2613
          %v2647 = vmul.f32 %v2515, %v2613
          %v2648 = vmul.f32 %v2516, %v2613
          %v2649 = vmul.f32 %v2517, %v2613
          %v2650 = vmul.f32 %v2518, %v2613
          %v2651 = vmul.f32 %v2519, %v2613
          %v2652 = vmul.f32 %v2520, %v2613
          %v2653 = vmul.f32 %v2521, %v2613
          %v2654 = vmul.f32 %v2522, %v2613
          %v2655 = vmul.f32 %v2523, %v2613
          %v2656 = vmul.f32 %v2524, %v2613
          %v2657 = vmul.f32 %v2525, %v2613
          %v2658 = vmul.f32 %v2526, %v2613
          %v2659 = vmul.f32 %v2527, %v2613
          %v2660 = vmul.f32 %v2528, %v2613
          %v2661 = vmul.f32 %v2529, %v2613
          %v2662 = vmul.f32 %v2530, %v2613
          %v2663 = vmul.f32 %v2531, %v2613
          %v2664 = vmul.f32 %v2532, %v2613
          %v2665 = vmul.f32 %v2533, %v2613
          %v2666 = vmul.f32 %v2534, %v2613
          %v2667 = vmul.f32 %v2535, %v2613
          %v2668 = vmul.f32 %v2536, %v2613
          %v2669 = vmul.f32 %v2537, %v2613
          %v2670 = vmul.f32 %v2538, %v2613
          %v2671 = vmul.f32 %v2539, %v2613
          %v2672 = vmul.f32 %v2540, %v2613
          %v2673 = vmul.f32 %v2541, %v2613
          %v2674 = vmul.f32 %v2542, %v2613
          %v2675 = vmul.f32 %v2543, %v2613
          %v2676 = vmul.f32 %v2544, %v2613
          %v2677 = vmul.f32 %v2545, %v2613
          %v2678 = vmul.f32 %v2546, %v2613
          %v2679 = vmul.f32 %v2547, %v2613
          %v2680 = vmul.f32 %v2548, %v2613
          %v2681 = vmul.f32 %v2549, %v2613
          %v2682 = vmul.f32 %v2550, %v2613
          %v2683 = vmul.f32 %v2551, %v2613
          %v2684 = vmul.f32 %v2552, %v2613
          %v2685 = vmul.f32 %v2553, %v2613
          %v2686 = vmul.f32 %v2554, %v2613
          %v2687 = vmul.f32 %v2555, %v2613
          %v2688 = vmul.f32 %v2556, %v2613
          %v2689 = vmul.f32 %v2557, %v2613
          %v2690 = vmul.f32 %v2558, %v2613
          %v2691 = vmul.f32 %v2559, %v2613
          %v2692 = vmul.f32 %v2560, %v2613
          %v2693 = vmul.f32 %v2561, %v2613
          %v2694 = vmul.f32 %v2562, %v2613
          %v2695 = vmul.f32 %v2563, %v2613
          %v2696 = vmul.f32 %v2564, %v2613
          %v2697 = vmul.f32 %v2565, %v2613
          %v2698 = vmul.f32 %v2566, %v2613
          %v2699 = vmul.f32 %v2567, %v2613
          %v2700 = vmul.f32 %v2568, %v2613
          %v2701 = vmul.f32 %v2569, %v2613
          %v2702 = vmul.f32 %v2570, %v2613
          %v2703 = vmul.f32 %v2571, %v2613
          %v2704 = vmul.f32 %v2572, %v2613
          %v2705 = vmul.f32 %v2573, %v2613
          %v2706 = vmul.f32 %v2574, %v2613
          %v2707 = vmul.f32 %v2575, %v2613
          %v2708 = vmul.f32 %v2576, %v2613
          %v2709 = vmul.f32 %v2577, %v2613
          %v2710 = vmul.f32 %v2578, %v2613
          %v2711 = vmul.f32 %v2579, %v2613
          %v2712 = vmul.f32 %v2580, %v2613
          %v2713 = vmul.f32 %v2581, %v2613
          %v2714 = vmul.f32 %v2582, %v2613
          %v2715 = vmul.f32 %v2583, %v2613
          %v2716 = vmul.f32 %v2584, %v2613
          %v2717 = vmul.f32 %v2585, %v2613
          %v2718 = vmul.f32 %v2586, %v2613
          %v2719 = vmul.f32 %v2587, %v2613
          %v2720 = vmul.f32 %v2588, %v2613
          %v2721 = vmul.f32 %v2589, %v2613
          %v2722 = vmul.f32 %v2590, %v2613
          %v2723 = vmul.f32 %v2591, %v2613
          %v2724 = vmul.f32 %v2592, %v2613
          %v2725 = vmul.f32 %v2593, %v2613
          %v2726 = vmul.f32 %v2594, %v2613
          %v2727 = vmul.f32 %v2595, %v2613
          %v2728 = vmul.f32 %v2596, %v2613
          %v2729 = vmul.f32 %v2597, %v2613
          %v2730 = vmul.f32 %v2598, %v2613
          %v2731 = vmul.f32 %v2599, %v2613
          %v2732 = vmul.f32 %v2600, %v2613
          %v2733 = vmul.f32 %v2601, %v2613
          %v2734 = vmul.f32 %v2602, %v2613
          %v2735 = vmul.f32 %v2603, %v2613
          %v2736 = vmul.f32 %v2604, %v2613
          %v2737 = vmul.f32 %v2605, %v2613
          %v2738 = vmul.f32 %v2606, %v2613
          %v2739 = vmul.f32 %v2607, %v2613
          %v2740 = vmul.f32 %v2608, %v2613
          %v2741 = vmul.f32 %v2609, %v2613
          %v2742 = vlaneseq
          %v2743 = vshrl.u32 %v2742, 7
          %v2744 = vsub.s32 0, %v2743
          %v2745 = vrot.slane %v2410, %v2744
          %v2746 = vadd.f32 %v2614, %v2745
          %v2747 = vadd.f32 %v2615, %v2745
          %v2748 = vadd.f32 %v2616, %v2745
          %v2749 = vadd.f32 %v2617, %v2745
          %v2750 = vadd.f32 %v2618, %v2745
          %v2751 = vadd.f32 %v2619, %v2745
          %v2752 = vadd.f32 %v2620, %v2745
          %v2753 = vadd.f32 %v2621, %v2745
          %v2754 = vadd.f32 %v2622, %v2745
          %v2755 = vadd.f32 %v2623, %v2745
          %v2756 = vadd.f32 %v2624, %v2745
          %v2757 = vadd.f32 %v2625, %v2745
          %v2758 = vadd.f32 %v2626, %v2745
          %v2759 = vadd.f32 %v2627, %v2745
          %v2760 = vadd.f32 %v2628, %v2745
          %v2761 = vadd.f32 %v2629, %v2745
          %v2762 = vadd.f32 %v2630, %v2745
          %v2763 = vadd.f32 %v2631, %v2745
          %v2764 = vadd.f32 %v2632, %v2745
          %v2765 = vadd.f32 %v2633, %v2745
          %v2766 = vadd.f32 %v2634, %v2745
          %v2767 = vadd.f32 %v2635, %v2745
          %v2768 = vadd.f32 %v2636, %v2745
          %v2769 = vadd.f32 %v2637, %v2745
          %v2770 = vadd.f32 %v2638, %v2745
          %v2771 = vadd.f32 %v2639, %v2745
          %v2772 = vadd.f32 %v2640, %v2745
          %v2773 = vadd.f32 %v2641, %v2745
          %v2774 = vadd.f32 %v2642, %v2745
          %v2775 = vadd.f32 %v2643, %v2745
          %v2776 = vadd.f32 %v2644, %v2745
          %v2777 = vadd.f32 %v2645, %v2745
          %v2778 = vadd.f32 %v2646, %v2745
          %v2779 = vadd.f32 %v2647, %v2745
          %v2780 = vadd.f32 %v2648, %v2745
          %v2781 = vadd.f32 %v2649, %v2745
          %v2782 = vadd.f32 %v2650, %v2745
          %v2783 = vadd.f32 %v2651, %v2745
          %v2784 = vadd.f32 %v2652, %v2745
          %v2785 = vadd.f32 %v2653, %v2745
          %v2786 = vadd.f32 %v2654, %v2745
          %v2787 = vadd.f32 %v2655, %v2745
          %v2788 = vadd.f32 %v2656, %v2745
          %v2789 = vadd.f32 %v2657, %v2745
          %v2790 = vadd.f32 %v2658, %v2745
          %v2791 = vadd.f32 %v2659, %v2745
          %v2792 = vadd.f32 %v2660, %v2745
          %v2793 = vadd.f32 %v2661, %v2745
          %v2794 = vadd.f32 %v2662, %v2745
          %v2795 = vadd.f32 %v2663, %v2745
          %v2796 = vadd.f32 %v2664, %v2745
          %v2797 = vadd.f32 %v2665, %v2745
          %v2798 = vadd.f32 %v2666, %v2745
          %v2799 = vadd.f32 %v2667, %v2745
          %v2800 = vadd.f32 %v2668, %v2745
          %v2801 = vadd.f32 %v2669, %v2745
          %v2802 = vadd.f32 %v2670, %v2745
          %v2803 = vadd.f32 %v2671, %v2745
          %v2804 = vadd.f32 %v2672, %v2745
          %v2805 = vadd.f32 %v2673, %v2745
          %v2806 = vadd.f32 %v2674, %v2745
          %v2807 = vadd.f32 %v2675, %v2745
          %v2808 = vadd.f32 %v2676, %v2745
          %v2809 = vadd.f32 %v2677, %v2745
          %v2810 = vadd.f32 %v2678, %v2745
          %v2811 = vadd.f32 %v2679, %v2745
          %v2812 = vadd.f32 %v2680, %v2745
          %v2813 = vadd.f32 %v2681, %v2745
          %v2814 = vadd.f32 %v2682, %v2745
          %v2815 = vadd.f32 %v2683, %v2745
          %v2816 = vadd.f32 %v2684, %v2745
          %v2817 = vadd.f32 %v2685, %v2745
          %v2818 = vadd.f32 %v2686, %v2745
          %v2819 = vadd.f32 %v2687, %v2745
          %v2820 = vadd.f32 %v2688, %v2745
          %v2821 = vadd.f32 %v2689, %v2745
          %v2822 = vadd.f32 %v2690, %v2745
          %v2823 = vadd.f32 %v2691, %v2745
          %v2824 = vadd.f32 %v2692, %v2745
          %v2825 = vadd.f32 %v2693, %v2745
          %v2826 = vadd.f32 %v2694, %v2745
          %v2827 = vadd.f32 %v2695, %v2745
          %v2828 = vadd.f32 %v2696, %v2745
          %v2829 = vadd.f32 %v2697, %v2745
          %v2830 = vadd.f32 %v2698, %v2745
          %v2831 = vadd.f32 %v2699, %v2745
          %v2832 = vadd.f32 %v2700, %v2745
          %v2833 = vadd.f32 %v2701, %v2745
          %v2834 = vadd.f32 %v2702, %v2745
          %v2835 = vadd.f32 %v2703, %v2745
          %v2836 = vadd.f32 %v2704, %v2745
          %v2837 = vadd.f32 %v2705, %v2745
          %v2838 = vadd.f32 %v2706, %v2745
          %v2839 = vadd.f32 %v2707, %v2745
          %v2840 = vadd.f32 %v2708, %v2745
          %v2841 = vadd.f32 %v2709, %v2745
          %v2842 = vadd.f32 %v2710, %v2745
          %v2843 = vadd.f32 %v2711, %v2745
          %v2844 = vadd.f32 %v2712, %v2745
          %v2845 = vadd.f32 %v2713, %v2745
          %v2846 = vadd.f32 %v2714, %v2745
          %v2847 = vadd.f32 %v2715, %v2745
          %v2848 = vadd.f32 %v2716, %v2745
          %v2849 = vadd.f32 %v2717, %v2745
          %v2850 = vadd.f32 %v2718, %v2745
          %v2851 = vadd.f32 %v2719, %v2745
          %v2852 = vadd.f32 %v2720, %v2745
          %v2853 = vadd.f32 %v2721, %v2745
          %v2854 = vadd.f32 %v2722, %v2745
          %v2855 = vadd.f32 %v2723, %v2745
          %v2856 = vadd.f32 %v2724, %v2745
          %v2857 = vadd.f32 %v2725, %v2745
          %v2858 = vadd.f32 %v2726, %v2745
          %v2859 = vadd.f32 %v2727, %v2745
          %v2860 = vadd.f32 %v2728, %v2745
          %v2861 = vadd.f32 %v2729, %v2745
          %v2862 = vadd.f32 %v2730, %v2745
          %v2863 = vadd.f32 %v2731, %v2745
          %v2864 = vadd.f32 %v2732, %v2745
          %v2865 = vadd.f32 %v2733, %v2745
          %v2866 = vadd.f32 %v2734, %v2745
          %v2867 = vadd.f32 %v2735, %v2745
          %v2868 = vadd.f32 %v2736, %v2745
          %v2869 = vadd.f32 %v2737, %v2745
          %v2870 = vadd.f32 %v2738, %v2745
          %v2871 = vadd.f32 %v2739, %v2745
          %v2872 = vadd.f32 %v2740, %v2745
          %v2873 = vadd.f32 %v2741, %v2745
          %v2874 = vmax.f32 %v2746, 0.0
          %v2875 = vmax.f32 %v2747, 0.0
          %v2876 = vmax.f32 %v2748, 0.0
          %v2877 = vmax.f32 %v2749, 0.0
          %v2878 = vmax.f32 %v2750, 0.0
          %v2879 = vmax.f32 %v2751, 0.0
          %v2880 = vmax.f32 %v2752, 0.0
          %v2881 = vmax.f32 %v2753, 0.0
          %v2882 = vmax.f32 %v2754, 0.0
          %v2883 = vmax.f32 %v2755, 0.0
          %v2884 = vmax.f32 %v2756, 0.0
          %v2885 = vmax.f32 %v2757, 0.0
          %v2886 = vmax.f32 %v2758, 0.0
          %v2887 = vmax.f32 %v2759, 0.0
          %v2888 = vmax.f32 %v2760, 0.0
          %v2889 = vmax.f32 %v2761, 0.0
          %v2890 = vmax.f32 %v2762, 0.0
          %v2891 = vmax.f32 %v2763, 0.0
          %v2892 = vmax.f32 %v2764, 0.0
          %v2893 = vmax.f32 %v2765, 0.0
          %v2894 = vmax.f32 %v2766, 0.0
          %v2895 = vmax.f32 %v2767, 0.0
          %v2896 = vmax.f32 %v2768, 0.0
          %v2897 = vmax.f32 %v2769, 0.0
          %v2898 = vmax.f32 %v2770, 0.0
          %v2899 = vmax.f32 %v2771, 0.0
          %v2900 = vmax.f32 %v2772, 0.0
          %v2901 = vmax.f32 %v2773, 0.0
          %v2902 = vmax.f32 %v2774, 0.0
          %v2903 = vmax.f32 %v2775, 0.0
          %v2904 = vmax.f32 %v2776, 0.0
          %v2905 = vmax.f32 %v2777, 0.0
          %v2906 = vmax.f32 %v2778, 0.0
          %v2907 = vmax.f32 %v2779, 0.0
          %v2908 = vmax.f32 %v2780, 0.0
          %v2909 = vmax.f32 %v2781, 0.0
          %v2910 = vmax.f32 %v2782, 0.0
          %v2911 = vmax.f32 %v2783, 0.0
          %v2912 = vmax.f32 %v2784, 0.0
          %v2913 = vmax.f32 %v2785, 0.0
          %v2914 = vmax.f32 %v2786, 0.0
          %v2915 = vmax.f32 %v2787, 0.0
          %v2916 = vmax.f32 %v2788, 0.0
          %v2917 = vmax.f32 %v2789, 0.0
          %v2918 = vmax.f32 %v2790, 0.0
          %v2919 = vmax.f32 %v2791, 0.0
          %v2920 = vmax.f32 %v2792, 0.0
          %v2921 = vmax.f32 %v2793, 0.0
          %v2922 = vmax.f32 %v2794, 0.0
          %v2923 = vmax.f32 %v2795, 0.0
          %v2924 = vmax.f32 %v2796, 0.0
          %v2925 = vmax.f32 %v2797, 0.0
          %v2926 = vmax.f32 %v2798, 0.0
          %v2927 = vmax.f32 %v2799, 0.0
          %v2928 = vmax.f32 %v2800, 0.0
          %v2929 = vmax.f32 %v2801, 0.0
          %v2930 = vmax.f32 %v2802, 0.0
          %v2931 = vmax.f32 %v2803, 0.0
          %v2932 = vmax.f32 %v2804, 0.0
          %v2933 = vmax.f32 %v2805, 0.0
          %v2934 = vmax.f32 %v2806, 0.0
          %v2935 = vmax.f32 %v2807, 0.0
          %v2936 = vmax.f32 %v2808, 0.0
          %v2937 = vmax.f32 %v2809, 0.0
          %v2938 = vmax.f32 %v2810, 0.0
          %v2939 = vmax.f32 %v2811, 0.0
          %v2940 = vmax.f32 %v2812, 0.0
          %v2941 = vmax.f32 %v2813, 0.0
          %v2942 = vmax.f32 %v2814, 0.0
          %v2943 = vmax.f32 %v2815, 0.0
          %v2944 = vmax.f32 %v2816, 0.0
          %v2945 = vmax.f32 %v2817, 0.0
          %v2946 = vmax.f32 %v2818, 0.0
          %v2947 = vmax.f32 %v2819, 0.0
          %v2948 = vmax.f32 %v2820, 0.0
          %v2949 = vmax.f32 %v2821, 0.0
          %v2950 = vmax.f32 %v2822, 0.0
          %v2951 = vmax.f32 %v2823, 0.0
          %v2952 = vmax.f32 %v2824, 0.0
          %v2953 = vmax.f32 %v2825, 0.0
          %v2954 = vmax.f32 %v2826, 0.0
          %v2955 = vmax.f32 %v2827, 0.0
          %v2956 = vmax.f32 %v2828, 0.0
          %v2957 = vmax.f32 %v2829, 0.0
          %v2958 = vmax.f32 %v2830, 0.0
          %v2959 = vmax.f32 %v2831, 0.0
          %v2960 = vmax.f32 %v2832, 0.0
          %v2961 = vmax.f32 %v2833, 0.0
          %v2962 = vmax.f32 %v2834, 0.0
          %v2963 = vmax.f32 %v2835, 0.0
          %v2964 = vmax.f32 %v2836, 0.0
          %v2965 = vmax.f32 %v2837, 0.0
          %v2966 = vmax.f32 %v2838, 0.0
          %v2967 = vmax.f32 %v2839, 0.0
          %v2968 = vmax.f32 %v2840, 0.0
          %v2969 = vmax.f32 %v2841, 0.0
          %v2970 = vmax.f32 %v2842, 0.0
          %v2971 = vmax.f32 %v2843, 0.0
          %v2972 = vmax.f32 %v2844, 0.0
          %v2973 = vmax.f32 %v2845, 0.0
          %v2974 = vmax.f32 %v2846, 0.0
          %v2975 = vmax.f32 %v2847, 0.0
          %v2976 = vmax.f32 %v2848, 0.0
          %v2977 = vmax.f32 %v2849, 0.0
          %v2978 = vmax.f32 %v2850, 0.0
          %v2979 = vmax.f32 %v2851, 0.0
          %v2980 = vmax.f32 %v2852, 0.0
          %v2981 = vmax.f32 %v2853, 0.0
          %v2982 = vmax.f32 %v2854, 0.0
          %v2983 = vmax.f32 %v2855, 0.0
          %v2984 = vmax.f32 %v2856, 0.0
          %v2985 = vmax.f32 %v2857, 0.0
          %v2986 = vmax.f32 %v2858, 0.0
          %v2987 = vmax.f32 %v2859, 0.0
          %v2988 = vmax.f32 %v2860, 0.0
          %v2989 = vmax.f32 %v2861, 0.0
          %v2990 = vmax.f32 %v2862, 0.0
          %v2991 = vmax.f32 %v2863, 0.0
          %v2992 = vmax.f32 %v2864, 0.0
          %v2993 = vmax.f32 %v2865, 0.0
          %v2994 = vmax.f32 %v2866, 0.0
          %v2995 = vmax.f32 %v2867, 0.0
          %v2996 = vmax.f32 %v2868, 0.0
          %v2997 = vmax.f32 %v2869, 0.0
          %v2998 = vmax.f32 %v2870, 0.0
          %v2999 = vmax.f32 %v2871, 0.0
          %v3000 = vmax.f32 %v2872, 0.0
          %v3001 = vmax.f32 %v2873, 0.0
          %v3004 = vcombine.high %v2411, %v2411
          %v3006 = vunpack.c.l.s4 1966171168
          %v3007 = vunpack.c.0.s8 %v3006
          %v3008 = vlaneseq
          %v3009 = vshrl.u32 %v3008, 7
          %v3010 = vsub.s32 %v3007, %v3009
          %v3011 = vrot.slane %v2411, %v3010
          %v3013 = vunpack.c.l.s4 1966171168
          %v3014 = vunpack.c.0.s8 %v3013
          %v3015 = vlaneseq
          %v3016 = vshrl.u32 %v3015, 7
          %v3017 = vsub.s32 %v3014, %v3016
          %v3018 = vrot.slane %v3004, %v3017
          %v3019 = vcombine.high %v3011, %v3011
          %v3020 = vcombine.high %v3018, %v3018
          %v3022 = vunpack.c.l.s4 1966171168
          %v3023 = vunpack.c.0.s8 %v3022
          %v3024 = vlaneseq
          %v3025 = vshrl.u32 %v3024, 7
          %v3026 = vsub.s32 %v3023, %v3025
          %v3027 = vrot.slane %v3011, %v3026
          %v3029 = vunpack.c.l.s4 1966171168
          %v3030 = vunpack.c.0.s8 %v3029
          %v3031 = vlaneseq
          %v3032 = vshrl.u32 %v3031, 7
          %v3033 = vsub.s32 %v3030, %v3032
          %v3034 = vrot.slane %v3018, %v3033
          %v3036 = vunpack.c.l.s4 1966171168
          %v3037 = vunpack.c.0.s8 %v3036
          %v3038 = vlaneseq
          %v3039 = vshrl.u32 %v3038, 7
          %v3040 = vsub.s32 %v3037, %v3039
          %v3041 = vrot.slane %v3019, %v3040
          %v3043 = vunpack.c.l.s4 1966171168
          %v3044 = vunpack.c.0.s8 %v3043
          %v3045 = vlaneseq
          %v3046 = vshrl.u32 %v3045, 7
          %v3047 = vsub.s32 %v3044, %v3046
          %v3048 = vrot.slane %v3020, %v3047
          %v3049 = vcombine.high %v3027, %v3027
          %v3050 = vcombine.high %v3034, %v3034
          %v3051 = vcombine.high %v3041, %v3041
          %v3052 = vcombine.high %v3048, %v3048
          %v3053 = vcombine.high %v2412, %v2412
          %v3055 = vunpack.c.l.s4 1966171168
          %v3056 = vunpack.c.0.s8 %v3055
          %v3057 = vlaneseq
          %v3058 = vshrl.u32 %v3057, 7
          %v3059 = vsub.s32 %v3056, %v3058
          %v3060 = vrot.slane %v2412, %v3059
          %v3062 = vunpack.c.l.s4 1966171168
          %v3063 = vunpack.c.0.s8 %v3062
          %v3064 = vlaneseq
          %v3065 = vshrl.u32 %v3064, 7
          %v3066 = vsub.s32 %v3063, %v3065
          %v3067 = vrot.slane %v3053, %v3066
          %v3068 = vcombine.high %v3060, %v3060
          %v3069 = vcombine.high %v3067, %v3067
          %v3071 = vunpack.c.l.s4 1966171168
          %v3072 = vunpack.c.0.s8 %v3071
          %v3073 = vlaneseq
          %v3074 = vshrl.u32 %v3073, 7
          %v3075 = vsub.s32 %v3072, %v3074
          %v3076 = vrot.slane %v3060, %v3075
          %v3078 = vunpack.c.l.s4 1966171168
          %v3079 = vunpack.c.0.s8 %v3078
          %v3080 = vlaneseq
          %v3081 = vshrl.u32 %v3080, 7
          %v3082 = vsub.s32 %v3079, %v3081
          %v3083 = vrot.slane %v3067, %v3082
          %v3085 = vunpack.c.l.s4 1966171168
          %v3086 = vunpack.c.0.s8 %v3085
          %v3087 = vlaneseq
          %v3088 = vshrl.u32 %v3087, 7
          %v3089 = vsub.s32 %v3086, %v3088
          %v3090 = vrot.slane %v3068, %v3089
          %v3092 = vunpack.c.l.s4 1966171168
          %v3093 = vunpack.c.0.s8 %v3092
          %v3094 = vlaneseq
          %v3095 = vshrl.u32 %v3094, 7
          %v3096 = vsub.s32 %v3093, %v3095
          %v3097 = vrot.slane %v3069, %v3096
          %v3098 = vcombine.high %v3076, %v3076
          %v3099 = vcombine.high %v3083, %v3083
          %v3100 = vcombine.high %v3090, %v3090
          %v3101 = vcombine.high %v3097, %v3097
          %v3102 = vlaneseq
          %v3103 = vshrl.u32 %v3102, 7
          %v3104 = vsub.s32 0, %v3103
          %v3105 = vrot.slane %v3027, %v3104
          %v3106 = vlaneseq
          %v3107 = vshrl.u32 %v3106, 7
          %v3108 = vsub.s32 0, %v3107
          %v3109 = vrot.slane %v3041, %v3108
          %v3110 = vlaneseq
          %v3111 = vshrl.u32 %v3110, 7
          %v3112 = vsub.s32 0, %v3111
          %v3113 = vrot.slane %v3049, %v3112
          %v3114 = vlaneseq
          %v3115 = vshrl.u32 %v3114, 7
          %v3116 = vsub.s32 0, %v3115
          %v3117 = vrot.slane %v3051, %v3116
          %v3118 = vlaneseq
          %v3119 = vshrl.u32 %v3118, 7
          %v3120 = vsub.s32 0, %v3119
          %v3121 = vrot.slane %v3034, %v3120
          %v3122 = vlaneseq
          %v3123 = vshrl.u32 %v3122, 7
          %v3124 = vsub.s32 0, %v3123
          %v3125 = vrot.slane %v3048, %v3124
          %v3126 = vlaneseq
          %v3127 = vshrl.u32 %v3126, 7
          %v3128 = vsub.s32 0, %v3127
          %v3129 = vrot.slane %v3050, %v3128
          %v3130 = vlaneseq
          %v3131 = vshrl.u32 %v3130, 7
          %v3132 = vsub.s32 0, %v3131
          %v3133 = vrot.slane %v3052, %v3132
          %v3134 = vlaneseq
          %v3135 = vshrl.u32 %v3134, 7
          %v3136 = vsub.s32 0, %v3135
          %v3137 = vrot.slane %v3076, %v3136
          %v3138 = vlaneseq
          %v3139 = vshrl.u32 %v3138, 7
          %v3140 = vsub.s32 0, %v3139
          %v3141 = vrot.slane %v3090, %v3140
          %v3142 = vlaneseq
          %v3143 = vshrl.u32 %v3142, 7
          %v3144 = vsub.s32 0, %v3143
          %v3145 = vrot.slane %v3098, %v3144
          %v3146 = vlaneseq
          %v3147 = vshrl.u32 %v3146, 7
          %v3148 = vsub.s32 0, %v3147
          %v3149 = vrot.slane %v3100, %v3148
          %v3150 = vlaneseq
          %v3151 = vshrl.u32 %v3150, 7
          %v3152 = vsub.s32 0, %v3151
          %v3153 = vrot.slane %v3083, %v3152
          %v3154 = vlaneseq
          %v3155 = vshrl.u32 %v3154, 7
          %v3156 = vsub.s32 0, %v3155
          %v3157 = vrot.slane %v3097, %v3156
          %v3158 = vlaneseq
          %v3159 = vshrl.u32 %v3158, 7
          %v3160 = vsub.s32 0, %v3159
          %v3161 = vrot.slane %v3099, %v3160
          %v3162 = vlaneseq
          %v3163 = vshrl.u32 %v3162, 7
          %v3164 = vsub.s32 0, %v3163
          %v3165 = vrot.slane %v3101, %v3164
          %v3182 = vmul.f32 %v2874, %v3105
          %v3183 = vmul.f32 %v2875, %v3105
          %v3184 = vmul.f32 %v2876, %v3105
          %v3185 = vmul.f32 %v2877, %v3105
          %v3186 = vmul.f32 %v2878, %v3105
          %v3187 = vmul.f32 %v2879, %v3105
          %v3188 = vmul.f32 %v2880, %v3105
          %v3189 = vmul.f32 %v2881, %v3105
          %v3190 = vmul.f32 %v2882, %v3109
          %v3191 = vmul.f32 %v2883, %v3109
          %v3192 = vmul.f32 %v2884, %v3109
          %v3193 = vmul.f32 %v2885, %v3109
          %v3194 = vmul.f32 %v2886, %v3109
          %v3195 = vmul.f32 %v2887, %v3109
          %v3196 = vmul.f32 %v2888, %v3109
          %v3197 = vmul.f32 %v2889, %v3109
          %v3198 = vmul.f32 %v2890, %v3113
          %v3199 = vmul.f32 %v2891, %v3113
          %v3200 = vmul.f32 %v2892, %v3113
          %v3201 = vmul.f32 %v2893, %v3113
          %v3202 = vmul.f32 %v2894, %v3113
          %v3203 = vmul.f32 %v2895, %v3113
          %v3204 = vmul.f32 %v2896, %v3113
          %v3205 = vmul.f32 %v2897, %v3113
          %v3206 = vmul.f32 %v2898, %v3117
          %v3207 = vmul.f32 %v2899, %v3117
          %v3208 = vmul.f32 %v2900, %v3117
          %v3209 = vmul.f32 %v2901, %v3117
          %v3210 = vmul.f32 %v2902, %v3117
          %v3211 = vmul.f32 %v2903, %v3117
          %v3212 = vmul.f32 %v2904, %v3117
          %v3213 = vmul.f32 %v2905, %v3117
          %v3214 = vmul.f32 %v2906, %v3121
          %v3215 = vmul.f32 %v2907, %v3121
          %v3216 = vmul.f32 %v2908, %v3121
          %v3217 = vmul.f32 %v2909, %v3121
          %v3218 = vmul.f32 %v2910, %v3121
          %v3219 = vmul.f32 %v2911, %v3121
          %v3220 = vmul.f32 %v2912, %v3121
          %v3221 = vmul.f32 %v2913, %v3121
          %v3222 = vmul.f32 %v2914, %v3125
          %v3223 = vmul.f32 %v2915, %v3125
          %v3224 = vmul.f32 %v2916, %v3125
          %v3225 = vmul.f32 %v2917, %v3125
          %v3226 = vmul.f32 %v2918, %v3125
          %v3227 = vmul.f32 %v2919, %v3125
          %v3228 = vmul.f32 %v2920, %v3125
          %v3229 = vmul.f32 %v2921, %v3125
          %v3230 = vmul.f32 %v2922, %v3129
          %v3231 = vmul.f32 %v2923, %v3129
          %v3232 = vmul.f32 %v2924, %v3129
          %v3233 = vmul.f32 %v2925, %v3129
          %v3234 = vmul.f32 %v2926, %v3129
          %v3235 = vmul.f32 %v2927, %v3129
          %v3236 = vmul.f32 %v2928, %v3129
          %v3237 = vmul.f32 %v2929, %v3129
          %v3238 = vmul.f32 %v2930, %v3133
          %v3239 = vmul.f32 %v2931, %v3133
          %v3240 = vmul.f32 %v2932, %v3133
          %v3241 = vmul.f32 %v2933, %v3133
          %v3242 = vmul.f32 %v2934, %v3133
          %v3243 = vmul.f32 %v2935, %v3133
          %v3244 = vmul.f32 %v2936, %v3133
          %v3245 = vmul.f32 %v2937, %v3133
          %v3246 = vmul.f32 %v2938, %v3137
          %v3247 = vmul.f32 %v2939, %v3137
          %v3248 = vmul.f32 %v2940, %v3137
          %v3249 = vmul.f32 %v2941, %v3137
          %v3250 = vmul.f32 %v2942, %v3137
          %v3251 = vmul.f32 %v2943, %v3137
          %v3252 = vmul.f32 %v2944, %v3137
          %v3253 = vmul.f32 %v2945, %v3137
          %v3254 = vmul.f32 %v2946, %v3141
          %v3255 = vmul.f32 %v2947, %v3141
          %v3256 = vmul.f32 %v2948, %v3141
          %v3257 = vmul.f32 %v2949, %v3141
          %v3258 = vmul.f32 %v2950, %v3141
          %v3259 = vmul.f32 %v2951, %v3141
          %v3260 = vmul.f32 %v2952, %v3141
          %v3261 = vmul.f32 %v2953, %v3141
          %v3262 = vmul.f32 %v2954, %v3145
          %v3263 = vmul.f32 %v2955, %v3145
          %v3264 = vmul.f32 %v2956, %v3145
          %v3265 = vmul.f32 %v2957, %v3145
          %v3266 = vmul.f32 %v2958, %v3145
          %v3267 = vmul.f32 %v2959, %v3145
          %v3268 = vmul.f32 %v2960, %v3145
          %v3269 = vmul.f32 %v2961, %v3145
          %v3270 = vmul.f32 %v2962, %v3149
          %v3271 = vmul.f32 %v2963, %v3149
          %v3272 = vmul.f32 %v2964, %v3149
          %v3273 = vmul.f32 %v2965, %v3149
          %v3274 = vmul.f32 %v2966, %v3149
          %v3275 = vmul.f32 %v2967, %v3149
          %v3276 = vmul.f32 %v2968, %v3149
          %v3277 = vmul.f32 %v2969, %v3149
          %v3278 = vmul.f32 %v2970, %v3153
          %v3279 = vmul.f32 %v2971, %v3153
          %v3280 = vmul.f32 %v2972, %v3153
          %v3281 = vmul.f32 %v2973, %v3153
          %v3282 = vmul.f32 %v2974, %v3153
          %v3283 = vmul.f32 %v2975, %v3153
          %v3284 = vmul.f32 %v2976, %v3153
          %v3285 = vmul.f32 %v2977, %v3153
          %v3286 = vmul.f32 %v2978, %v3157
          %v3287 = vmul.f32 %v2979, %v3157
          %v3288 = vmul.f32 %v2980, %v3157
          %v3289 = vmul.f32 %v2981, %v3157
          %v3290 = vmul.f32 %v2982, %v3157
          %v3291 = vmul.f32 %v2983, %v3157
          %v3292 = vmul.f32 %v2984, %v3157
          %v3293 = vmul.f32 %v2985, %v3157
          %v3294 = vmul.f32 %v2986, %v3161
          %v3295 = vmul.f32 %v2987, %v3161
          %v3296 = vmul.f32 %v2988, %v3161
          %v3297 = vmul.f32 %v2989, %v3161
          %v3298 = vmul.f32 %v2990, %v3161
          %v3299 = vmul.f32 %v2991, %v3161
          %v3300 = vmul.f32 %v2992, %v3161
          %v3301 = vmul.f32 %v2993, %v3161
          %v3302 = vmul.f32 %v2994, %v3165
          %v3303 = vmul.f32 %v2995, %v3165
          %v3304 = vmul.f32 %v2996, %v3165
          %v3305 = vmul.f32 %v2997, %v3165
          %v3306 = vmul.f32 %v2998, %v3165
          %v3307 = vmul.f32 %v2999, %v3165
          %v3308 = vmul.f32 %v3000, %v3165
          %v3309 = vmul.f32 %v3001, %v3165
          %3310 = vadd.xlane.f32.xlu0 %v3182
          %v3311 = vpop.xlane.xlu0 %3310
          %3312 = vadd.xlane.f32.xlu0 %v3183
          %v3313 = vpop.xlane.xlu0 %3312
          %3314 = vadd.xlane.f32.xlu0 %v3184
          %v3315 = vpop.xlane.xlu0 %3314
          %3316 = vadd.xlane.f32.xlu0 %v3185
          %v3317 = vpop.xlane.xlu0 %3316
          %3318 = vadd.xlane.f32.xlu0 %v3186
          %v3319 = vpop.xlane.xlu0 %3318
          %3320 = vadd.xlane.f32.xlu0 %v3187
          %v3321 = vpop.xlane.xlu0 %3320
          %3322 = vadd.xlane.f32.xlu0 %v3188
          %v3323 = vpop.xlane.xlu0 %3322
          %3324 = vadd.xlane.f32.xlu0 %v3189
          %v3325 = vpop.xlane.xlu0 %3324
          %3326 = vadd.xlane.f32.xlu0 %v3190
          %v3327 = vpop.xlane.xlu0 %3326
          %3328 = vadd.xlane.f32.xlu0 %v3191
          %v3329 = vpop.xlane.xlu0 %3328
          %3330 = vadd.xlane.f32.xlu0 %v3192
          %v3331 = vpop.xlane.xlu0 %3330
          %3332 = vadd.xlane.f32.xlu0 %v3193
          %v3333 = vpop.xlane.xlu0 %3332
          %3334 = vadd.xlane.f32.xlu0 %v3194
          %v3335 = vpop.xlane.xlu0 %3334
          %3336 = vadd.xlane.f32.xlu0 %v3195
          %v3337 = vpop.xlane.xlu0 %3336
          %3338 = vadd.xlane.f32.xlu0 %v3196
          %v3339 = vpop.xlane.xlu0 %3338
          %3340 = vadd.xlane.f32.xlu0 %v3197
          %v3341 = vpop.xlane.xlu0 %3340
          %3342 = vadd.xlane.f32.xlu0 %v3198
          %v3343 = vpop.xlane.xlu0 %3342
          %3344 = vadd.xlane.f32.xlu0 %v3199
          %v3345 = vpop.xlane.xlu0 %3344
          %3346 = vadd.xlane.f32.xlu0 %v3200
          %v3347 = vpop.xlane.xlu0 %3346
          %3348 = vadd.xlane.f32.xlu0 %v3201
          %v3349 = vpop.xlane.xlu0 %3348
          %3350 = vadd.xlane.f32.xlu0 %v3202
          %v3351 = vpop.xlane.xlu0 %3350
          %3352 = vadd.xlane.f32.xlu0 %v3203
          %v3353 = vpop.xlane.xlu0 %3352
          %3354 = vadd.xlane.f32.xlu0 %v3204
          %v3355 = vpop.xlane.xlu0 %3354
          %3356 = vadd.xlane.f32.xlu0 %v3205
          %v3357 = vpop.xlane.xlu0 %3356
          %3358 = vadd.xlane.f32.xlu0 %v3206
          %v3359 = vpop.xlane.xlu0 %3358
          %3360 = vadd.xlane.f32.xlu0 %v3207
          %v3361 = vpop.xlane.xlu0 %3360
          %3362 = vadd.xlane.f32.xlu0 %v3208
          %v3363 = vpop.xlane.xlu0 %3362
          %3364 = vadd.xlane.f32.xlu0 %v3209
          %v3365 = vpop.xlane.xlu0 %3364
          %3366 = vadd.xlane.f32.xlu0 %v3210
          %v3367 = vpop.xlane.xlu0 %3366
          %3368 = vadd.xlane.f32.xlu0 %v3211
          %v3369 = vpop.xlane.xlu0 %3368
          %3370 = vadd.xlane.f32.xlu0 %v3212
          %v3371 = vpop.xlane.xlu0 %3370
          %3372 = vadd.xlane.f32.xlu0 %v3213
          %v3373 = vpop.xlane.xlu0 %3372
          %3374 = vadd.xlane.f32.xlu0 %v3214
          %v3375 = vpop.xlane.xlu0 %3374
          %3376 = vadd.xlane.f32.xlu0 %v3215
          %v3377 = vpop.xlane.xlu0 %3376
          %3378 = vadd.xlane.f32.xlu0 %v3216
          %v3379 = vpop.xlane.xlu0 %3378
          %3380 = vadd.xlane.f32.xlu0 %v3217
          %v3381 = vpop.xlane.xlu0 %3380
          %3382 = vadd.xlane.f32.xlu0 %v3218
          %v3383 = vpop.xlane.xlu0 %3382
          %3384 = vadd.xlane.f32.xlu0 %v3219
          %v3385 = vpop.xlane.xlu0 %3384
          %3386 = vadd.xlane.f32.xlu0 %v3220
          %v3387 = vpop.xlane.xlu0 %3386
          %3388 = vadd.xlane.f32.xlu0 %v3221
          %v3389 = vpop.xlane.xlu0 %3388
          %3390 = vadd.xlane.f32.xlu0 %v3222
          %v3391 = vpop.xlane.xlu0 %3390
          %3392 = vadd.xlane.f32.xlu0 %v3223
          %v3393 = vpop.xlane.xlu0 %3392
          %3394 = vadd.xlane.f32.xlu0 %v3224
          %v3395 = vpop.xlane.xlu0 %3394
          %3396 = vadd.xlane.f32.xlu0 %v3225
          %v3397 = vpop.xlane.xlu0 %3396
          %3398 = vadd.xlane.f32.xlu0 %v3226
          %v3399 = vpop.xlane.xlu0 %3398
          %3400 = vadd.xlane.f32.xlu0 %v3227
          %v3401 = vpop.xlane.xlu0 %3400
          %3402 = vadd.xlane.f32.xlu0 %v3228
          %v3403 = vpop.xlane.xlu0 %3402
          %3404 = vadd.xlane.f32.xlu0 %v3229
          %v3405 = vpop.xlane.xlu0 %3404
          %3406 = vadd.xlane.f32.xlu0 %v3230
          %v3407 = vpop.xlane.xlu0 %3406
          %3408 = vadd.xlane.f32.xlu0 %v3231
          %v3409 = vpop.xlane.xlu0 %3408
          %3410 = vadd.xlane.f32.xlu0 %v3232
          %v3411 = vpop.xlane.xlu0 %3410
          %3412 = vadd.xlane.f32.xlu0 %v3233
          %v3413 = vpop.xlane.xlu0 %3412
          %3414 = vadd.xlane.f32.xlu0 %v3234
          %v3415 = vpop.xlane.xlu0 %3414
          %3416 = vadd.xlane.f32.xlu0 %v3235
          %v3417 = vpop.xlane.xlu0 %3416
          %3418 = vadd.xlane.f32.xlu0 %v3236
          %v3419 = vpop.xlane.xlu0 %3418
          %3420 = vadd.xlane.f32.xlu0 %v3237
          %v3421 = vpop.xlane.xlu0 %3420
          %3422 = vadd.xlane.f32.xlu0 %v3238
          %v3423 = vpop.xlane.xlu0 %3422
          %3424 = vadd.xlane.f32.xlu0 %v3239
          %v3425 = vpop.xlane.xlu0 %3424
          %3426 = vadd.xlane.f32.xlu0 %v3240
          %v3427 = vpop.xlane.xlu0 %3426
          %3428 = vadd.xlane.f32.xlu0 %v3241
          %v3429 = vpop.xlane.xlu0 %3428
          %3430 = vadd.xlane.f32.xlu0 %v3242
          %v3431 = vpop.xlane.xlu0 %3430
          %3432 = vadd.xlane.f32.xlu0 %v3243
          %v3433 = vpop.xlane.xlu0 %3432
          %3434 = vadd.xlane.f32.xlu0 %v3244
          %v3435 = vpop.xlane.xlu0 %3434
          %3436 = vadd.xlane.f32.xlu0 %v3245
          %v3437 = vpop.xlane.xlu0 %3436
          %3438 = vadd.xlane.f32.xlu0 %v3246
          %v3439 = vpop.xlane.xlu0 %3438
          %3440 = vadd.xlane.f32.xlu0 %v3247
          %v3441 = vpop.xlane.xlu0 %3440
          %3442 = vadd.xlane.f32.xlu0 %v3248
          %v3443 = vpop.xlane.xlu0 %3442
          %3444 = vadd.xlane.f32.xlu0 %v3249
          %v3445 = vpop.xlane.xlu0 %3444
          %3446 = vadd.xlane.f32.xlu0 %v3250
          %v3447 = vpop.xlane.xlu0 %3446
          %3448 = vadd.xlane.f32.xlu0 %v3251
          %v3449 = vpop.xlane.xlu0 %3448
          %3450 = vadd.xlane.f32.xlu0 %v3252
          %v3451 = vpop.xlane.xlu0 %3450
          %3452 = vadd.xlane.f32.xlu0 %v3253
          %v3453 = vpop.xlane.xlu0 %3452
          %3454 = vadd.xlane.f32.xlu0 %v3254
          %v3455 = vpop.xlane.xlu0 %3454
          %3456 = vadd.xlane.f32.xlu0 %v3255
          %v3457 = vpop.xlane.xlu0 %3456
          %3458 = vadd.xlane.f32.xlu0 %v3256
          %v3459 = vpop.xlane.xlu0 %3458
          %3460 = vadd.xlane.f32.xlu0 %v3257
          %v3461 = vpop.xlane.xlu0 %3460
          %3462 = vadd.xlane.f32.xlu0 %v3258
          %v3463 = vpop.xlane.xlu0 %3462
          %3464 = vadd.xlane.f32.xlu0 %v3259
          %v3465 = vpop.xlane.xlu0 %3464
          %3466 = vadd.xlane.f32.xlu0 %v3260
          %v3467 = vpop.xlane.xlu0 %3466
          %3468 = vadd.xlane.f32.xlu0 %v3261
          %v3469 = vpop.xlane.xlu0 %3468
          %3470 = vadd.xlane.f32.xlu0 %v3262
          %v3471 = vpop.xlane.xlu0 %3470
          %3472 = vadd.xlane.f32.xlu0 %v3263
          %v3473 = vpop.xlane.xlu0 %3472
          %3474 = vadd.xlane.f32.xlu0 %v3264
          %v3475 = vpop.xlane.xlu0 %3474
          %3476 = vadd.xlane.f32.xlu0 %v3265
          %v3477 = vpop.xlane.xlu0 %3476
          %3478 = vadd.xlane.f32.xlu0 %v3266
          %v3479 = vpop.xlane.xlu0 %3478
          %3480 = vadd.xlane.f32.xlu0 %v3267
          %v3481 = vpop.xlane.xlu0 %3480
          %3482 = vadd.xlane.f32.xlu0 %v3268
          %v3483 = vpop.xlane.xlu0 %3482
          %3484 = vadd.xlane.f32.xlu0 %v3269
          %v3485 = vpop.xlane.xlu0 %3484
          %3486 = vadd.xlane.f32.xlu0 %v3270
          %v3487 = vpop.xlane.xlu0 %3486
          %3488 = vadd.xlane.f32.xlu0 %v3271
          %v3489 = vpop.xlane.xlu0 %3488
          %3490 = vadd.xlane.f32.xlu0 %v3272
          %v3491 = vpop.xlane.xlu0 %3490
          %3492 = vadd.xlane.f32.xlu0 %v3273
          %v3493 = vpop.xlane.xlu0 %3492
          %3494 = vadd.xlane.f32.xlu0 %v3274
          %v3495 = vpop.xlane.xlu0 %3494
          %3496 = vadd.xlane.f32.xlu0 %v3275
          %v3497 = vpop.xlane.xlu0 %3496
          %3498 = vadd.xlane.f32.xlu0 %v3276
          %v3499 = vpop.xlane.xlu0 %3498
          %3500 = vadd.xlane.f32.xlu0 %v3277
          %v3501 = vpop.xlane.xlu0 %3500
          %3502 = vadd.xlane.f32.xlu0 %v3278
          %v3503 = vpop.xlane.xlu0 %3502
          %3504 = vadd.xlane.f32.xlu0 %v3279
          %v3505 = vpop.xlane.xlu0 %3504
          %3506 = vadd.xlane.f32.xlu0 %v3280
          %v3507 = vpop.xlane.xlu0 %3506
          %3508 = vadd.xlane.f32.xlu0 %v3281
          %v3509 = vpop.xlane.xlu0 %3508
          %3510 = vadd.xlane.f32.xlu0 %v3282
          %v3511 = vpop.xlane.xlu0 %3510
          %3512 = vadd.xlane.f32.xlu0 %v3283
          %v3513 = vpop.xlane.xlu0 %3512
          %3514 = vadd.xlane.f32.xlu0 %v3284
          %v3515 = vpop.xlane.xlu0 %3514
          %3516 = vadd.xlane.f32.xlu0 %v3285
          %v3517 = vpop.xlane.xlu0 %3516
          %3518 = vadd.xlane.f32.xlu0 %v3286
          %v3519 = vpop.xlane.xlu0 %3518
          %3520 = vadd.xlane.f32.xlu0 %v3287
          %v3521 = vpop.xlane.xlu0 %3520
          %3522 = vadd.xlane.f32.xlu0 %v3288
          %v3523 = vpop.xlane.xlu0 %3522
          %3524 = vadd.xlane.f32.xlu0 %v3289
          %v3525 = vpop.xlane.xlu0 %3524
          %3526 = vadd.xlane.f32.xlu0 %v3290
          %v3527 = vpop.xlane.xlu0 %3526
          %3528 = vadd.xlane.f32.xlu0 %v3291
          %v3529 = vpop.xlane.xlu0 %3528
          %3530 = vadd.xlane.f32.xlu0 %v3292
          %v3531 = vpop.xlane.xlu0 %3530
          %3532 = vadd.xlane.f32.xlu0 %v3293
          %v3533 = vpop.xlane.xlu0 %3532
          %3534 = vadd.xlane.f32.xlu0 %v3294
          %v3535 = vpop.xlane.xlu0 %3534
          %3536 = vadd.xlane.f32.xlu0 %v3295
          %v3537 = vpop.xlane.xlu0 %3536
          %3538 = vadd.xlane.f32.xlu0 %v3296
          %v3539 = vpop.xlane.xlu0 %3538
          %3540 = vadd.xlane.f32.xlu0 %v3297
          %v3541 = vpop.xlane.xlu0 %3540
          %3542 = vadd.xlane.f32.xlu0 %v3298
          %v3543 = vpop.xlane.xlu0 %3542
          %3544 = vadd.xlane.f32.xlu0 %v3299
          %v3545 = vpop.xlane.xlu0 %3544
          %3546 = vadd.xlane.f32.xlu0 %v3300
          %v3547 = vpop.xlane.xlu0 %3546
          %3548 = vadd.xlane.f32.xlu0 %v3301
          %v3549 = vpop.xlane.xlu0 %3548
          %3550 = vadd.xlane.f32.xlu0 %v3302
          %v3551 = vpop.xlane.xlu0 %3550
          %3552 = vadd.xlane.f32.xlu0 %v3303
          %v3553 = vpop.xlane.xlu0 %3552
          %3554 = vadd.xlane.f32.xlu0 %v3304
          %v3555 = vpop.xlane.xlu0 %3554
          %3556 = vadd.xlane.f32.xlu0 %v3305
          %v3557 = vpop.xlane.xlu0 %3556
          %3558 = vadd.xlane.f32.xlu0 %v3306
          %v3559 = vpop.xlane.xlu0 %3558
          %3560 = vadd.xlane.f32.xlu0 %v3307
          %v3561 = vpop.xlane.xlu0 %3560
          %3562 = vadd.xlane.f32.xlu0 %v3308
          %v3563 = vpop.xlane.xlu0 %3562
          %3564 = vadd.xlane.f32.xlu0 %v3309
          %v3565 = vpop.xlane.xlu0 %3564
          %v3566 = vadd.f32 %v3311, 0.0
          %v3567 = vadd.f32 %v3313, 0.0
          %v3568 = vadd.f32 %v3315, 0.0
          %v3569 = vadd.f32 %v3317, 0.0
          %v3570 = vadd.f32 %v3319, 0.0
          %v3571 = vadd.f32 %v3321, 0.0
          %v3572 = vadd.f32 %v3323, 0.0
          %v3573 = vadd.f32 %v3325, 0.0
          %v3574 = vadd.f32 %v3327, 0.0
          %v3575 = vadd.f32 %v3329, 0.0
          %v3576 = vadd.f32 %v3331, 0.0
          %v3577 = vadd.f32 %v3333, 0.0
          %v3578 = vadd.f32 %v3335, 0.0
          %v3579 = vadd.f32 %v3337, 0.0
          %v3580 = vadd.f32 %v3339, 0.0
          %v3581 = vadd.f32 %v3341, 0.0
          %v3582 = vadd.f32 %v3343, 0.0
          %v3583 = vadd.f32 %v3345, 0.0
          %v3584 = vadd.f32 %v3347, 0.0
          %v3585 = vadd.f32 %v3349, 0.0
          %v3586 = vadd.f32 %v3351, 0.0
          %v3587 = vadd.f32 %v3353, 0.0
          %v3588 = vadd.f32 %v3355, 0.0
          %v3589 = vadd.f32 %v3357, 0.0
          %v3590 = vadd.f32 %v3359, 0.0
          %v3591 = vadd.f32 %v3361, 0.0
          %v3592 = vadd.f32 %v3363, 0.0
          %v3593 = vadd.f32 %v3365, 0.0
          %v3594 = vadd.f32 %v3367, 0.0
          %v3595 = vadd.f32 %v3369, 0.0
          %v3596 = vadd.f32 %v3371, 0.0
          %v3597 = vadd.f32 %v3373, 0.0
          %v3598 = vadd.f32 %v3375, 0.0
          %v3599 = vadd.f32 %v3377, 0.0
          %v3600 = vadd.f32 %v3379, 0.0
          %v3601 = vadd.f32 %v3381, 0.0
          %v3602 = vadd.f32 %v3383, 0.0
          %v3603 = vadd.f32 %v3385, 0.0
          %v3604 = vadd.f32 %v3387, 0.0
          %v3605 = vadd.f32 %v3389, 0.0
          %v3606 = vadd.f32 %v3391, 0.0
          %v3607 = vadd.f32 %v3393, 0.0
          %v3608 = vadd.f32 %v3395, 0.0
          %v3609 = vadd.f32 %v3397, 0.0
          %v3610 = vadd.f32 %v3399, 0.0
          %v3611 = vadd.f32 %v3401, 0.0
          %v3612 = vadd.f32 %v3403, 0.0
          %v3613 = vadd.f32 %v3405, 0.0
          %v3614 = vadd.f32 %v3407, 0.0
          %v3615 = vadd.f32 %v3409, 0.0
          %v3616 = vadd.f32 %v3411, 0.0
          %v3617 = vadd.f32 %v3413, 0.0
          %v3618 = vadd.f32 %v3415, 0.0
          %v3619 = vadd.f32 %v3417, 0.0
          %v3620 = vadd.f32 %v3419, 0.0
          %v3621 = vadd.f32 %v3421, 0.0
          %v3622 = vadd.f32 %v3423, 0.0
          %v3623 = vadd.f32 %v3425, 0.0
          %v3624 = vadd.f32 %v3427, 0.0
          %v3625 = vadd.f32 %v3429, 0.0
          %v3626 = vadd.f32 %v3431, 0.0
          %v3627 = vadd.f32 %v3433, 0.0
          %v3628 = vadd.f32 %v3435, 0.0
          %v3629 = vadd.f32 %v3437, 0.0
          %v3630 = vadd.f32 %v3439, 0.0
          %v3631 = vadd.f32 %v3441, 0.0
          %v3632 = vadd.f32 %v3443, 0.0
          %v3633 = vadd.f32 %v3445, 0.0
          %v3634 = vadd.f32 %v3447, 0.0
          %v3635 = vadd.f32 %v3449, 0.0
          %v3636 = vadd.f32 %v3451, 0.0
          %v3637 = vadd.f32 %v3453, 0.0
          %v3638 = vadd.f32 %v3455, 0.0
          %v3639 = vadd.f32 %v3457, 0.0
          %v3640 = vadd.f32 %v3459, 0.0
          %v3641 = vadd.f32 %v3461, 0.0
          %v3642 = vadd.f32 %v3463, 0.0
          %v3643 = vadd.f32 %v3465, 0.0
          %v3644 = vadd.f32 %v3467, 0.0
          %v3645 = vadd.f32 %v3469, 0.0
          %v3646 = vadd.f32 %v3471, 0.0
          %v3647 = vadd.f32 %v3473, 0.0
          %v3648 = vadd.f32 %v3475, 0.0
          %v3649 = vadd.f32 %v3477, 0.0
          %v3650 = vadd.f32 %v3479, 0.0
          %v3651 = vadd.f32 %v3481, 0.0
          %v3652 = vadd.f32 %v3483, 0.0
          %v3653 = vadd.f32 %v3485, 0.0
          %v3654 = vadd.f32 %v3487, 0.0
          %v3655 = vadd.f32 %v3489, 0.0
          %v3656 = vadd.f32 %v3491, 0.0
          %v3657 = vadd.f32 %v3493, 0.0
          %v3658 = vadd.f32 %v3495, 0.0
          %v3659 = vadd.f32 %v3497, 0.0
          %v3660 = vadd.f32 %v3499, 0.0
          %v3661 = vadd.f32 %v3501, 0.0
          %v3662 = vadd.f32 %v3503, 0.0
          %v3663 = vadd.f32 %v3505, 0.0
          %v3664 = vadd.f32 %v3507, 0.0
          %v3665 = vadd.f32 %v3509, 0.0
          %v3666 = vadd.f32 %v3511, 0.0
          %v3667 = vadd.f32 %v3513, 0.0
          %v3668 = vadd.f32 %v3515, 0.0
          %v3669 = vadd.f32 %v3517, 0.0
          %v3670 = vadd.f32 %v3519, 0.0
          %v3671 = vadd.f32 %v3521, 0.0
          %v3672 = vadd.f32 %v3523, 0.0
          %v3673 = vadd.f32 %v3525, 0.0
          %v3674 = vadd.f32 %v3527, 0.0
          %v3675 = vadd.f32 %v3529, 0.0
          %v3676 = vadd.f32 %v3531, 0.0
          %v3677 = vadd.f32 %v3533, 0.0
          %v3678 = vadd.f32 %v3535, 0.0
          %v3679 = vadd.f32 %v3537, 0.0
          %v3680 = vadd.f32 %v3539, 0.0
          %v3681 = vadd.f32 %v3541, 0.0
          %v3682 = vadd.f32 %v3543, 0.0
          %v3683 = vadd.f32 %v3545, 0.0
          %v3684 = vadd.f32 %v3547, 0.0
          %v3685 = vadd.f32 %v3549, 0.0
          %v3686 = vadd.f32 %v3551, 0.0
          %v3687 = vadd.f32 %v3553, 0.0
          %v3688 = vadd.f32 %v3555, 0.0
          %v3689 = vadd.f32 %v3557, 0.0
          %v3690 = vadd.f32 %v3559, 0.0
          %v3691 = vadd.f32 %v3561, 0.0
          %v3692 = vadd.f32 %v3563, 0.0
          %v3693 = vadd.f32 %v3565, 0.0
          %3695 = vset.pattern.permute.xlu0 0
          %3696 = vperm.xlu0 %3695, %v2413
          %v3697 = vpop.permute.xlu0 %3696
          %3699 = vset.pattern.permute.xlu0 0
          %3700 = vperm.xlu0 %3699, %v2414
          %v3701 = vpop.permute.xlu0 %3700
          %v3702 = vlaneseq
          %v3703 = vshrl.u32 %v3702, 7
          %v3704 = vsub.s32 0, %v3703
          %v3705 = vrot.slane %v3697, %v3704
          %v3706 = vlaneseq
          %v3707 = vshrl.u32 %v3706, 7
          %v3708 = vsub.s32 1, %v3707
          %v3709 = vrot.slane %v3697, %v3708
          %v3710 = vlaneseq
          %v3711 = vshrl.u32 %v3710, 7
          %v3712 = vsub.s32 2, %v3711
          %v3713 = vrot.slane %v3697, %v3712
          %v3714 = vlaneseq
          %v3715 = vshrl.u32 %v3714, 7
          %v3716 = vsub.s32 3, %v3715
          %v3717 = vrot.slane %v3697, %v3716
          %v3718 = vlaneseq
          %v3719 = vshrl.u32 %v3718, 7
          %v3720 = vsub.s32 4, %v3719
          %v3721 = vrot.slane %v3697, %v3720
          %v3722 = vlaneseq
          %v3723 = vshrl.u32 %v3722, 7
          %v3724 = vsub.s32 5, %v3723
          %v3725 = vrot.slane %v3697, %v3724
          %v3726 = vlaneseq
          %v3727 = vshrl.u32 %v3726, 7
          %v3728 = vsub.s32 6, %v3727
          %v3729 = vrot.slane %v3697, %v3728
          %v3730 = vlaneseq
          %v3731 = vshrl.u32 %v3730, 7
          %v3732 = vsub.s32 7, %v3731
          %v3733 = vrot.slane %v3697, %v3732
          %v3734 = vlaneseq
          %v3735 = vshrl.u32 %v3734, 7
          %v3736 = vsub.s32 0, %v3735
          %v3737 = vrot.slane %v3701, %v3736
          %v3738 = vlaneseq
          %v3739 = vshrl.u32 %v3738, 7
          %v3740 = vsub.s32 1, %v3739
          %v3741 = vrot.slane %v3701, %v3740
          %v3742 = vlaneseq
          %v3743 = vshrl.u32 %v3742, 7
          %v3744 = vsub.s32 2, %v3743
          %v3745 = vrot.slane %v3701, %v3744
          %v3746 = vlaneseq
          %v3747 = vshrl.u32 %v3746, 7
          %v3748 = vsub.s32 3, %v3747
          %v3749 = vrot.slane %v3701, %v3748
          %v3750 = vlaneseq
          %v3751 = vshrl.u32 %v3750, 7
          %v3752 = vsub.s32 4, %v3751
          %v3753 = vrot.slane %v3701, %v3752
          %v3754 = vlaneseq
          %v3755 = vshrl.u32 %v3754, 7
          %v3756 = vsub.s32 5, %v3755
          %v3757 = vrot.slane %v3701, %v3756
          %v3758 = vlaneseq
          %v3759 = vshrl.u32 %v3758, 7
          %v3760 = vsub.s32 6, %v3759
          %v3761 = vrot.slane %v3701, %v3760
          %v3762 = vlaneseq
          %v3763 = vshrl.u32 %v3762, 7
          %v3764 = vsub.s32 7, %v3763
          %v3765 = vrot.slane %v3701, %v3764
          %v3782 = vadd.f32 %v3566, %v3705
          %v3783 = vadd.f32 %v3567, %v3705
          %v3784 = vadd.f32 %v3568, %v3705
          %v3785 = vadd.f32 %v3569, %v3705
          %v3786 = vadd.f32 %v3570, %v3705
          %v3787 = vadd.f32 %v3571, %v3705
          %v3788 = vadd.f32 %v3572, %v3705
          %v3789 = vadd.f32 %v3573, %v3705
          %v3790 = vadd.f32 %v3574, %v3709
          %v3791 = vadd.f32 %v3575, %v3709
          %v3792 = vadd.f32 %v3576, %v3709
          %v3793 = vadd.f32 %v3577, %v3709
          %v3794 = vadd.f32 %v3578, %v3709
          %v3795 = vadd.f32 %v3579, %v3709
          %v3796 = vadd.f32 %v3580, %v3709
          %v3797 = vadd.f32 %v3581, %v3709
          %v3798 = vadd.f32 %v3582, %v3713
          %v3799 = vadd.f32 %v3583, %v3713
          %v3800 = vadd.f32 %v3584, %v3713
          %v3801 = vadd.f32 %v3585, %v3713
          %v3802 = vadd.f32 %v3586, %v3713
          %v3803 = vadd.f32 %v3587, %v3713
          %v3804 = vadd.f32 %v3588, %v3713
          %v3805 = vadd.f32 %v3589, %v3713
          %v3806 = vadd.f32 %v3590, %v3717
          %v3807 = vadd.f32 %v3591, %v3717
          %v3808 = vadd.f32 %v3592, %v3717
          %v3809 = vadd.f32 %v3593, %v3717
          %v3810 = vadd.f32 %v3594, %v3717
          %v3811 = vadd.f32 %v3595, %v3717
          %v3812 = vadd.f32 %v3596, %v3717
          %v3813 = vadd.f32 %v3597, %v3717
          %v3814 = vadd.f32 %v3598, %v3721
          %v3815 = vadd.f32 %v3599, %v3721
          %v3816 = vadd.f32 %v3600, %v3721
          %v3817 = vadd.f32 %v3601, %v3721
          %v3818 = vadd.f32 %v3602, %v3721
          %v3819 = vadd.f32 %v3603, %v3721
          %v3820 = vadd.f32 %v3604, %v3721
          %v3821 = vadd.f32 %v3605, %v3721
          %v3822 = vadd.f32 %v3606, %v3725
          %v3823 = vadd.f32 %v3607, %v3725
          %v3824 = vadd.f32 %v3608, %v3725
          %v3825 = vadd.f32 %v3609, %v3725
          %v3826 = vadd.f32 %v3610, %v3725
          %v3827 = vadd.f32 %v3611, %v3725
          %v3828 = vadd.f32 %v3612, %v3725
          %v3829 = vadd.f32 %v3613, %v3725
          %v3830 = vadd.f32 %v3614, %v3729
          %v3831 = vadd.f32 %v3615, %v3729
          %v3832 = vadd.f32 %v3616, %v3729
          %v3833 = vadd.f32 %v3617, %v3729
          %v3834 = vadd.f32 %v3618, %v3729
          %v3835 = vadd.f32 %v3619, %v3729
          %v3836 = vadd.f32 %v3620, %v3729
          %v3837 = vadd.f32 %v3621, %v3729
          %v3838 = vadd.f32 %v3622, %v3733
          %v3839 = vadd.f32 %v3623, %v3733
          %v3840 = vadd.f32 %v3624, %v3733
          %v3841 = vadd.f32 %v3625, %v3733
          %v3842 = vadd.f32 %v3626, %v3733
          %v3843 = vadd.f32 %v3627, %v3733
          %v3844 = vadd.f32 %v3628, %v3733
          %v3845 = vadd.f32 %v3629, %v3733
          %v3846 = vadd.f32 %v3630, %v3737
          %v3847 = vadd.f32 %v3631, %v3737
          %v3848 = vadd.f32 %v3632, %v3737
          %v3849 = vadd.f32 %v3633, %v3737
          %v3850 = vadd.f32 %v3634, %v3737
          %v3851 = vadd.f32 %v3635, %v3737
          %v3852 = vadd.f32 %v3636, %v3737
          %v3853 = vadd.f32 %v3637, %v3737
          %v3854 = vadd.f32 %v3638, %v3741
          %v3855 = vadd.f32 %v3639, %v3741
          %v3856 = vadd.f32 %v3640, %v3741
          %v3857 = vadd.f32 %v3641, %v3741
          %v3858 = vadd.f32 %v3642, %v3741
          %v3859 = vadd.f32 %v3643, %v3741
          %v3860 = vadd.f32 %v3644, %v3741
          %v3861 = vadd.f32 %v3645, %v3741
          %v3862 = vadd.f32 %v3646, %v3745
          %v3863 = vadd.f32 %v3647, %v3745
          %v3864 = vadd.f32 %v3648, %v3745
          %v3865 = vadd.f32 %v3649, %v3745
          %v3866 = vadd.f32 %v3650, %v3745
          %v3867 = vadd.f32 %v3651, %v3745
          %v3868 = vadd.f32 %v3652, %v3745
          %v3869 = vadd.f32 %v3653, %v3745
          %v3870 = vadd.f32 %v3654, %v3749
          %v3871 = vadd.f32 %v3655, %v3749
          %v3872 = vadd.f32 %v3656, %v3749
          %v3873 = vadd.f32 %v3657, %v3749
          %v3874 = vadd.f32 %v3658, %v3749
          %v3875 = vadd.f32 %v3659, %v3749
          %v3876 = vadd.f32 %v3660, %v3749
          %v3877 = vadd.f32 %v3661, %v3749
          %v3878 = vadd.f32 %v3662, %v3753
          %v3879 = vadd.f32 %v3663, %v3753
          %v3880 = vadd.f32 %v3664, %v3753
          %v3881 = vadd.f32 %v3665, %v3753
          %v3882 = vadd.f32 %v3666, %v3753
          %v3883 = vadd.f32 %v3667, %v3753
          %v3884 = vadd.f32 %v3668, %v3753
          %v3885 = vadd.f32 %v3669, %v3753
          %v3886 = vadd.f32 %v3670, %v3757
          %v3887 = vadd.f32 %v3671, %v3757
          %v3888 = vadd.f32 %v3672, %v3757
          %v3889 = vadd.f32 %v3673, %v3757
          %v3890 = vadd.f32 %v3674, %v3757
          %v3891 = vadd.f32 %v3675, %v3757
          %v3892 = vadd.f32 %v3676, %v3757
          %v3893 = vadd.f32 %v3677, %v3757
          %v3894 = vadd.f32 %v3678, %v3761
          %v3895 = vadd.f32 %v3679, %v3761
          %v3896 = vadd.f32 %v3680, %v3761
          %v3897 = vadd.f32 %v3681, %v3761
          %v3898 = vadd.f32 %v3682, %v3761
          %v3899 = vadd.f32 %v3683, %v3761
          %v3900 = vadd.f32 %v3684, %v3761
          %v3901 = vadd.f32 %v3685, %v3761
          %v3902 = vadd.f32 %v3686, %v3765
          %v3903 = vadd.f32 %v3687, %v3765
          %v3904 = vadd.f32 %v3688, %v3765
          %v3905 = vadd.f32 %v3689, %v3765
          %v3906 = vadd.f32 %v3690, %v3765
          %v3907 = vadd.f32 %v3691, %v3765
          %v3908 = vadd.f32 %v3692, %v3765
          %v3909 = vadd.f32 %v3693, %v3765
          %4038 = vset.pattern.permute.xlu0 0
          %4039 = vperm.xlu0 %4038, %v3782
          %v4040 = vpop.permute.xlu0 %4039
          %4041 = vset.pattern.permute.xlu0 0
          %4042 = vperm.xlu0 %4041, %v3783
          %v4043 = vpop.permute.xlu0 %4042
          %4044 = vset.pattern.permute.xlu0 0
          %4045 = vperm.xlu0 %4044, %v3784
          %v4046 = vpop.permute.xlu0 %4045
          %4047 = vset.pattern.permute.xlu0 0
          %4048 = vperm.xlu0 %4047, %v3785
          %v4049 = vpop.permute.xlu0 %4048
          %4050 = vset.pattern.permute.xlu0 0
          %4051 = vperm.xlu0 %4050, %v3786
          %v4052 = vpop.permute.xlu0 %4051
          %4053 = vset.pattern.permute.xlu0 0
          %4054 = vperm.xlu0 %4053, %v3787
          %v4055 = vpop.permute.xlu0 %4054
          %4056 = vset.pattern.permute.xlu0 0
          %4057 = vperm.xlu0 %4056, %v3788
          %v4058 = vpop.permute.xlu0 %4057
          %4059 = vset.pattern.permute.xlu0 0
          %4060 = vperm.xlu0 %4059, %v3789
          %v4061 = vpop.permute.xlu0 %4060
          %4062 = vset.pattern.permute.xlu0 0
          %4063 = vperm.xlu0 %4062, %v3790
          %v4064 = vpop.permute.xlu0 %4063
          %4065 = vset.pattern.permute.xlu0 0
          %4066 = vperm.xlu0 %4065, %v3791
          %v4067 = vpop.permute.xlu0 %4066
          %4068 = vset.pattern.permute.xlu0 0
          %4069 = vperm.xlu0 %4068, %v3792
          %v4070 = vpop.permute.xlu0 %4069
          %4071 = vset.pattern.permute.xlu0 0
          %4072 = vperm.xlu0 %4071, %v3793
          %v4073 = vpop.permute.xlu0 %4072
          %4074 = vset.pattern.permute.xlu0 0
          %4075 = vperm.xlu0 %4074, %v3794
          %v4076 = vpop.permute.xlu0 %4075
          %4077 = vset.pattern.permute.xlu0 0
          %4078 = vperm.xlu0 %4077, %v3795
          %v4079 = vpop.permute.xlu0 %4078
          %4080 = vset.pattern.permute.xlu0 0
          %4081 = vperm.xlu0 %4080, %v3796
          %v4082 = vpop.permute.xlu0 %4081
          %4083 = vset.pattern.permute.xlu0 0
          %4084 = vperm.xlu0 %4083, %v3797
          %v4085 = vpop.permute.xlu0 %4084
          %4086 = vset.pattern.permute.xlu0 0
          %4087 = vperm.xlu0 %4086, %v3798
          %v4088 = vpop.permute.xlu0 %4087
          %4089 = vset.pattern.permute.xlu0 0
          %4090 = vperm.xlu0 %4089, %v3799
          %v4091 = vpop.permute.xlu0 %4090
          %4092 = vset.pattern.permute.xlu0 0
          %4093 = vperm.xlu0 %4092, %v3800
          %v4094 = vpop.permute.xlu0 %4093
          %4095 = vset.pattern.permute.xlu0 0
          %4096 = vperm.xlu0 %4095, %v3801
          %v4097 = vpop.permute.xlu0 %4096
          %4098 = vset.pattern.permute.xlu0 0
          %4099 = vperm.xlu0 %4098, %v3802
          %v4100 = vpop.permute.xlu0 %4099
          %4101 = vset.pattern.permute.xlu0 0
          %4102 = vperm.xlu0 %4101, %v3803
          %v4103 = vpop.permute.xlu0 %4102
          %4104 = vset.pattern.permute.xlu0 0
          %4105 = vperm.xlu0 %4104, %v3804
          %v4106 = vpop.permute.xlu0 %4105
          %4107 = vset.pattern.permute.xlu0 0
          %4108 = vperm.xlu0 %4107, %v3805
          %v4109 = vpop.permute.xlu0 %4108
          %4110 = vset.pattern.permute.xlu0 0
          %4111 = vperm.xlu0 %4110, %v3806
          %v4112 = vpop.permute.xlu0 %4111
          %4113 = vset.pattern.permute.xlu0 0
          %4114 = vperm.xlu0 %4113, %v3807
          %v4115 = vpop.permute.xlu0 %4114
          %4116 = vset.pattern.permute.xlu0 0
          %4117 = vperm.xlu0 %4116, %v3808
          %v4118 = vpop.permute.xlu0 %4117
          %4119 = vset.pattern.permute.xlu0 0
          %4120 = vperm.xlu0 %4119, %v3809
          %v4121 = vpop.permute.xlu0 %4120
          %4122 = vset.pattern.permute.xlu0 0
          %4123 = vperm.xlu0 %4122, %v3810
          %v4124 = vpop.permute.xlu0 %4123
          %4125 = vset.pattern.permute.xlu0 0
          %4126 = vperm.xlu0 %4125, %v3811
          %v4127 = vpop.permute.xlu0 %4126
          %4128 = vset.pattern.permute.xlu0 0
          %4129 = vperm.xlu0 %4128, %v3812
          %v4130 = vpop.permute.xlu0 %4129
          %4131 = vset.pattern.permute.xlu0 0
          %4132 = vperm.xlu0 %4131, %v3813
          %v4133 = vpop.permute.xlu0 %4132
          %4134 = vset.pattern.permute.xlu0 0
          %4135 = vperm.xlu0 %4134, %v3814
          %v4136 = vpop.permute.xlu0 %4135
          %4137 = vset.pattern.permute.xlu0 0
          %4138 = vperm.xlu0 %4137, %v3815
          %v4139 = vpop.permute.xlu0 %4138
          %4140 = vset.pattern.permute.xlu0 0
          %4141 = vperm.xlu0 %4140, %v3816
          %v4142 = vpop.permute.xlu0 %4141
          %4143 = vset.pattern.permute.xlu0 0
          %4144 = vperm.xlu0 %4143, %v3817
          %v4145 = vpop.permute.xlu0 %4144
          %4146 = vset.pattern.permute.xlu0 0
          %4147 = vperm.xlu0 %4146, %v3818
          %v4148 = vpop.permute.xlu0 %4147
          %4149 = vset.pattern.permute.xlu0 0
          %4150 = vperm.xlu0 %4149, %v3819
          %v4151 = vpop.permute.xlu0 %4150
          %4152 = vset.pattern.permute.xlu0 0
          %4153 = vperm.xlu0 %4152, %v3820
          %v4154 = vpop.permute.xlu0 %4153
          %4155 = vset.pattern.permute.xlu0 0
          %4156 = vperm.xlu0 %4155, %v3821
          %v4157 = vpop.permute.xlu0 %4156
          %4158 = vset.pattern.permute.xlu0 0
          %4159 = vperm.xlu0 %4158, %v3822
          %v4160 = vpop.permute.xlu0 %4159
          %4161 = vset.pattern.permute.xlu0 0
          %4162 = vperm.xlu0 %4161, %v3823
          %v4163 = vpop.permute.xlu0 %4162
          %4164 = vset.pattern.permute.xlu0 0
          %4165 = vperm.xlu0 %4164, %v3824
          %v4166 = vpop.permute.xlu0 %4165
          %4167 = vset.pattern.permute.xlu0 0
          %4168 = vperm.xlu0 %4167, %v3825
          %v4169 = vpop.permute.xlu0 %4168
          %4170 = vset.pattern.permute.xlu0 0
          %4171 = vperm.xlu0 %4170, %v3826
          %v4172 = vpop.permute.xlu0 %4171
          %4173 = vset.pattern.permute.xlu0 0
          %4174 = vperm.xlu0 %4173, %v3827
          %v4175 = vpop.permute.xlu0 %4174
          %4176 = vset.pattern.permute.xlu0 0
          %4177 = vperm.xlu0 %4176, %v3828
          %v4178 = vpop.permute.xlu0 %4177
          %4179 = vset.pattern.permute.xlu0 0
          %4180 = vperm.xlu0 %4179, %v3829
          %v4181 = vpop.permute.xlu0 %4180
          %4182 = vset.pattern.permute.xlu0 0
          %4183 = vperm.xlu0 %4182, %v3830
          %v4184 = vpop.permute.xlu0 %4183
          %4185 = vset.pattern.permute.xlu0 0
          %4186 = vperm.xlu0 %4185, %v3831
          %v4187 = vpop.permute.xlu0 %4186
          %4188 = vset.pattern.permute.xlu0 0
          %4189 = vperm.xlu0 %4188, %v3832
          %v4190 = vpop.permute.xlu0 %4189
          %4191 = vset.pattern.permute.xlu0 0
          %4192 = vperm.xlu0 %4191, %v3833
          %v4193 = vpop.permute.xlu0 %4192
          %4194 = vset.pattern.permute.xlu0 0
          %4195 = vperm.xlu0 %4194, %v3834
          %v4196 = vpop.permute.xlu0 %4195
          %4197 = vset.pattern.permute.xlu0 0
          %4198 = vperm.xlu0 %4197, %v3835
          %v4199 = vpop.permute.xlu0 %4198
          %4200 = vset.pattern.permute.xlu0 0
          %4201 = vperm.xlu0 %4200, %v3836
          %v4202 = vpop.permute.xlu0 %4201
          %4203 = vset.pattern.permute.xlu0 0
          %4204 = vperm.xlu0 %4203, %v3837
          %v4205 = vpop.permute.xlu0 %4204
          %4206 = vset.pattern.permute.xlu0 0
          %4207 = vperm.xlu0 %4206, %v3838
          %v4208 = vpop.permute.xlu0 %4207
          %4209 = vset.pattern.permute.xlu0 0
          %4210 = vperm.xlu0 %4209, %v3839
          %v4211 = vpop.permute.xlu0 %4210
          %4212 = vset.pattern.permute.xlu0 0
          %4213 = vperm.xlu0 %4212, %v3840
          %v4214 = vpop.permute.xlu0 %4213
          %4215 = vset.pattern.permute.xlu0 0
          %4216 = vperm.xlu0 %4215, %v3841
          %v4217 = vpop.permute.xlu0 %4216
          %4218 = vset.pattern.permute.xlu0 0
          %4219 = vperm.xlu0 %4218, %v3842
          %v4220 = vpop.permute.xlu0 %4219
          %4221 = vset.pattern.permute.xlu0 0
          %4222 = vperm.xlu0 %4221, %v3843
          %v4223 = vpop.permute.xlu0 %4222
          %4224 = vset.pattern.permute.xlu0 0
          %4225 = vperm.xlu0 %4224, %v3844
          %v4226 = vpop.permute.xlu0 %4225
          %4227 = vset.pattern.permute.xlu0 0
          %4228 = vperm.xlu0 %4227, %v3845
          %v4229 = vpop.permute.xlu0 %4228
          %4230 = vset.pattern.permute.xlu0 0
          %4231 = vperm.xlu0 %4230, %v3846
          %v4232 = vpop.permute.xlu0 %4231
          %4233 = vset.pattern.permute.xlu0 0
          %4234 = vperm.xlu0 %4233, %v3847
          %v4235 = vpop.permute.xlu0 %4234
          %4236 = vset.pattern.permute.xlu0 0
          %4237 = vperm.xlu0 %4236, %v3848
          %v4238 = vpop.permute.xlu0 %4237
          %4239 = vset.pattern.permute.xlu0 0
          %4240 = vperm.xlu0 %4239, %v3849
          %v4241 = vpop.permute.xlu0 %4240
          %4242 = vset.pattern.permute.xlu0 0
          %4243 = vperm.xlu0 %4242, %v3850
          %v4244 = vpop.permute.xlu0 %4243
          %4245 = vset.pattern.permute.xlu0 0
          %4246 = vperm.xlu0 %4245, %v3851
          %v4247 = vpop.permute.xlu0 %4246
          %4248 = vset.pattern.permute.xlu0 0
          %4249 = vperm.xlu0 %4248, %v3852
          %v4250 = vpop.permute.xlu0 %4249
          %4251 = vset.pattern.permute.xlu0 0
          %4252 = vperm.xlu0 %4251, %v3853
          %v4253 = vpop.permute.xlu0 %4252
          %4254 = vset.pattern.permute.xlu0 0
          %4255 = vperm.xlu0 %4254, %v3854
          %v4256 = vpop.permute.xlu0 %4255
          %4257 = vset.pattern.permute.xlu0 0
          %4258 = vperm.xlu0 %4257, %v3855
          %v4259 = vpop.permute.xlu0 %4258
          %4260 = vset.pattern.permute.xlu0 0
          %4261 = vperm.xlu0 %4260, %v3856
          %v4262 = vpop.permute.xlu0 %4261
          %4263 = vset.pattern.permute.xlu0 0
          %4264 = vperm.xlu0 %4263, %v3857
          %v4265 = vpop.permute.xlu0 %4264
          %4266 = vset.pattern.permute.xlu0 0
          %4267 = vperm.xlu0 %4266, %v3858
          %v4268 = vpop.permute.xlu0 %4267
          %4269 = vset.pattern.permute.xlu0 0
          %4270 = vperm.xlu0 %4269, %v3859
          %v4271 = vpop.permute.xlu0 %4270
          %4272 = vset.pattern.permute.xlu0 0
          %4273 = vperm.xlu0 %4272, %v3860
          %v4274 = vpop.permute.xlu0 %4273
          %4275 = vset.pattern.permute.xlu0 0
          %4276 = vperm.xlu0 %4275, %v3861
          %v4277 = vpop.permute.xlu0 %4276
          %4278 = vset.pattern.permute.xlu0 0
          %4279 = vperm.xlu0 %4278, %v3862
          %v4280 = vpop.permute.xlu0 %4279
          %4281 = vset.pattern.permute.xlu0 0
          %4282 = vperm.xlu0 %4281, %v3863
          %v4283 = vpop.permute.xlu0 %4282
          %4284 = vset.pattern.permute.xlu0 0
          %4285 = vperm.xlu0 %4284, %v3864
          %v4286 = vpop.permute.xlu0 %4285
          %4287 = vset.pattern.permute.xlu0 0
          %4288 = vperm.xlu0 %4287, %v3865
          %v4289 = vpop.permute.xlu0 %4288
          %4290 = vset.pattern.permute.xlu0 0
          %4291 = vperm.xlu0 %4290, %v3866
          %v4292 = vpop.permute.xlu0 %4291
          %4293 = vset.pattern.permute.xlu0 0
          %4294 = vperm.xlu0 %4293, %v3867
          %v4295 = vpop.permute.xlu0 %4294
          %4296 = vset.pattern.permute.xlu0 0
          %4297 = vperm.xlu0 %4296, %v3868
          %v4298 = vpop.permute.xlu0 %4297
          %4299 = vset.pattern.permute.xlu0 0
          %4300 = vperm.xlu0 %4299, %v3869
          %v4301 = vpop.permute.xlu0 %4300
          %4302 = vset.pattern.permute.xlu0 0
          %4303 = vperm.xlu0 %4302, %v3870
          %v4304 = vpop.permute.xlu0 %4303
          %4305 = vset.pattern.permute.xlu0 0
          %4306 = vperm.xlu0 %4305, %v3871
          %v4307 = vpop.permute.xlu0 %4306
          %4308 = vset.pattern.permute.xlu0 0
          %4309 = vperm.xlu0 %4308, %v3872
          %v4310 = vpop.permute.xlu0 %4309
          %4311 = vset.pattern.permute.xlu0 0
          %4312 = vperm.xlu0 %4311, %v3873
          %v4313 = vpop.permute.xlu0 %4312
          %4314 = vset.pattern.permute.xlu0 0
          %4315 = vperm.xlu0 %4314, %v3874
          %v4316 = vpop.permute.xlu0 %4315
          %4317 = vset.pattern.permute.xlu0 0
          %4318 = vperm.xlu0 %4317, %v3875
          %v4319 = vpop.permute.xlu0 %4318
          %4320 = vset.pattern.permute.xlu0 0
          %4321 = vperm.xlu0 %4320, %v3876
          %v4322 = vpop.permute.xlu0 %4321
          %4323 = vset.pattern.permute.xlu0 0
          %4324 = vperm.xlu0 %4323, %v3877
          %v4325 = vpop.permute.xlu0 %4324
          %4326 = vset.pattern.permute.xlu0 0
          %4327 = vperm.xlu0 %4326, %v3878
          %v4328 = vpop.permute.xlu0 %4327
          %4329 = vset.pattern.permute.xlu0 0
          %4330 = vperm.xlu0 %4329, %v3879
          %v4331 = vpop.permute.xlu0 %4330
          %4332 = vset.pattern.permute.xlu0 0
          %4333 = vperm.xlu0 %4332, %v3880
          %v4334 = vpop.permute.xlu0 %4333
          %4335 = vset.pattern.permute.xlu0 0
          %4336 = vperm.xlu0 %4335, %v3881
          %v4337 = vpop.permute.xlu0 %4336
          %4338 = vset.pattern.permute.xlu0 0
          %4339 = vperm.xlu0 %4338, %v3882
          %v4340 = vpop.permute.xlu0 %4339
          %4341 = vset.pattern.permute.xlu0 0
          %4342 = vperm.xlu0 %4341, %v3883
          %v4343 = vpop.permute.xlu0 %4342
          %4344 = vset.pattern.permute.xlu0 0
          %4345 = vperm.xlu0 %4344, %v3884
          %v4346 = vpop.permute.xlu0 %4345
          %4347 = vset.pattern.permute.xlu0 0
          %4348 = vperm.xlu0 %4347, %v3885
          %v4349 = vpop.permute.xlu0 %4348
          %4350 = vset.pattern.permute.xlu0 0
          %4351 = vperm.xlu0 %4350, %v3886
          %v4352 = vpop.permute.xlu0 %4351
          %4353 = vset.pattern.permute.xlu0 0
          %4354 = vperm.xlu0 %4353, %v3887
          %v4355 = vpop.permute.xlu0 %4354
          %4356 = vset.pattern.permute.xlu0 0
          %4357 = vperm.xlu0 %4356, %v3888
          %v4358 = vpop.permute.xlu0 %4357
          %4359 = vset.pattern.permute.xlu0 0
          %4360 = vperm.xlu0 %4359, %v3889
          %v4361 = vpop.permute.xlu0 %4360
          %4362 = vset.pattern.permute.xlu0 0
          %4363 = vperm.xlu0 %4362, %v3890
          %v4364 = vpop.permute.xlu0 %4363
          %4365 = vset.pattern.permute.xlu0 0
          %4366 = vperm.xlu0 %4365, %v3891
          %v4367 = vpop.permute.xlu0 %4366
          %4368 = vset.pattern.permute.xlu0 0
          %4369 = vperm.xlu0 %4368, %v3892
          %v4370 = vpop.permute.xlu0 %4369
          %4371 = vset.pattern.permute.xlu0 0
          %4372 = vperm.xlu0 %4371, %v3893
          %v4373 = vpop.permute.xlu0 %4372
          %4374 = vset.pattern.permute.xlu0 0
          %4375 = vperm.xlu0 %4374, %v3894
          %v4376 = vpop.permute.xlu0 %4375
          %4377 = vset.pattern.permute.xlu0 0
          %4378 = vperm.xlu0 %4377, %v3895
          %v4379 = vpop.permute.xlu0 %4378
          %4380 = vset.pattern.permute.xlu0 0
          %4381 = vperm.xlu0 %4380, %v3896
          %v4382 = vpop.permute.xlu0 %4381
          %4383 = vset.pattern.permute.xlu0 0
          %4384 = vperm.xlu0 %4383, %v3897
          %v4385 = vpop.permute.xlu0 %4384
          %4386 = vset.pattern.permute.xlu0 0
          %4387 = vperm.xlu0 %4386, %v3898
          %v4388 = vpop.permute.xlu0 %4387
          %4389 = vset.pattern.permute.xlu0 0
          %4390 = vperm.xlu0 %4389, %v3899
          %v4391 = vpop.permute.xlu0 %4390
          %4392 = vset.pattern.permute.xlu0 0
          %4393 = vperm.xlu0 %4392, %v3900
          %v4394 = vpop.permute.xlu0 %4393
          %4395 = vset.pattern.permute.xlu0 0
          %4396 = vperm.xlu0 %4395, %v3901
          %v4397 = vpop.permute.xlu0 %4396
          %4398 = vset.pattern.permute.xlu0 0
          %4399 = vperm.xlu0 %4398, %v3902
          %v4400 = vpop.permute.xlu0 %4399
          %4401 = vset.pattern.permute.xlu0 0
          %4402 = vperm.xlu0 %4401, %v3903
          %v4403 = vpop.permute.xlu0 %4402
          %4404 = vset.pattern.permute.xlu0 0
          %4405 = vperm.xlu0 %4404, %v3904
          %v4406 = vpop.permute.xlu0 %4405
          %4407 = vset.pattern.permute.xlu0 0
          %4408 = vperm.xlu0 %4407, %v3905
          %v4409 = vpop.permute.xlu0 %4408
          %4410 = vset.pattern.permute.xlu0 0
          %4411 = vperm.xlu0 %4410, %v3906
          %v4412 = vpop.permute.xlu0 %4411
          %4413 = vset.pattern.permute.xlu0 0
          %4414 = vperm.xlu0 %4413, %v3907
          %v4415 = vpop.permute.xlu0 %4414
          %4416 = vset.pattern.permute.xlu0 0
          %4417 = vperm.xlu0 %4416, %v3908
          %v4418 = vpop.permute.xlu0 %4417
          %4419 = vset.pattern.permute.xlu0 0
          %4420 = vperm.xlu0 %4419, %v3909
          %v4421 = vpop.permute.xlu0 %4420
          %v4422 = vlaneseq
          %v4423 = vand.u32 %v4422, 127
          %v4424 = vlaneseq
          %v4425 = vshrl.u32 %v4424, 7
          %v4426 = vsub.s32 %v4423, %v4425
          %v4427 = vrot.slane %v4040, %v4426
          %v4428 = vadd.s32 %v4423, 4294967288
          %v4429 = vlaneseq
          %v4430 = vshrl.u32 %v4429, 7
          %v4431 = vsub.s32 %v4428, %v4430
          %v4432 = vrot.slane %v4043, %v4431
          %vm4433 = vcmask 130112
          %v4434 = vsel %vm4433, %v4432, %v4427
          %v4435 = vadd.s32 %v4423, 4294967280
          %v4436 = vlaneseq
          %v4437 = vshrl.u32 %v4436, 7
          %v4438 = vsub.s32 %v4435, %v4437
          %v4439 = vrot.slane %v4046, %v4438
          %vm4440 = vcmask 195712
          %v4441 = vsel %vm4440, %v4439, %v4434
          %v4442 = vadd.s32 %v4423, 4294967272
          %v4443 = vlaneseq
          %v4444 = vshrl.u32 %v4443, 7
          %v4445 = vsub.s32 %v4442, %v4444
          %v4446 = vrot.slane %v4049, %v4445
          %vm4447 = vcmask 261312
          %v4448 = vsel %vm4447, %v4446, %v4441
          %v4449 = vadd.s32 %v4423, 4294967264
          %v4450 = vlaneseq
          %v4451 = vshrl.u32 %v4450, 7
          %v4452 = vsub.s32 %v4449, %v4451
          %v4453 = vrot.slane %v4052, %v4452
          %vm4454 = vcmask 326912
          %v4455 = vsel %vm4454, %v4453, %v4448
          %v4456 = vadd.s32 %v4423, 4294967256
          %v4457 = vlaneseq
          %v4458 = vshrl.u32 %v4457, 7
          %v4459 = vsub.s32 %v4456, %v4458
          %v4460 = vrot.slane %v4055, %v4459
          %vm4461 = vcmask 392512
          %v4462 = vsel %vm4461, %v4460, %v4455
          %v4463 = vadd.s32 %v4423, 4294967248
          %v4464 = vlaneseq
          %v4465 = vshrl.u32 %v4464, 7
          %v4466 = vsub.s32 %v4463, %v4465
          %v4467 = vrot.slane %v4058, %v4466
          %vm4468 = vcmask 458112
          %v4469 = vsel %vm4468, %v4467, %v4462
          %v4470 = vadd.s32 %v4423, 4294967240
          %v4471 = vlaneseq
          %v4472 = vshrl.u32 %v4471, 7
          %v4473 = vsub.s32 %v4470, %v4472
          %v4474 = vrot.slane %v4061, %v4473
          %vm4475 = vcmask 523712
          %v4476 = vsel %vm4475, %v4474, %v4469
          %v4477 = vlaneseq
          %v4478 = vshrl.u32 %v4477, 7
          %v4479 = vsub.s32 %v4423, %v4478
          %v4480 = vrot.slane %v4064, %v4479
          %v4481 = vlaneseq
          %v4482 = vshrl.u32 %v4481, 7
          %v4483 = vsub.s32 %v4428, %v4482
          %v4484 = vrot.slane %v4067, %v4483
          %v4485 = vsel %vm4433, %v4484, %v4480
          %v4486 = vlaneseq
          %v4487 = vshrl.u32 %v4486, 7
          %v4488 = vsub.s32 %v4435, %v4487
          %v4489 = vrot.slane %v4070, %v4488
          %v4490 = vsel %vm4440, %v4489, %v4485
          %v4491 = vlaneseq
          %v4492 = vshrl.u32 %v4491, 7
          %v4493 = vsub.s32 %v4442, %v4492
          %v4494 = vrot.slane %v4073, %v4493
          %v4495 = vsel %vm4447, %v4494, %v4490
          %v4496 = vlaneseq
          %v4497 = vshrl.u32 %v4496, 7
          %v4498 = vsub.s32 %v4449, %v4497
          %v4499 = vrot.slane %v4076, %v4498
          %v4500 = vsel %vm4454, %v4499, %v4495
          %v4501 = vlaneseq
          %v4502 = vshrl.u32 %v4501, 7
          %v4503 = vsub.s32 %v4456, %v4502
          %v4504 = vrot.slane %v4079, %v4503
          %v4505 = vsel %vm4461, %v4504, %v4500
          %v4506 = vlaneseq
          %v4507 = vshrl.u32 %v4506, 7
          %v4508 = vsub.s32 %v4463, %v4507
          %v4509 = vrot.slane %v4082, %v4508
          %v4510 = vsel %vm4468, %v4509, %v4505
          %v4511 = vlaneseq
          %v4512 = vshrl.u32 %v4511, 7
          %v4513 = vsub.s32 %v4470, %v4512
          %v4514 = vrot.slane %v4085, %v4513
          %v4515 = vsel %vm4475, %v4514, %v4510
          %v4516 = vlaneseq
          %v4517 = vshrl.u32 %v4516, 7
          %v4518 = vsub.s32 %v4423, %v4517
          %v4519 = vrot.slane %v4088, %v4518
          %v4520 = vlaneseq
          %v4521 = vshrl.u32 %v4520, 7
          %v4522 = vsub.s32 %v4428, %v4521
          %v4523 = vrot.slane %v4091, %v4522
          %v4524 = vsel %vm4433, %v4523, %v4519
          %v4525 = vlaneseq
          %v4526 = vshrl.u32 %v4525, 7
          %v4527 = vsub.s32 %v4435, %v4526
          %v4528 = vrot.slane %v4094, %v4527
          %v4529 = vsel %vm4440, %v4528, %v4524
          %v4530 = vlaneseq
          %v4531 = vshrl.u32 %v4530, 7
          %v4532 = vsub.s32 %v4442, %v4531
          %v4533 = vrot.slane %v4097, %v4532
          %v4534 = vsel %vm4447, %v4533, %v4529
          %v4535 = vlaneseq
          %v4536 = vshrl.u32 %v4535, 7
          %v4537 = vsub.s32 %v4449, %v4536
          %v4538 = vrot.slane %v4100, %v4537
          %v4539 = vsel %vm4454, %v4538, %v4534
          %v4540 = vlaneseq
          %v4541 = vshrl.u32 %v4540, 7
          %v4542 = vsub.s32 %v4456, %v4541
          %v4543 = vrot.slane %v4103, %v4542
          %v4544 = vsel %vm4461, %v4543, %v4539
          %v4545 = vlaneseq
          %v4546 = vshrl.u32 %v4545, 7
          %v4547 = vsub.s32 %v4463, %v4546
          %v4548 = vrot.slane %v4106, %v4547
          %v4549 = vsel %vm4468, %v4548, %v4544
          %v4550 = vlaneseq
          %v4551 = vshrl.u32 %v4550, 7
          %v4552 = vsub.s32 %v4470, %v4551
          %v4553 = vrot.slane %v4109, %v4552
          %v4554 = vsel %vm4475, %v4553, %v4549
          %v4555 = vlaneseq
          %v4556 = vshrl.u32 %v4555, 7
          %v4557 = vsub.s32 %v4423, %v4556
          %v4558 = vrot.slane %v4112, %v4557
          %v4559 = vlaneseq
          %v4560 = vshrl.u32 %v4559, 7
          %v4561 = vsub.s32 %v4428, %v4560
          %v4562 = vrot.slane %v4115, %v4561
          %v4563 = vsel %vm4433, %v4562, %v4558
          %v4564 = vlaneseq
          %v4565 = vshrl.u32 %v4564, 7
          %v4566 = vsub.s32 %v4435, %v4565
          %v4567 = vrot.slane %v4118, %v4566
          %v4568 = vsel %vm4440, %v4567, %v4563
          %v4569 = vlaneseq
          %v4570 = vshrl.u32 %v4569, 7
          %v4571 = vsub.s32 %v4442, %v4570
          %v4572 = vrot.slane %v4121, %v4571
          %v4573 = vsel %vm4447, %v4572, %v4568
          %v4574 = vlaneseq
          %v4575 = vshrl.u32 %v4574, 7
          %v4576 = vsub.s32 %v4449, %v4575
          %v4577 = vrot.slane %v4124, %v4576
          %v4578 = vsel %vm4454, %v4577, %v4573
          %v4579 = vlaneseq
          %v4580 = vshrl.u32 %v4579, 7
          %v4581 = vsub.s32 %v4456, %v4580
          %v4582 = vrot.slane %v4127, %v4581
          %v4583 = vsel %vm4461, %v4582, %v4578
          %v4584 = vlaneseq
          %v4585 = vshrl.u32 %v4584, 7
          %v4586 = vsub.s32 %v4463, %v4585
          %v4587 = vrot.slane %v4130, %v4586
          %v4588 = vsel %vm4468, %v4587, %v4583
          %v4589 = vlaneseq
          %v4590 = vshrl.u32 %v4589, 7
          %v4591 = vsub.s32 %v4470, %v4590
          %v4592 = vrot.slane %v4133, %v4591
          %v4593 = vsel %vm4475, %v4592, %v4588
          %v4594 = vlaneseq
          %v4595 = vshrl.u32 %v4594, 7
          %v4596 = vsub.s32 %v4423, %v4595
          %v4597 = vrot.slane %v4136, %v4596
          %v4598 = vlaneseq
          %v4599 = vshrl.u32 %v4598, 7
          %v4600 = vsub.s32 %v4428, %v4599
          %v4601 = vrot.slane %v4139, %v4600
          %v4602 = vsel %vm4433, %v4601, %v4597
          %v4603 = vlaneseq
          %v4604 = vshrl.u32 %v4603, 7
          %v4605 = vsub.s32 %v4435, %v4604
          %v4606 = vrot.slane %v4142, %v4605
          %v4607 = vsel %vm4440, %v4606, %v4602
          %v4608 = vlaneseq
          %v4609 = vshrl.u32 %v4608, 7
          %v4610 = vsub.s32 %v4442, %v4609
          %v4611 = vrot.slane %v4145, %v4610
          %v4612 = vsel %vm4447, %v4611, %v4607
          %v4613 = vlaneseq
          %v4614 = vshrl.u32 %v4613, 7
          %v4615 = vsub.s32 %v4449, %v4614
          %v4616 = vrot.slane %v4148, %v4615
          %v4617 = vsel %vm4454, %v4616, %v4612
          %v4618 = vlaneseq
          %v4619 = vshrl.u32 %v4618, 7
          %v4620 = vsub.s32 %v4456, %v4619
          %v4621 = vrot.slane %v4151, %v4620
          %v4622 = vsel %vm4461, %v4621, %v4617
          %v4623 = vlaneseq
          %v4624 = vshrl.u32 %v4623, 7
          %v4625 = vsub.s32 %v4463, %v4624
          %v4626 = vrot.slane %v4154, %v4625
          %v4627 = vsel %vm4468, %v4626, %v4622
          %v4628 = vlaneseq
          %v4629 = vshrl.u32 %v4628, 7
          %v4630 = vsub.s32 %v4470, %v4629
          %v4631 = vrot.slane %v4157, %v4630
          %v4632 = vsel %vm4475, %v4631, %v4627
          %v4633 = vlaneseq
          %v4634 = vshrl.u32 %v4633, 7
          %v4635 = vsub.s32 %v4423, %v4634
          %v4636 = vrot.slane %v4160, %v4635
          %v4637 = vlaneseq
          %v4638 = vshrl.u32 %v4637, 7
          %v4639 = vsub.s32 %v4428, %v4638
          %v4640 = vrot.slane %v4163, %v4639
          %v4641 = vsel %vm4433, %v4640, %v4636
          %v4642 = vlaneseq
          %v4643 = vshrl.u32 %v4642, 7
          %v4644 = vsub.s32 %v4435, %v4643
          %v4645 = vrot.slane %v4166, %v4644
          %v4646 = vsel %vm4440, %v4645, %v4641
          %v4647 = vlaneseq
          %v4648 = vshrl.u32 %v4647, 7
          %v4649 = vsub.s32 %v4442, %v4648
          %v4650 = vrot.slane %v4169, %v4649
          %v4651 = vsel %vm4447, %v4650, %v4646
          %v4652 = vlaneseq
          %v4653 = vshrl.u32 %v4652, 7
          %v4654 = vsub.s32 %v4449, %v4653
          %v4655 = vrot.slane %v4172, %v4654
          %v4656 = vsel %vm4454, %v4655, %v4651
          %v4657 = vlaneseq
          %v4658 = vshrl.u32 %v4657, 7
          %v4659 = vsub.s32 %v4456, %v4658
          %v4660 = vrot.slane %v4175, %v4659
          %v4661 = vsel %vm4461, %v4660, %v4656
          %v4662 = vlaneseq
          %v4663 = vshrl.u32 %v4662, 7
          %v4664 = vsub.s32 %v4463, %v4663
          %v4665 = vrot.slane %v4178, %v4664
          %v4666 = vsel %vm4468, %v4665, %v4661
          %v4667 = vlaneseq
          %v4668 = vshrl.u32 %v4667, 7
          %v4669 = vsub.s32 %v4470, %v4668
          %v4670 = vrot.slane %v4181, %v4669
          %v4671 = vsel %vm4475, %v4670, %v4666
          %v4672 = vlaneseq
          %v4673 = vshrl.u32 %v4672, 7
          %v4674 = vsub.s32 %v4423, %v4673
          %v4675 = vrot.slane %v4184, %v4674
          %v4676 = vlaneseq
          %v4677 = vshrl.u32 %v4676, 7
          %v4678 = vsub.s32 %v4428, %v4677
          %v4679 = vrot.slane %v4187, %v4678
          %v4680 = vsel %vm4433, %v4679, %v4675
          %v4681 = vlaneseq
          %v4682 = vshrl.u32 %v4681, 7
          %v4683 = vsub.s32 %v4435, %v4682
          %v4684 = vrot.slane %v4190, %v4683
          %v4685 = vsel %vm4440, %v4684, %v4680
          %v4686 = vlaneseq
          %v4687 = vshrl.u32 %v4686, 7
          %v4688 = vsub.s32 %v4442, %v4687
          %v4689 = vrot.slane %v4193, %v4688
          %v4690 = vsel %vm4447, %v4689, %v4685
          %v4691 = vlaneseq
          %v4692 = vshrl.u32 %v4691, 7
          %v4693 = vsub.s32 %v4449, %v4692
          %v4694 = vrot.slane %v4196, %v4693
          %v4695 = vsel %vm4454, %v4694, %v4690
          %v4696 = vlaneseq
          %v4697 = vshrl.u32 %v4696, 7
          %v4698 = vsub.s32 %v4456, %v4697
          %v4699 = vrot.slane %v4199, %v4698
          %v4700 = vsel %vm4461, %v4699, %v4695
          %v4701 = vlaneseq
          %v4702 = vshrl.u32 %v4701, 7
          %v4703 = vsub.s32 %v4463, %v4702
          %v4704 = vrot.slane %v4202, %v4703
          %v4705 = vsel %vm4468, %v4704, %v4700
          %v4706 = vlaneseq
          %v4707 = vshrl.u32 %v4706, 7
          %v4708 = vsub.s32 %v4470, %v4707
          %v4709 = vrot.slane %v4205, %v4708
          %v4710 = vsel %vm4475, %v4709, %v4705
          %v4711 = vlaneseq
          %v4712 = vshrl.u32 %v4711, 7
          %v4713 = vsub.s32 %v4423, %v4712
          %v4714 = vrot.slane %v4208, %v4713
          %v4715 = vlaneseq
          %v4716 = vshrl.u32 %v4715, 7
          %v4717 = vsub.s32 %v4428, %v4716
          %v4718 = vrot.slane %v4211, %v4717
          %v4719 = vsel %vm4433, %v4718, %v4714
          %v4720 = vlaneseq
          %v4721 = vshrl.u32 %v4720, 7
          %v4722 = vsub.s32 %v4435, %v4721
          %v4723 = vrot.slane %v4214, %v4722
          %v4724 = vsel %vm4440, %v4723, %v4719
          %v4725 = vlaneseq
          %v4726 = vshrl.u32 %v4725, 7
          %v4727 = vsub.s32 %v4442, %v4726
          %v4728 = vrot.slane %v4217, %v4727
          %v4729 = vsel %vm4447, %v4728, %v4724
          %v4730 = vlaneseq
          %v4731 = vshrl.u32 %v4730, 7
          %v4732 = vsub.s32 %v4449, %v4731
          %v4733 = vrot.slane %v4220, %v4732
          %v4734 = vsel %vm4454, %v4733, %v4729
          %v4735 = vlaneseq
          %v4736 = vshrl.u32 %v4735, 7
          %v4737 = vsub.s32 %v4456, %v4736
          %v4738 = vrot.slane %v4223, %v4737
          %v4739 = vsel %vm4461, %v4738, %v4734
          %v4740 = vlaneseq
          %v4741 = vshrl.u32 %v4740, 7
          %v4742 = vsub.s32 %v4463, %v4741
          %v4743 = vrot.slane %v4226, %v4742
          %v4744 = vsel %vm4468, %v4743, %v4739
          %v4745 = vlaneseq
          %v4746 = vshrl.u32 %v4745, 7
          %v4747 = vsub.s32 %v4470, %v4746
          %v4748 = vrot.slane %v4229, %v4747
          %v4749 = vsel %vm4475, %v4748, %v4744
          %v4750 = vlaneseq
          %v4751 = vshrl.u32 %v4750, 7
          %v4752 = vsub.s32 %v4423, %v4751
          %v4753 = vrot.slane %v4232, %v4752
          %v4754 = vlaneseq
          %v4755 = vshrl.u32 %v4754, 7
          %v4756 = vsub.s32 %v4428, %v4755
          %v4757 = vrot.slane %v4235, %v4756
          %v4758 = vsel %vm4433, %v4757, %v4753
          %v4759 = vlaneseq
          %v4760 = vshrl.u32 %v4759, 7
          %v4761 = vsub.s32 %v4435, %v4760
          %v4762 = vrot.slane %v4238, %v4761
          %v4763 = vsel %vm4440, %v4762, %v4758
          %v4764 = vlaneseq
          %v4765 = vshrl.u32 %v4764, 7
          %v4766 = vsub.s32 %v4442, %v4765
          %v4767 = vrot.slane %v4241, %v4766
          %v4768 = vsel %vm4447, %v4767, %v4763
          %v4769 = vlaneseq
          %v4770 = vshrl.u32 %v4769, 7
          %v4771 = vsub.s32 %v4449, %v4770
          %v4772 = vrot.slane %v4244, %v4771
          %v4773 = vsel %vm4454, %v4772, %v4768
          %v4774 = vlaneseq
          %v4775 = vshrl.u32 %v4774, 7
          %v4776 = vsub.s32 %v4456, %v4775
          %v4777 = vrot.slane %v4247, %v4776
          %v4778 = vsel %vm4461, %v4777, %v4773
          %v4779 = vlaneseq
          %v4780 = vshrl.u32 %v4779, 7
          %v4781 = vsub.s32 %v4463, %v4780
          %v4782 = vrot.slane %v4250, %v4781
          %v4783 = vsel %vm4468, %v4782, %v4778
          %v4784 = vlaneseq
          %v4785 = vshrl.u32 %v4784, 7
          %v4786 = vsub.s32 %v4470, %v4785
          %v4787 = vrot.slane %v4253, %v4786
          %v4788 = vsel %vm4475, %v4787, %v4783
          %v4789 = vlaneseq
          %v4790 = vshrl.u32 %v4789, 7
          %v4791 = vsub.s32 %v4423, %v4790
          %v4792 = vrot.slane %v4256, %v4791
          %v4793 = vlaneseq
          %v4794 = vshrl.u32 %v4793, 7
          %v4795 = vsub.s32 %v4428, %v4794
          %v4796 = vrot.slane %v4259, %v4795
          %v4797 = vsel %vm4433, %v4796, %v4792
          %v4798 = vlaneseq
          %v4799 = vshrl.u32 %v4798, 7
          %v4800 = vsub.s32 %v4435, %v4799
          %v4801 = vrot.slane %v4262, %v4800
          %v4802 = vsel %vm4440, %v4801, %v4797
          %v4803 = vlaneseq
          %v4804 = vshrl.u32 %v4803, 7
          %v4805 = vsub.s32 %v4442, %v4804
          %v4806 = vrot.slane %v4265, %v4805
          %v4807 = vsel %vm4447, %v4806, %v4802
          %v4808 = vlaneseq
          %v4809 = vshrl.u32 %v4808, 7
          %v4810 = vsub.s32 %v4449, %v4809
          %v4811 = vrot.slane %v4268, %v4810
          %v4812 = vsel %vm4454, %v4811, %v4807
          %v4813 = vlaneseq
          %v4814 = vshrl.u32 %v4813, 7
          %v4815 = vsub.s32 %v4456, %v4814
          %v4816 = vrot.slane %v4271, %v4815
          %v4817 = vsel %vm4461, %v4816, %v4812
          %v4818 = vlaneseq
          %v4819 = vshrl.u32 %v4818, 7
          %v4820 = vsub.s32 %v4463, %v4819
          %v4821 = vrot.slane %v4274, %v4820
          %v4822 = vsel %vm4468, %v4821, %v4817
          %v4823 = vlaneseq
          %v4824 = vshrl.u32 %v4823, 7
          %v4825 = vsub.s32 %v4470, %v4824
          %v4826 = vrot.slane %v4277, %v4825
          %v4827 = vsel %vm4475, %v4826, %v4822
          %v4828 = vlaneseq
          %v4829 = vshrl.u32 %v4828, 7
          %v4830 = vsub.s32 %v4423, %v4829
          %v4831 = vrot.slane %v4280, %v4830
          %v4832 = vlaneseq
          %v4833 = vshrl.u32 %v4832, 7
          %v4834 = vsub.s32 %v4428, %v4833
          %v4835 = vrot.slane %v4283, %v4834
          %v4836 = vsel %vm4433, %v4835, %v4831
          %v4837 = vlaneseq
          %v4838 = vshrl.u32 %v4837, 7
          %v4839 = vsub.s32 %v4435, %v4838
          %v4840 = vrot.slane %v4286, %v4839
          %v4841 = vsel %vm4440, %v4840, %v4836
          %v4842 = vlaneseq
          %v4843 = vshrl.u32 %v4842, 7
          %v4844 = vsub.s32 %v4442, %v4843
          %v4845 = vrot.slane %v4289, %v4844
          %v4846 = vsel %vm4447, %v4845, %v4841
          %v4847 = vlaneseq
          %v4848 = vshrl.u32 %v4847, 7
          %v4849 = vsub.s32 %v4449, %v4848
          %v4850 = vrot.slane %v4292, %v4849
          %v4851 = vsel %vm4454, %v4850, %v4846
          %v4852 = vlaneseq
          %v4853 = vshrl.u32 %v4852, 7
          %v4854 = vsub.s32 %v4456, %v4853
          %v4855 = vrot.slane %v4295, %v4854
          %v4856 = vsel %vm4461, %v4855, %v4851
          %v4857 = vlaneseq
          %v4858 = vshrl.u32 %v4857, 7
          %v4859 = vsub.s32 %v4463, %v4858
          %v4860 = vrot.slane %v4298, %v4859
          %v4861 = vsel %vm4468, %v4860, %v4856
          %v4862 = vlaneseq
          %v4863 = vshrl.u32 %v4862, 7
          %v4864 = vsub.s32 %v4470, %v4863
          %v4865 = vrot.slane %v4301, %v4864
          %v4866 = vsel %vm4475, %v4865, %v4861
          %v4867 = vlaneseq
          %v4868 = vshrl.u32 %v4867, 7
          %v4869 = vsub.s32 %v4423, %v4868
          %v4870 = vrot.slane %v4304, %v4869
          %v4871 = vlaneseq
          %v4872 = vshrl.u32 %v4871, 7
          %v4873 = vsub.s32 %v4428, %v4872
          %v4874 = vrot.slane %v4307, %v4873
          %v4875 = vsel %vm4433, %v4874, %v4870
          %v4876 = vlaneseq
          %v4877 = vshrl.u32 %v4876, 7
          %v4878 = vsub.s32 %v4435, %v4877
          %v4879 = vrot.slane %v4310, %v4878
          %v4880 = vsel %vm4440, %v4879, %v4875
          %v4881 = vlaneseq
          %v4882 = vshrl.u32 %v4881, 7
          %v4883 = vsub.s32 %v4442, %v4882
          %v4884 = vrot.slane %v4313, %v4883
          %v4885 = vsel %vm4447, %v4884, %v4880
          %v4886 = vlaneseq
          %v4887 = vshrl.u32 %v4886, 7
          %v4888 = vsub.s32 %v4449, %v4887
          %v4889 = vrot.slane %v4316, %v4888
          %v4890 = vsel %vm4454, %v4889, %v4885
          %v4891 = vlaneseq
          %v4892 = vshrl.u32 %v4891, 7
          %v4893 = vsub.s32 %v4456, %v4892
          %v4894 = vrot.slane %v4319, %v4893
          %v4895 = vsel %vm4461, %v4894, %v4890
          %v4896 = vlaneseq
          %v4897 = vshrl.u32 %v4896, 7
          %v4898 = vsub.s32 %v4463, %v4897
          %v4899 = vrot.slane %v4322, %v4898
          %v4900 = vsel %vm4468, %v4899, %v4895
          %v4901 = vlaneseq
          %v4902 = vshrl.u32 %v4901, 7
          %v4903 = vsub.s32 %v4470, %v4902
          %v4904 = vrot.slane %v4325, %v4903
          %v4905 = vsel %vm4475, %v4904, %v4900
          %v4906 = vlaneseq
          %v4907 = vshrl.u32 %v4906, 7
          %v4908 = vsub.s32 %v4423, %v4907
          %v4909 = vrot.slane %v4328, %v4908
          %v4910 = vlaneseq
          %v4911 = vshrl.u32 %v4910, 7
          %v4912 = vsub.s32 %v4428, %v4911
          %v4913 = vrot.slane %v4331, %v4912
          %v4914 = vsel %vm4433, %v4913, %v4909
          %v4915 = vlaneseq
          %v4916 = vshrl.u32 %v4915, 7
          %v4917 = vsub.s32 %v4435, %v4916
          %v4918 = vrot.slane %v4334, %v4917
          %v4919 = vsel %vm4440, %v4918, %v4914
          %v4920 = vlaneseq
          %v4921 = vshrl.u32 %v4920, 7
          %v4922 = vsub.s32 %v4442, %v4921
          %v4923 = vrot.slane %v4337, %v4922
          %v4924 = vsel %vm4447, %v4923, %v4919
          %v4925 = vlaneseq
          %v4926 = vshrl.u32 %v4925, 7
          %v4927 = vsub.s32 %v4449, %v4926
          %v4928 = vrot.slane %v4340, %v4927
          %v4929 = vsel %vm4454, %v4928, %v4924
          %v4930 = vlaneseq
          %v4931 = vshrl.u32 %v4930, 7
          %v4932 = vsub.s32 %v4456, %v4931
          %v4933 = vrot.slane %v4343, %v4932
          %v4934 = vsel %vm4461, %v4933, %v4929
          %v4935 = vlaneseq
          %v4936 = vshrl.u32 %v4935, 7
          %v4937 = vsub.s32 %v4463, %v4936
          %v4938 = vrot.slane %v4346, %v4937
          %v4939 = vsel %vm4468, %v4938, %v4934
          %v4940 = vlaneseq
          %v4941 = vshrl.u32 %v4940, 7
          %v4942 = vsub.s32 %v4470, %v4941
          %v4943 = vrot.slane %v4349, %v4942
          %v4944 = vsel %vm4475, %v4943, %v4939
          %v4945 = vlaneseq
          %v4946 = vshrl.u32 %v4945, 7
          %v4947 = vsub.s32 %v4423, %v4946
          %v4948 = vrot.slane %v4352, %v4947
          %v4949 = vlaneseq
          %v4950 = vshrl.u32 %v4949, 7
          %v4951 = vsub.s32 %v4428, %v4950
          %v4952 = vrot.slane %v4355, %v4951
          %v4953 = vsel %vm4433, %v4952, %v4948
          %v4954 = vlaneseq
          %v4955 = vshrl.u32 %v4954, 7
          %v4956 = vsub.s32 %v4435, %v4955
          %v4957 = vrot.slane %v4358, %v4956
          %v4958 = vsel %vm4440, %v4957, %v4953
          %v4959 = vlaneseq
          %v4960 = vshrl.u32 %v4959, 7
          %v4961 = vsub.s32 %v4442, %v4960
          %v4962 = vrot.slane %v4361, %v4961
          %v4963 = vsel %vm4447, %v4962, %v4958
          %v4964 = vlaneseq
          %v4965 = vshrl.u32 %v4964, 7
          %v4966 = vsub.s32 %v4449, %v4965
          %v4967 = vrot.slane %v4364, %v4966
          %v4968 = vsel %vm4454, %v4967, %v4963
          %v4969 = vlaneseq
          %v4970 = vshrl.u32 %v4969, 7
          %v4971 = vsub.s32 %v4456, %v4970
          %v4972 = vrot.slane %v4367, %v4971
          %v4973 = vsel %vm4461, %v4972, %v4968
          %v4974 = vlaneseq
          %v4975 = vshrl.u32 %v4974, 7
          %v4976 = vsub.s32 %v4463, %v4975
          %v4977 = vrot.slane %v4370, %v4976
          %v4978 = vsel %vm4468, %v4977, %v4973
          %v4979 = vlaneseq
          %v4980 = vshrl.u32 %v4979, 7
          %v4981 = vsub.s32 %v4470, %v4980
          %v4982 = vrot.slane %v4373, %v4981
          %v4983 = vsel %vm4475, %v4982, %v4978
          %v4984 = vlaneseq
          %v4985 = vshrl.u32 %v4984, 7
          %v4986 = vsub.s32 %v4423, %v4985
          %v4987 = vrot.slane %v4376, %v4986
          %v4988 = vlaneseq
          %v4989 = vshrl.u32 %v4988, 7
          %v4990 = vsub.s32 %v4428, %v4989
          %v4991 = vrot.slane %v4379, %v4990
          %v4992 = vsel %vm4433, %v4991, %v4987
          %v4993 = vlaneseq
          %v4994 = vshrl.u32 %v4993, 7
          %v4995 = vsub.s32 %v4435, %v4994
          %v4996 = vrot.slane %v4382, %v4995
          %v4997 = vsel %vm4440, %v4996, %v4992
          %v4998 = vlaneseq
          %v4999 = vshrl.u32 %v4998, 7
          %v5000 = vsub.s32 %v4442, %v4999
          %v5001 = vrot.slane %v4385, %v5000
          %v5002 = vsel %vm4447, %v5001, %v4997
          %v5003 = vlaneseq
          %v5004 = vshrl.u32 %v5003, 7
          %v5005 = vsub.s32 %v4449, %v5004
          %v5006 = vrot.slane %v4388, %v5005
          %v5007 = vsel %vm4454, %v5006, %v5002
          %v5008 = vlaneseq
          %v5009 = vshrl.u32 %v5008, 7
          %v5010 = vsub.s32 %v4456, %v5009
          %v5011 = vrot.slane %v4391, %v5010
          %v5012 = vsel %vm4461, %v5011, %v5007
          %v5013 = vlaneseq
          %v5014 = vshrl.u32 %v5013, 7
          %v5015 = vsub.s32 %v4463, %v5014
          %v5016 = vrot.slane %v4394, %v5015
          %v5017 = vsel %vm4468, %v5016, %v5012
          %v5018 = vlaneseq
          %v5019 = vshrl.u32 %v5018, 7
          %v5020 = vsub.s32 %v4470, %v5019
          %v5021 = vrot.slane %v4397, %v5020
          %v5022 = vsel %vm4475, %v5021, %v5017
          %v5023 = vlaneseq
          %v5024 = vshrl.u32 %v5023, 7
          %v5025 = vsub.s32 %v4423, %v5024
          %v5026 = vrot.slane %v4400, %v5025
          %v5027 = vlaneseq
          %v5028 = vshrl.u32 %v5027, 7
          %v5029 = vsub.s32 %v4428, %v5028
          %v5030 = vrot.slane %v4403, %v5029
          %v5031 = vsel %vm4433, %v5030, %v5026
          %v5032 = vlaneseq
          %v5033 = vshrl.u32 %v5032, 7
          %v5034 = vsub.s32 %v4435, %v5033
          %v5035 = vrot.slane %v4406, %v5034
          %v5036 = vsel %vm4440, %v5035, %v5031
          %v5037 = vlaneseq
          %v5038 = vshrl.u32 %v5037, 7
          %v5039 = vsub.s32 %v4442, %v5038
          %v5040 = vrot.slane %v4409, %v5039
          %v5041 = vsel %vm4447, %v5040, %v5036
          %v5042 = vlaneseq
          %v5043 = vshrl.u32 %v5042, 7
          %v5044 = vsub.s32 %v4449, %v5043
          %v5045 = vrot.slane %v4412, %v5044
          %v5046 = vsel %vm4454, %v5045, %v5041
          %v5047 = vlaneseq
          %v5048 = vshrl.u32 %v5047, 7
          %v5049 = vsub.s32 %v4456, %v5048
          %v5050 = vrot.slane %v4415, %v5049
          %v5051 = vsel %vm4461, %v5050, %v5046
          %v5052 = vlaneseq
          %v5053 = vshrl.u32 %v5052, 7
          %v5054 = vsub.s32 %v4463, %v5053
          %v5055 = vrot.slane %v4418, %v5054
          %v5056 = vsel %vm4468, %v5055, %v5051
          %v5057 = vlaneseq
          %v5058 = vshrl.u32 %v5057, 7
          %v5059 = vsub.s32 %v4470, %v5058
          %v5060 = vrot.slane %v4421, %v5059
          %v5061 = vsel %vm4475, %v5060, %v5056
          %vm5062 = vcmask 1041409
          %v5063 = vsel %vm5062, %v4515, %v4476
          %vm5064 = vcmask 1042434
          %v5065 = vsel %vm5064, %v4554, %v5063
          %vm5066 = vcmask 1043459
          %v5067 = vsel %vm5066, %v4593, %v5065
          %vm5068 = vcmask 1044484
          %v5069 = vsel %vm5068, %v4632, %v5067
          %vm5070 = vcmask 1045509
          %v5071 = vsel %vm5070, %v4671, %v5069
          %vm5072 = vcmask 1046534
          %v5073 = vsel %vm5072, %v4710, %v5071
          %vm5074 = vcmask 1047559
          %v5075 = vsel %vm5074, %v4749, %v5073
          %v5076 = vsel %vm5062, %v4827, %v4788
          %v5077 = vsel %vm5064, %v4866, %v5076
          %v5078 = vsel %vm5066, %v4905, %v5077
          %v5079 = vsel %vm5068, %v4944, %v5078
          %v5080 = vsel %vm5070, %v4983, %v5079
          %v5081 = vsel %vm5072, %v5022, %v5080
          %v5082 = vsel %vm5074, %v5061, %v5081
          %vm5085 = vcmask 523264
          %v5086 = vsel %vm5085, %v5075, 0.0
          %v5087 = vsel %vm5085, %v5082, 0.0
          %5088 = vst [vmem:[%s374] sm:$0xff] %v5086
          %5089 = vst [vmem:[%s374 + $0x8] sm:$0xff] %v5087
        $region68: #{tpu_custom_call.1} parent=47 // pred_fallthru
          _
        %s5090 = sand.u32 %s217, 1
        %s5091 = scalar_lea.sflag [#allocation8], %s5090
        %s5092 = sand.u32 %s217, 1
        %s5093 = smul.addr %s5092, 16
        %s5094 = scalar_lea.vmem [#allocation11], %s5093
        // Predicated region
        $region73: #{tpu_custom_call.1} parent=47 // pred_check
          %p5095 = pneg %p227
        $region74: #{tpu_custom_call.1} parent=47 // pred_check_branch
          %5097 = sbr.rel (%p5095) target = $region76
        $region75: #{tpu_custom_call.1} parent=47 // pred_region
          %s5098 = smul.u32 %s29, %s30
          %s5099 = smul.u32 2, %s5098
          %s5101 = ssub.s32 256, 256
          %5102 = vsyncadd %s5091, %s5101
          %s5103 = smul.addr %s5099, 128
          %s5104 = scalar_lea.hbm %s7, %s5103
          %s5105 = sshll.u32 %s5094, 4
          %s5106 = int_to_ptr.vmem [resolvable:$true] %s5105
          %5111 = dma.vmem_to_hbm [thread:$0]  %s5106, 256, %s5104, %s5091, 128, 128, 8
        $region76: #{tpu_custom_call.1} parent=47 // pred_fallthru
          _
      $region48: #{tpu_custom_call.1} parent=5 // pred_fallthru
        _
      %p5112 = scmp.le.s32.totalorder 2, %s20
      // Predicated region
      $region77: #{tpu_custom_call.1} parent=5 // pred_check
        %p5113 = pneg %p5112
      $region78: #{tpu_custom_call.1} parent=5 // pred_check_branch
        %5115 = sbr.rel (%p5113) target = $region80
      $region79: #{tpu_custom_call.1} parent=5 // pred_region
        %s5116 = ssub.s32 %s20, 2
        // Predicated region
        $region81: #{tpu_custom_call.1} parent=79 // pred_check
          %p5117 = pneg %p233
        $region82: #{tpu_custom_call.1} parent=79 // pred_check_branch
          %5119 = sbr.rel (%p5117) target = $region84
        $region83: #{tpu_custom_call.1} parent=79 // pred_region
          %s5120 = sand.u32 %s218, 1
          %s5121 = scalar_lea.sflag [#allocation8], %s5120
          %s5122 = sand.u32 %s218, 1
          %s5123 = smul.addr %s5122, 16
          %s5124 = scalar_lea.vmem [#allocation11], %s5123
          %5125 = dma.done %s5121, 256
        $region84: #{tpu_custom_call.1} parent=79 // pred_fallthru
          _
      $region80: #{tpu_custom_call.1} parent=5 // pred_fallthru
        _
    $region6: #{tpu_custom_call.1} parent=1 // loop_footer
      %s24 = sadd.s32 1, %s20
    $region7: #{tpu_custom_call.1} parent=1 // loop_footer_branch
      %19 = sbr.rel target = $region3
    $region8: #{tpu_custom_call.1} parent=1 // loop_exit
      _
    %5126 = vsyncpa [#allocation7], 1
    %s5127 = scalar_lea.sflag [#allocation7], 1
    %5128 = vsyncpa %s5127, 1
    %5129 = vsyncpa [#allocation10], 1
    %5130 = vsyncpa [#allocation8], 1
    %s5131 = scalar_lea.sflag [#allocation8], 1
    %5132 = vsyncpa %s5131, 1

</llo_original>
